<compile_context>
chip_gen: v7x
topology: tpu7x:2x2x1
jax: 0.10.0
libtpu: 0.0.40
codegen_flags: <defaults>
</compile_context>

<pallas_src>
import functools

import jax
import jax.numpy as jnp
from jax.experimental import pallas as pl
from jax.experimental.pallas import tpu as pltpu


# ---------------------------------------------------------------------------
# In-kernel helpers (pure jnp, traced inside the kernel body)
# ---------------------------------------------------------------------------
def _layernorm(x, w, b, eps=1e-5):
    # x: (R, D); w/b broadcastable to (R, D); PyTorch LayerNorm (eps=1e-5)
    mu = jnp.mean(x, axis=-1, keepdims=True)
    var = jnp.mean((x - mu) ** 2, axis=-1, keepdims=True)
    return (x - mu) * jax.lax.rsqrt(var + eps) * w + b


def _slot_attention_kernel(
    # inputs
    x_ref,                          # (Bt, N, D)  f32
    slots_init_ref,                 # (S, D)      f32  -- slots_embedding.weight
    ln_in_w_ref, ln_in_b_ref,       # (1, D)      f32
    wkv_ref, bkv_ref,               # (D, 2D) bf16, (1, 2D) f32  -- fused K/V
    wq_ref, bq_ref,                 # (D, D) bf16,  (1, D)  f32
    ln_sl_w_ref, ln_sl_b_ref,       # (1, D)
    w_ih_ref, b_ih_ref,             # (D, 3D) bf16, (1, 3D)
    w_hh_ref, b_hh_ref,             # (D, 3D) bf16, (1, 3D)
    ln_ff_w_ref, ln_ff_b_ref,       # (1, D)
    w1_ref, b1_ref,                 # (D, H) bf16,  (1, H)
    w2_ref, b2_ref,                 # (H, D) bf16,  (1, D)
    # output
    out_ref,                        # (Bt, S, D)  f32
    *, bt, n, s, d, hidden, iters, scale, eps,
):
    f32 = jnp.float32
    bf16 = jnp.bfloat16
    rx = bt * n      # rows of the flattened input block
    rs = bt * s      # rows of the flattened slots block

    # ---- once per grid step: norm_input + fused K/V projection ------------
    x = x_ref[...].reshape(rx, d)                           # f32
    xn = _layernorm(x, ln_in_w_ref[...], ln_in_b_ref[...])
    kv = jnp.dot(xn.astype(bf16), wkv_ref[...],
                 preferred_element_type=f32) + bkv_ref[...]
    k3 = kv[:, :d].reshape(bt, n, d).astype(bf16)           # (Bt, N, D)
    v3 = kv[:, d:].reshape(bt, n, d).astype(bf16)           # (Bt, N, D)

    # ---- loop-invariant weights / biases (hoisted + pre-broadcast) --------
    wq = wq_ref[...]
    w_ih = w_ih_ref[...]
    w_hh = w_hh_ref[...]
    w1 = w1_ref[...]
    w2 = w2_ref[...]
    bq = jnp.broadcast_to(bq_ref[...], (rs, d))
    b_ih = jnp.broadcast_to(b_ih_ref[...], (rs, 3 * d))
    b_hh = jnp.broadcast_to(b_hh_ref[...], (rs, 3 * d))
    b1 = jnp.broadcast_to(b1_ref[...], (rs, hidden))
    b2 = jnp.broadcast_to(b2_ref[...], (rs, d))
    ln_sl_w = jnp.broadcast_to(ln_sl_w_ref[...], (rs, d))
    ln_sl_b = jnp.broadcast_to(ln_sl_b_ref[...], (rs, d))
    ln_ff_w = jnp.broadcast_to(ln_ff_w_ref[...], (rs, d))
    ln_ff_b = jnp.broadcast_to(ln_ff_b_ref[...], (rs, d))

    # slots = embedding(arange(S)) broadcast over the Bt batch rows.
    slots = jnp.broadcast_to(slots_init_ref[...], (bt, s, d)).reshape(rs, d)

    for _ in range(iters):
        slots_prev = slots                                   # (Bt*S, D) f32

        sn = _layernorm(slots, ln_sl_w, ln_sl_b)
        q = jnp.dot(sn.astype(bf16), wq, preferred_element_type=f32) + bq
        q3 = q.reshape(bt, s, d).astype(bf16)

        # dots: einsum('bid,bjd->bij') -- contract last dims, no transpose.
        dots = jnp.einsum("bid,bjd->bij", q3, k3,
                          preferred_element_type=f32) * scale   # (Bt, S, N)

        # softmax over the SLOT axis (dim=1 in torch), +eps, then renormalize
        # over the input axis.  Divides -> EUP reciprocals.
        m = jnp.max(dots, axis=1, keepdims=True)
        e = jnp.exp(dots - m)
        attn = e * pl.reciprocal(jnp.sum(e, axis=1, keepdims=True),
                                 approx=True) + eps
        attn = attn * pl.reciprocal(jnp.sum(attn, axis=-1, keepdims=True),
                                    approx=True)

        # updates: einsum('bjd,bij->bid') = attn @ v
        updates = jnp.einsum("bij,bjd->bid", attn.astype(bf16), v3,
                             preferred_element_type=f32).reshape(rs, d)

        # GRUCell(updates, slots_prev), PyTorch gate order [r, z, n]
        gi = jnp.dot(updates.astype(bf16), w_ih,
                     preferred_element_type=f32) + b_ih
        gh = jnp.dot(slots_prev.astype(bf16), w_hh,
                     preferred_element_type=f32) + b_hh
        r = jax.nn.sigmoid(gi[:, 0 * d:1 * d] + gh[:, 0 * d:1 * d])
        z = jax.nn.sigmoid(gi[:, 1 * d:2 * d] + gh[:, 1 * d:2 * d])
        ng = jnp.tanh(gi[:, 2 * d:3 * d] + r * gh[:, 2 * d:3 * d])
        slots = (1.0 - z) * ng + z * slots_prev

        # slots = slots + MLP(norm_pre_ff(slots))
        sf = _layernorm(slots, ln_ff_w, ln_ff_b)
        h = jnp.maximum(
            jnp.dot(sf.astype(bf16), w1, preferred_element_type=f32) + b1, 0.0)
        slots = slots + jnp.dot(h.astype(bf16), w2,
                                preferred_element_type=f32) + b2

    out_ref[...] = slots.reshape(bt, s, d)
    # TODO(synk): at production sizes with D < 128 lanes, store the output as a
    # lane-dense (Bt, S*D) slab (unmasked vst) and reshape back in the wrapper.


# ---------------------------------------------------------------------------
# Wrapper
# ---------------------------------------------------------------------------
def _pick_batch_tile(b, n, target_rows=256):
    """Smallest divisor Bt of b with Bt*N >= target_rows (fills the MXU M-dim),
    preferring to leave >= 2 grid steps so v7x's 2 TensorCores both get work."""
    divisors = [x for x in range(1, b + 1) if b % x == 0]
    cands = [x for x in divisors if b // x >= 2] or divisors
    for x in cands:
        if x * n >= target_rows:
            return x
    return cands[-1]


def slot_attention(inputs, params, *, num_slots, iters=3, eps=1e-8,
                   batch_tile=None):
    """inputs: (B, N, D) float32 -> slots (B, num_slots, D) float32."""
    b, n, d = inputs.shape
    n_s = num_slots
    hidden = params["w1"].shape[1]
    scale = float(d) ** (-0.5)

    bt = batch_tile if batch_tile is not None else _pick_batch_tile(b, n)
    assert b % bt == 0, "batch_tile must divide the batch"
    grid_b = b // bt

    f32, bf16 = jnp.float32, jnp.bfloat16

    # Fused K/V projection; matmul weights in bf16 (f32 accumulation inside the
    # kernel), biases and layernorm params in f32.
    wkv = jnp.concatenate([params["wk"], params["wv"]], axis=1)
    bkv = jnp.concatenate(
        [params["bk"].reshape(-1), params["bv"].reshape(-1)], axis=0)

    ordered = [
        ("slots_init", params["slots_init"].reshape(n_s, d), f32),
        ("ln_in_w", params["ln_in_w"].reshape(1, d), f32),
        ("ln_in_b", params["ln_in_b"].reshape(1, d), f32),
        ("wkv", wkv.reshape(d, 2 * d), bf16),
        ("bkv", bkv.reshape(1, 2 * d), f32),
        ("wq", params["wq"].reshape(d, d), bf16),
        ("bq", params["bq"].reshape(1, d), f32),
        ("ln_sl_w", params["ln_sl_w"].reshape(1, d), f32),
        ("ln_sl_b", params["ln_sl_b"].reshape(1, d), f32),
        ("w_ih", params["w_ih"].reshape(d, 3 * d), bf16),
        ("b_ih", params["b_ih"].reshape(1, 3 * d), f32),
        ("w_hh", params["w_hh"].reshape(d, 3 * d), bf16),
        ("b_hh", params["b_hh"].reshape(1, 3 * d), f32),
        ("ln_ff_w", params["ln_ff_w"].reshape(1, d), f32),
        ("ln_ff_b", params["ln_ff_b"].reshape(1, d), f32),
        ("w1", params["w1"].reshape(d, hidden), bf16),
        ("b1", params["b1"].reshape(1, hidden), f32),
        ("w2", params["w2"].reshape(hidden, d), bf16),
        ("b2", params["b2"].reshape(1, d), f32),
    ]

    in_specs = [pl.BlockSpec((bt, n, d), lambda i: (i, 0, 0))]
    args = [inputs.astype(f32)]
    for _name, arr, dt in ordered:
        nd = len(arr.shape)
        in_specs.append(pl.BlockSpec(arr.shape, lambda i, _nd=nd: (0,) * _nd))
        args.append(arr.astype(dt))

    # Rough cost estimate so XLA schedules the custom call sensibly.
    flops = b * (
        2 * n * d * (2 * d)                               # fused K/V projection
        + iters * (2 * n_s * d * d                        # q projection
                   + 4 * n_s * n * d                      # dots + updates
                   + 2 * 2 * n_s * d * (3 * d)            # GRU gi + gh
                   + 2 * 2 * n_s * d * hidden))           # MLP
    transcendentals = b * iters * (n_s * n + 3 * n_s * d)
    w_bytes = sum(int(a.size) * a.dtype.itemsize for a in args[1:])
    bytes_accessed = int(inputs.size) * 4 + b * n_s * d * 4 + w_bytes

    # Keep the VMEM request within v7x's 64 MiB (half of v5e/v6e).
    block_bytes = 2 * (bt * n * d * 4) + 2 * (bt * n_s * d * 4) + w_bytes
    vmem_limit = int(min(max(4 * block_bytes, 32 * 1024 * 1024),
                         64 * 1024 * 1024))
    # TODO(synk): at production N*D, tile the K/V projection over N instead of
    # pulling the whole (Bt, N, D) slab into VMEM.

    kernel = functools.partial(
        _slot_attention_kernel, bt=bt, n=n, s=n_s, d=d, hidden=hidden,
        iters=iters, scale=scale, eps=eps)

    return pl.pallas_call(
        kernel,
        out_shape=jax.ShapeDtypeStruct((b, n_s, d), jnp.float32),
        grid_spec=pltpu.PrefetchScalarGridSpec(
            num_scalar_prefetch=0,
            grid=(grid_b,),
            in_specs=in_specs,
            out_specs=pl.BlockSpec((bt, n_s, d), lambda i: (i, 0, 0)),
        ),
        compiler_params=pltpu.CompilerParams(
            dimension_semantics=("parallel",),
            vmem_limit_bytes=vmem_limit),
        cost_estimate=pl.CostEstimate(
            flops=int(flops),
            transcendentals=int(transcendentals),
            bytes_accessed=int(bytes_accessed)),
    )(*args)


# ---------------------------------------------------------------------------
# Deterministic parameter construction (shapes from SlotAttention.__init__)
# ---------------------------------------------------------------------------
def make_params(key, encoder_dims, num_slots, hidden_dim=128):
    d = encoder_dims
    hidden = max(encoder_dims, hidden_dim)
    ks = jax.random.split(key, 16)

    def rnd(k, shape, s=0.1):
        return jax.random.normal(k, shape, dtype=jnp.float32) * s

    params = {
        # nn.Embedding(num_slots, d).weight
        "slots_init": rnd(ks[0], (num_slots, d), 1.0),
        # LayerNorms (weight, bias)
        "ln_in_w": jnp.ones((d,), jnp.float32), "ln_in_b": jnp.zeros((d,), jnp.float32),
        "ln_sl_w": jnp.ones((d,), jnp.float32), "ln_sl_b": jnp.zeros((d,), jnp.float32),
        "ln_ff_w": jnp.ones((d,), jnp.float32), "ln_ff_b": jnp.zeros((d,), jnp.float32),
        # Linear q/k/v: stored pre-transposed as (in, out) so kernel does x @ W
        "wq": rnd(ks[1], (d, d)), "bq": rnd(ks[2], (d,)),
        "wk": rnd(ks[3], (d, d)), "bk": rnd(ks[4], (d,)),
        "wv": rnd(ks[5], (d, d)), "bv": rnd(ks[6], (d,)),
        # GRUCell: weight_ih (3d, d) / weight_hh (3d, d) pre-transposed to (d, 3d)
        "w_ih": rnd(ks[7], (d, 3 * d)), "b_ih": rnd(ks[8], (3 * d,)),
        "w_hh": rnd(ks[9], (d, 3 * d)), "b_hh": rnd(ks[10], (3 * d,)),
        # MLP: Linear(d, hidden) + ReLU + Linear(hidden, d), pre-transposed
        "w1": rnd(ks[11], (d, hidden)), "b1": rnd(ks[12], (hidden,)),
        "w2": rnd(ks[13], (hidden, d)), "b2": rnd(ks[14], (d,)),
    }
    return params


# Pure-JAX f32 reference (mirrors the PyTorch forward exactly).
def reference(inputs, params, *, num_slots, iters=3, eps=1e-8):
    b, n, d = inputs.shape
    scale = float(d) ** (-0.5)

    def ln(x, w, b_):
        mu = jnp.mean(x, axis=-1, keepdims=True)
        var = jnp.mean((x - mu) ** 2, axis=-1, keepdims=True)
        return (x - mu) / jnp.sqrt(var + 1e-5) * w + b_

    xn = ln(inputs, params["ln_in_w"], params["ln_in_b"])
    k = xn @ params["wk"] + params["bk"]
    v = xn @ params["wv"] + params["bv"]
    slots = jnp.broadcast_to(params["slots_init"][None], (b, num_slots, d))
    for _ in range(iters):
        slots_prev = slots
        sn = ln(slots, params["ln_sl_w"], params["ln_sl_b"])
        q = sn @ params["wq"] + params["bq"]
        dots = jnp.einsum("bid,bjd->bij", q, k) * scale
        attn = jax.nn.softmax(dots, axis=1) + eps
        attn = attn / jnp.sum(attn, axis=-1, keepdims=True)
        updates = jnp.einsum("bjd,bij->bid", v, attn)
        gi = updates @ params["w_ih"] + params["b_ih"]
        gh = slots_prev @ params["w_hh"] + params["b_hh"]
        r = jax.nn.sigmoid(gi[..., :d] + gh[..., :d])
        z = jax.nn.sigmoid(gi[..., d:2 * d] + gh[..., d:2 * d])
        ng = jnp.tanh(gi[..., 2 * d:] + r * gh[..., 2 * d:])
        slots = (1.0 - z) * ng + z * slots_prev
        sf = ln(slots, params["ln_ff_w"], params["ln_ff_b"])
        h = jnp.maximum(sf @ params["w1"] + params["b1"], 0.0)
        slots = slots + h @ params["w2"] + params["b2"]
    return slots


if __name__ == "__main__":
    # Small shapes consistent with the module's forward: (b, n, d)
    B, N, D = 2, 16, 32
    NUM_SLOTS = 8
    ITERS = 3

    key = jax.random.PRNGKey(0)
    k_in, k_par = jax.random.split(key)
    inputs = jax.random.normal(k_in, (B, N, D), dtype=jnp.float32)
    params = make_params(k_par, encoder_dims=D, num_slots=NUM_SLOTS, hidden_dim=128)

    out = slot_attention(inputs, params, num_slots=NUM_SLOTS, iters=ITERS)
    out = jax.block_until_ready(out)

    ref = jax.block_until_ready(
        reference(inputs, params, num_slots=NUM_SLOTS, iters=ITERS))
    assert out.shape == (B, NUM_SLOTS, D)
    # bf16 MXU operands (f32 accumulation) + approx reciprocal -> tolerance is
    # looser than the pure-f32 reference.
    assert jnp.allclose(out, ref, atol=5e-2, rtol=5e-2), "mismatch vs JAX reference"

    print("KERNEL_OK")
</pallas_src>

<mosaic_0001>
module attributes {stable_mosaic.version = 11 : i64} {
  func.func @_slot_attention_kernel(%arg0: i32, %arg1: memref<1x16x32xf32, #tpu.memory_space<vmem>>, %arg2: memref<8x32xf32, #tpu.memory_space<vmem>>, %arg3: memref<1x32xf32, #tpu.memory_space<vmem>>, %arg4: memref<1x32xf32, #tpu.memory_space<vmem>>, %arg5: memref<32x64xbf16, #tpu.memory_space<vmem>>, %arg6: memref<1x64xf32, #tpu.memory_space<vmem>>, %arg7: memref<32x32xbf16, #tpu.memory_space<vmem>>, %arg8: memref<1x32xf32, #tpu.memory_space<vmem>>, %arg9: memref<1x32xf32, #tpu.memory_space<vmem>>, %arg10: memref<1x32xf32, #tpu.memory_space<vmem>>, %arg11: memref<32x96xbf16, #tpu.memory_space<vmem>>, %arg12: memref<1x96xf32, #tpu.memory_space<vmem>>, %arg13: memref<32x96xbf16, #tpu.memory_space<vmem>>, %arg14: memref<1x96xf32, #tpu.memory_space<vmem>>, %arg15: memref<1x32xf32, #tpu.memory_space<vmem>>, %arg16: memref<1x32xf32, #tpu.memory_space<vmem>>, %arg17: memref<32x128xbf16, #tpu.memory_space<vmem>>, %arg18: memref<1x128xf32, #tpu.memory_space<vmem>>, %arg19: memref<128x32xbf16, #tpu.memory_space<vmem>>, %arg20: memref<1x32xf32, #tpu.memory_space<vmem>>, %arg21: memref<1x8x32xf32, #tpu.memory_space<vmem>>) attributes {dimension_semantics = [#tpu.dimension_semantics<parallel>], iteration_bounds = array<i64: 2>, scalar_prefetch = 0 : i64, scratch_operands = 0 : i64, tpu.core_type = #tpu.core_type<tc>, window_params = [{transform_indices = @transform_0, window_bounds = array<i64: 1, 16, 32>}, {pipeline_mode = #tpu.pipeline_mode<synchronous>, transform_indices = @transform_1, window_bounds = array<i64: 8, 32>}, {pipeline_mode = #tpu.pipeline_mode<synchronous>, transform_indices = @transform_2, window_bounds = array<i64: 1, 32>}, {pipeline_mode = #tpu.pipeline_mode<synchronous>, transform_indices = @transform_3, window_bounds = array<i64: 1, 32>}, {pipeline_mode = #tpu.pipeline_mode<synchronous>, transform_indices = @transform_4, window_bounds = array<i64: 32, 64>}, {pipeline_mode = #tpu.pipeline_mode<synchronous>, transform_indices = @transform_5, window_bounds = array<i64: 1, 64>}, {pipeline_mode = #tpu.pipeline_mode<synchronous>, transform_indices = @transform_6, window_bounds = array<i64: 32, 32>}, {pipeline_mode = #tpu.pipeline_mode<synchronous>, transform_indices = @transform_7, window_bounds = array<i64: 1, 32>}, {pipeline_mode = #tpu.pipeline_mode<synchronous>, transform_indices = @transform_8, window_bounds = array<i64: 1, 32>}, {pipeline_mode = #tpu.pipeline_mode<synchronous>, transform_indices = @transform_9, window_bounds = array<i64: 1, 32>}, {pipeline_mode = #tpu.pipeline_mode<synchronous>, transform_indices = @transform_10, window_bounds = array<i64: 32, 96>}, {pipeline_mode = #tpu.pipeline_mode<synchronous>, transform_indices = @transform_11, window_bounds = array<i64: 1, 96>}, {pipeline_mode = #tpu.pipeline_mode<synchronous>, transform_indices = @transform_12, window_bounds = array<i64: 32, 96>}, {pipeline_mode = #tpu.pipeline_mode<synchronous>, transform_indices = @transform_13, window_bounds = array<i64: 1, 96>}, {pipeline_mode = #tpu.pipeline_mode<synchronous>, transform_indices = @transform_14, window_bounds = array<i64: 1, 32>}, {pipeline_mode = #tpu.pipeline_mode<synchronous>, transform_indices = @transform_15, window_bounds = array<i64: 1, 32>}, {pipeline_mode = #tpu.pipeline_mode<synchronous>, transform_indices = @transform_16, window_bounds = array<i64: 32, 128>}, {pipeline_mode = #tpu.pipeline_mode<synchronous>, transform_indices = @transform_17, window_bounds = array<i64: 1, 128>}, {pipeline_mode = #tpu.pipeline_mode<synchronous>, transform_indices = @transform_18, window_bounds = array<i64: 128, 32>}, {pipeline_mode = #tpu.pipeline_mode<synchronous>, transform_indices = @transform_19, window_bounds = array<i64: 1, 32>}, {transform_indices = @transform_20, window_bounds = array<i64: 1, 8, 32>}]} {
    %c0 = arith.constant 0 : index
    %c0_0 = arith.constant 0 : index
    %c0_1 = arith.constant 0 : index
    %0 = vector.load %arg1[%c0, %c0_0, %c0_1] : memref<1x16x32xf32, #tpu.memory_space<vmem>>, vector<1x16x32xf32>
    %1 = vector.shape_cast %0 : vector<1x16x32xf32> to vector<16x32xf32>
    %c0_2 = arith.constant 0 : index
    %c0_3 = arith.constant 0 : index
    %2 = vector.load %arg3[%c0_2, %c0_3] : memref<1x32xf32, #tpu.memory_space<vmem>>, vector<1x32xf32>
    %c0_4 = arith.constant 0 : index
    %c0_5 = arith.constant 0 : index
    %3 = vector.load %arg4[%c0_4, %c0_5] : memref<1x32xf32, #tpu.memory_space<vmem>>, vector<1x32xf32>
    %cst = arith.constant dense<0.000000e+00> : vector<16xf32>
    %4 = vector.multi_reduction <add>, %1, %cst [1] : vector<16x32xf32> to vector<16xf32>
    %5 = vector.shape_cast %4 : vector<16xf32> to vector<16x1xf32>
    %cst_6 = arith.constant 3.200000e+01 : f32
    %6 = vector.broadcast %cst_6 : f32 to vector<16x1xf32>
    %7 = arith.divf %5, %6 : vector<16x1xf32>
    %8 = vector.broadcast %7 : vector<16x1xf32> to vector<16x32xf32>
    %9 = arith.subf %1, %8 : vector<16x32xf32>
    %10 = arith.mulf %9, %9 : vector<16x32xf32>
    %cst_7 = arith.constant dense<0.000000e+00> : vector<16xf32>
    %11 = vector.multi_reduction <add>, %10, %cst_7 [1] : vector<16x32xf32> to vector<16xf32>
    %12 = vector.shape_cast %11 : vector<16xf32> to vector<16x1xf32>
    %cst_8 = arith.constant 3.200000e+01 : f32
    %13 = vector.broadcast %cst_8 : f32 to vector<16x1xf32>
    %14 = arith.divf %12, %13 : vector<16x1xf32>
    %15 = vector.broadcast %7 : vector<16x1xf32> to vector<16x32xf32>
    %16 = arith.subf %1, %15 : vector<16x32xf32>
    %cst_9 = arith.constant 9.99999974E-6 : f32
    %17 = vector.broadcast %cst_9 : f32 to vector<16x1xf32>
    %18 = arith.addf %14, %17 : vector<16x1xf32>
    %19 = math.rsqrt %18 : vector<16x1xf32>
    %20 = vector.broadcast %19 : vector<16x1xf32> to vector<16x32xf32>
    %21 = arith.mulf %16, %20 : vector<16x32xf32>
    %22 = vector.broadcast %2 : vector<1x32xf32> to vector<16x32xf32>
    %23 = arith.mulf %21, %22 : vector<16x32xf32>
    %24 = vector.broadcast %3 : vector<1x32xf32> to vector<16x32xf32>
    %25 = arith.addf %23, %24 : vector<16x32xf32>
    %26 = arith.truncf %25 : vector<16x32xf32> to vector<16x32xbf16>
    %c0_10 = arith.constant 0 : index
    %c0_11 = arith.constant 0 : index
    %27 = vector.load %arg5[%c0_10, %c0_11] : memref<32x64xbf16, #tpu.memory_space<vmem>>, vector<32x64xbf16>
    %cst_12 = arith.constant dense<0.000000e+00> : vector<16x64xf32>
    %28 = tpu.matmul %26, %27, %cst_12 {dimension_numbers = #tpu.dot_dimension_numbers<[1], [0], [0], [1], [0, 0, 1, 1], [], []>} : vector<16x32xbf16>, vector<32x64xbf16>, vector<16x64xf32> -> vector<16x64xf32>
    %c0_13 = arith.constant 0 : index
    %c0_14 = arith.constant 0 : index
    %29 = vector.load %arg6[%c0_13, %c0_14] : memref<1x64xf32, #tpu.memory_space<vmem>>, vector<1x64xf32>
    %30 = vector.broadcast %29 : vector<1x64xf32> to vector<16x64xf32>
    %31 = arith.addf %28, %30 : vector<16x64xf32>
    %32 = vector.extract_strided_slice %31 {offsets = [0, 0], sizes = [16, 32], strides = [1, 1]} : vector<16x64xf32> to vector<16x32xf32>
    %33 = vector.shape_cast %32 : vector<16x32xf32> to vector<1x16x32xf32>
    %34 = arith.truncf %33 : vector<1x16x32xf32> to vector<1x16x32xbf16>
    %35 = vector.extract_strided_slice %31 {offsets = [0, 32], sizes = [16, 32], strides = [1, 1]} : vector<16x64xf32> to vector<16x32xf32>
    %36 = vector.shape_cast %35 : vector<16x32xf32> to vector<1x16x32xf32>
    %37 = arith.truncf %36 : vector<1x16x32xf32> to vector<1x16x32xbf16>
    %c0_15 = arith.constant 0 : index
    %c0_16 = arith.constant 0 : index
    %38 = vector.load %arg7[%c0_15, %c0_16] : memref<32x32xbf16, #tpu.memory_space<vmem>>, vector<32x32xbf16>
    %c0_17 = arith.constant 0 : index
    %c0_18 = arith.constant 0 : index
    %39 = vector.load %arg11[%c0_17, %c0_18] : memref<32x96xbf16, #tpu.memory_space<vmem>>, vector<32x96xbf16>
    %c0_19 = arith.constant 0 : index
    %c0_20 = arith.constant 0 : index
    %40 = vector.load %arg13[%c0_19, %c0_20] : memref<32x96xbf16, #tpu.memory_space<vmem>>, vector<32x96xbf16>
    %c0_21 = arith.constant 0 : index
    %c0_22 = arith.constant 0 : index
    %41 = vector.load %arg17[%c0_21, %c0_22] : memref<32x128xbf16, #tpu.memory_space<vmem>>, vector<32x128xbf16>
    %c0_23 = arith.constant 0 : index
    %c0_24 = arith.constant 0 : index
    %42 = vector.load %arg19[%c0_23, %c0_24] : memref<128x32xbf16, #tpu.memory_space<vmem>>, vector<128x32xbf16>
    %c0_25 = arith.constant 0 : index
    %c0_26 = arith.constant 0 : index
    %43 = vector.load %arg8[%c0_25, %c0_26] : memref<1x32xf32, #tpu.memory_space<vmem>>, vector<1x32xf32>
    %44 = vector.shape_cast %43 : vector<1x32xf32> to vector<1x32xf32>
    %45 = vector.broadcast %44 : vector<1x32xf32> to vector<8x32xf32>
    %c0_27 = arith.constant 0 : index
    %c0_28 = arith.constant 0 : index
    %46 = vector.load %arg12[%c0_27, %c0_28] : memref<1x96xf32, #tpu.memory_space<vmem>>, vector<1x96xf32>
    %47 = vector.shape_cast %46 : vector<1x96xf32> to vector<1x96xf32>
    %48 = vector.broadcast %47 : vector<1x96xf32> to vector<8x96xf32>
    %c0_29 = arith.constant 0 : index
    %c0_30 = arith.constant 0 : index
    %49 = vector.load %arg14[%c0_29, %c0_30] : memref<1x96xf32, #tpu.memory_space<vmem>>, vector<1x96xf32>
    %50 = vector.shape_cast %49 : vector<1x96xf32> to vector<1x96xf32>
    %51 = vector.broadcast %50 : vector<1x96xf32> to vector<8x96xf32>
    %c0_31 = arith.constant 0 : index
    %c0_32 = arith.constant 0 : index
    %52 = vector.load %arg18[%c0_31, %c0_32] : memref<1x128xf32, #tpu.memory_space<vmem>>, vector<1x128xf32>
    %53 = vector.shape_cast %52 : vector<1x128xf32> to vector<1x128xf32>
    %54 = vector.broadcast %53 : vector<1x128xf32> to vector<8x128xf32>
    %c0_33 = arith.constant 0 : index
    %c0_34 = arith.constant 0 : index
    %55 = vector.load %arg20[%c0_33, %c0_34] : memref<1x32xf32, #tpu.memory_space<vmem>>, vector<1x32xf32>
    %56 = vector.shape_cast %55 : vector<1x32xf32> to vector<1x32xf32>
    %57 = vector.broadcast %56 : vector<1x32xf32> to vector<8x32xf32>
    %c0_35 = arith.constant 0 : index
    %c0_36 = arith.constant 0 : index
    %58 = vector.load %arg9[%c0_35, %c0_36] : memref<1x32xf32, #tpu.memory_space<vmem>>, vector<1x32xf32>
    %59 = vector.shape_cast %58 : vector<1x32xf32> to vector<1x32xf32>
    %60 = vector.broadcast %59 : vector<1x32xf32> to vector<8x32xf32>
    %c0_37 = arith.constant 0 : index
    %c0_38 = arith.constant 0 : index
    %61 = vector.load %arg10[%c0_37, %c0_38] : memref<1x32xf32, #tpu.memory_space<vmem>>, vector<1x32xf32>
    %62 = vector.shape_cast %61 : vector<1x32xf32> to vector<1x32xf32>
    %63 = vector.broadcast %62 : vector<1x32xf32> to vector<8x32xf32>
    %c0_39 = arith.constant 0 : index
    %c0_40 = arith.constant 0 : index
    %64 = vector.load %arg15[%c0_39, %c0_40] : memref<1x32xf32, #tpu.memory_space<vmem>>, vector<1x32xf32>
    %65 = vector.shape_cast %64 : vector<1x32xf32> to vector<1x32xf32>
    %66 = vector.broadcast %65 : vector<1x32xf32> to vector<8x32xf32>
    %c0_41 = arith.constant 0 : index
    %c0_42 = arith.constant 0 : index
    %67 = vector.load %arg16[%c0_41, %c0_42] : memref<1x32xf32, #tpu.memory_space<vmem>>, vector<1x32xf32>
    %68 = vector.shape_cast %67 : vector<1x32xf32> to vector<1x32xf32>
    %69 = vector.broadcast %68 : vector<1x32xf32> to vector<8x32xf32>
    %c0_43 = arith.constant 0 : index
    %c0_44 = arith.constant 0 : index
    %70 = vector.load %arg2[%c0_43, %c0_44] : memref<8x32xf32, #tpu.memory_space<vmem>>, vector<8x32xf32>
    %71 = vector.shape_cast %70 : vector<8x32xf32> to vector<1x8x32xf32>
    %72 = vector.shape_cast %71 : vector<1x8x32xf32> to vector<8x32xf32>
    %cst_45 = arith.constant dense<0.000000e+00> : vector<8xf32>
    %73 = vector.multi_reduction <add>, %72, %cst_45 [1] : vector<8x32xf32> to vector<8xf32>
    %74 = vector.shape_cast %73 : vector<8xf32> to vector<8x1xf32>
    %cst_46 = arith.constant 3.200000e+01 : f32
    %75 = vector.broadcast %cst_46 : f32 to vector<8x1xf32>
    %76 = arith.divf %74, %75 : vector<8x1xf32>
    %77 = vector.broadcast %76 : vector<8x1xf32> to vector<8x32xf32>
    %78 = arith.subf %72, %77 : vector<8x32xf32>
    %79 = arith.mulf %78, %78 : vector<8x32xf32>
    %cst_47 = arith.constant dense<0.000000e+00> : vector<8xf32>
    %80 = vector.multi_reduction <add>, %79, %cst_47 [1] : vector<8x32xf32> to vector<8xf32>
    %81 = vector.shape_cast %80 : vector<8xf32> to vector<8x1xf32>
    %cst_48 = arith.constant 3.200000e+01 : f32
    %82 = vector.broadcast %cst_48 : f32 to vector<8x1xf32>
    %83 = arith.divf %81, %82 : vector<8x1xf32>
    %84 = vector.broadcast %76 : vector<8x1xf32> to vector<8x32xf32>
    %85 = arith.subf %72, %84 : vector<8x32xf32>
    %cst_49 = arith.constant 9.99999974E-6 : f32
    %86 = vector.broadcast %cst_49 : f32 to vector<8x1xf32>
    %87 = arith.addf %83, %86 : vector<8x1xf32>
    %88 = math.rsqrt %87 : vector<8x1xf32>
    %89 = vector.broadcast %88 : vector<8x1xf32> to vector<8x32xf32>
    %90 = arith.mulf %85, %89 : vector<8x32xf32>
    %91 = arith.mulf %90, %60 : vector<8x32xf32>
    %92 = arith.addf %91, %63 : vector<8x32xf32>
    %93 = arith.truncf %92 : vector<8x32xf32> to vector<8x32xbf16>
    %cst_50 = arith.constant dense<0.000000e+00> : vector<8x32xf32>
    %94 = tpu.matmul %93, %38, %cst_50 {dimension_numbers = #tpu.dot_dimension_numbers<[1], [0], [0], [1], [0, 0, 1, 1], [], []>} : vector<8x32xbf16>, vector<32x32xbf16>, vector<8x32xf32> -> vector<8x32xf32>
    %95 = arith.addf %94, %45 : vector<8x32xf32>
    %96 = vector.shape_cast %95 : vector<8x32xf32> to vector<1x8x32xf32>
    %97 = arith.truncf %96 : vector<1x8x32xf32> to vector<1x8x32xbf16>
    "tpu.trace_start"() <{level = 10 : i32, message = "bid,bjd->bij"}> : () -> ()
    %cst_51 = arith.constant dense<0.000000e+00> : vector<1x8x16xf32>
    %98 = tpu.matmul %97, %34, %cst_51 {dimension_numbers = #tpu.dot_dimension_numbers<[2], [2], [1], [1], [0, 0, 0, 1, 1, 1], [0], [0]>} : vector<1x8x32xbf16>, vector<1x16x32xbf16>, vector<1x8x16xf32> -> vector<1x8x16xf32>
    "tpu.trace_stop"() : () -> ()
    %cst_52 = arith.constant 0.176776692 : f32
    %99 = vector.broadcast %cst_52 : f32 to vector<1x8x16xf32>
    %100 = arith.mulf %98, %99 : vector<1x8x16xf32>
    %cst_53 = arith.constant dense<0xFF800000> : vector<1x16xf32>
    %101 = vector.multi_reduction <maximumf>, %100, %cst_53 [1] : vector<1x8x16xf32> to vector<1x16xf32>
    %102 = vector.shape_cast %101 : vector<1x16xf32> to vector<1x1x16xf32>
    %103 = vector.broadcast %102 : vector<1x1x16xf32> to vector<1x8x16xf32>
    %104 = arith.subf %100, %103 : vector<1x8x16xf32>
    %105 = math.exp %104 : vector<1x8x16xf32>
    %cst_54 = arith.constant dense<0.000000e+00> : vector<1x16xf32>
    %106 = vector.multi_reduction <add>, %105, %cst_54 [1] : vector<1x8x16xf32> to vector<1x16xf32>
    %107 = vector.shape_cast %106 : vector<1x16xf32> to vector<1x1x16xf32>
    %108 = tpu.reciprocal %107 {approx = true} : vector<1x1x16xf32> -> vector<1x1x16xf32>
    %109 = vector.broadcast %108 : vector<1x1x16xf32> to vector<1x8x16xf32>
    %110 = arith.mulf %105, %109 : vector<1x8x16xf32>
    %cst_55 = arith.constant 9.99999993E-9 : f32
    %111 = vector.broadcast %cst_55 : f32 to vector<1x8x16xf32>
    %112 = arith.addf %110, %111 : vector<1x8x16xf32>
    %cst_56 = arith.constant dense<0.000000e+00> : vector<1x8xf32>
    %113 = vector.multi_reduction <add>, %112, %cst_56 [2] : vector<1x8x16xf32> to vector<1x8xf32>
    %114 = vector.shape_cast %113 : vector<1x8xf32> to vector<1x8x1xf32>
    %115 = tpu.reciprocal %114 {approx = true} : vector<1x8x1xf32> -> vector<1x8x1xf32>
    %116 = vector.broadcast %115 : vector<1x8x1xf32> to vector<1x8x16xf32>
    %117 = arith.mulf %112, %116 : vector<1x8x16xf32>
    %118 = arith.truncf %117 : vector<1x8x16xf32> to vector<1x8x16xbf16>
    "tpu.trace_start"() <{level = 10 : i32, message = "bij,bjd->bid"}> : () -> ()
    %cst_57 = arith.constant dense<0.000000e+00> : vector<1x8x32xf32>
    %119 = tpu.matmul %118, %37, %cst_57 {dimension_numbers = #tpu.dot_dimension_numbers<[2], [1], [1], [2], [0, 0, 0, 1, 1, 2], [0], [0]>} : vector<1x8x16xbf16>, vector<1x16x32xbf16>, vector<1x8x32xf32> -> vector<1x8x32xf32>
    "tpu.trace_stop"() : () -> ()
    %120 = vector.shape_cast %119 : vector<1x8x32xf32> to vector<8x32xf32>
    %121 = arith.truncf %120 : vector<8x32xf32> to vector<8x32xbf16>
    %cst_58 = arith.constant dense<0.000000e+00> : vector<8x96xf32>
    %122 = tpu.matmul %121, %39, %cst_58 {dimension_numbers = #tpu.dot_dimension_numbers<[1], [0], [0], [1], [0, 0, 1, 1], [], []>} : vector<8x32xbf16>, vector<32x96xbf16>, vector<8x96xf32> -> vector<8x96xf32>
    %123 = arith.addf %122, %48 : vector<8x96xf32>
    %124 = arith.truncf %72 : vector<8x32xf32> to vector<8x32xbf16>
    %cst_59 = arith.constant dense<0.000000e+00> : vector<8x96xf32>
    %125 = tpu.matmul %124, %40, %cst_59 {dimension_numbers = #tpu.dot_dimension_numbers<[1], [0], [0], [1], [0, 0, 1, 1], [], []>} : vector<8x32xbf16>, vector<32x96xbf16>, vector<8x96xf32> -> vector<8x96xf32>
    %126 = arith.addf %125, %51 : vector<8x96xf32>
    %127 = vector.extract_strided_slice %123 {offsets = [0, 0], sizes = [8, 32], strides = [1, 1]} : vector<8x96xf32> to vector<8x32xf32>
    %128 = vector.extract_strided_slice %126 {offsets = [0, 0], sizes = [8, 32], strides = [1, 1]} : vector<8x96xf32> to vector<8x32xf32>
    %129 = arith.addf %127, %128 : vector<8x32xf32>
    %130 = arith.negf %129 : vector<8x32xf32>
    %131 = math.exp %130 : vector<8x32xf32>
    %cst_60 = arith.constant 1.000000e+00 : f32
    %132 = vector.broadcast %cst_60 : f32 to vector<8x32xf32>
    %133 = arith.addf %132, %131 : vector<8x32xf32>
    %134 = arith.divf %132, %133 : vector<8x32xf32>
    %135 = vector.extract_strided_slice %123 {offsets = [0, 32], sizes = [8, 32], strides = [1, 1]} : vector<8x96xf32> to vector<8x32xf32>
    %136 = vector.extract_strided_slice %126 {offsets = [0, 32], sizes = [8, 32], strides = [1, 1]} : vector<8x96xf32> to vector<8x32xf32>
    %137 = arith.addf %135, %136 : vector<8x32xf32>
    %138 = arith.negf %137 : vector<8x32xf32>
    %139 = math.exp %138 : vector<8x32xf32>
    %cst_61 = arith.constant 1.000000e+00 : f32
    %140 = vector.broadcast %cst_61 : f32 to vector<8x32xf32>
    %141 = arith.addf %140, %139 : vector<8x32xf32>
    %142 = arith.divf %140, %141 : vector<8x32xf32>
    %143 = vector.extract_strided_slice %123 {offsets = [0, 64], sizes = [8, 32], strides = [1, 1]} : vector<8x96xf32> to vector<8x32xf32>
    %144 = vector.extract_strided_slice %126 {offsets = [0, 64], sizes = [8, 32], strides = [1, 1]} : vector<8x96xf32> to vector<8x32xf32>
    %145 = arith.mulf %134, %144 : vector<8x32xf32>
    %146 = arith.addf %143, %145 : vector<8x32xf32>
    %147 = math.tanh %146 : vector<8x32xf32>
    %cst_62 = arith.constant 1.000000e+00 : f32
    %148 = vector.broadcast %cst_62 : f32 to vector<8x32xf32>
    %149 = arith.subf %148, %142 : vector<8x32xf32>
    %150 = arith.mulf %149, %147 : vector<8x32xf32>
    %151 = arith.mulf %142, %72 : vector<8x32xf32>
    %152 = arith.addf %150, %151 : vector<8x32xf32>
    %cst_63 = arith.constant dense<0.000000e+00> : vector<8xf32>
    %153 = vector.multi_reduction <add>, %152, %cst_63 [1] : vector<8x32xf32> to vector<8xf32>
    %154 = vector.shape_cast %153 : vector<8xf32> to vector<8x1xf32>
    %cst_64 = arith.constant 3.200000e+01 : f32
    %155 = vector.broadcast %cst_64 : f32 to vector<8x1xf32>
    %156 = arith.divf %154, %155 : vector<8x1xf32>
    %157 = vector.broadcast %156 : vector<8x1xf32> to vector<8x32xf32>
    %158 = arith.subf %152, %157 : vector<8x32xf32>
    %159 = arith.mulf %158, %158 : vector<8x32xf32>
    %cst_65 = arith.constant dense<0.000000e+00> : vector<8xf32>
    %160 = vector.multi_reduction <add>, %159, %cst_65 [1] : vector<8x32xf32> to vector<8xf32>
    %161 = vector.shape_cast %160 : vector<8xf32> to vector<8x1xf32>
    %cst_66 = arith.constant 3.200000e+01 : f32
    %162 = vector.broadcast %cst_66 : f32 to vector<8x1xf32>
    %163 = arith.divf %161, %162 : vector<8x1xf32>
    %164 = vector.broadcast %156 : vector<8x1xf32> to vector<8x32xf32>
    %165 = arith.subf %152, %164 : vector<8x32xf32>
    %cst_67 = arith.constant 9.99999974E-6 : f32
    %166 = vector.broadcast %cst_67 : f32 to vector<8x1xf32>
    %167 = arith.addf %163, %166 : vector<8x1xf32>
    %168 = math.rsqrt %167 : vector<8x1xf32>
    %169 = vector.broadcast %168 : vector<8x1xf32> to vector<8x32xf32>
    %170 = arith.mulf %165, %169 : vector<8x32xf32>
    %171 = arith.mulf %170, %66 : vector<8x32xf32>
    %172 = arith.addf %171, %69 : vector<8x32xf32>
    %173 = arith.truncf %172 : vector<8x32xf32> to vector<8x32xbf16>
    %cst_68 = arith.constant dense<0.000000e+00> : vector<8x128xf32>
    %174 = tpu.matmul %173, %41, %cst_68 {dimension_numbers = #tpu.dot_dimension_numbers<[1], [0], [0], [1], [0, 0, 1, 1], [], []>} : vector<8x32xbf16>, vector<32x128xbf16>, vector<8x128xf32> -> vector<8x128xf32>
    %175 = arith.addf %174, %54 : vector<8x128xf32>
    %cst_69 = arith.constant 0.000000e+00 : f32
    %176 = vector.broadcast %cst_69 : f32 to vector<8x128xf32>
    %177 = arith.maximumf %175, %176 : vector<8x128xf32>
    %178 = arith.truncf %177 : vector<8x128xf32> to vector<8x128xbf16>
    %cst_70 = arith.constant dense<0.000000e+00> : vector<8x32xf32>
    %179 = tpu.matmul %178, %42, %cst_70 {dimension_numbers = #tpu.dot_dimension_numbers<[1], [0], [0], [1], [0, 0, 1, 1], [], []>} : vector<8x128xbf16>, vector<128x32xbf16>, vector<8x32xf32> -> vector<8x32xf32>
    %180 = arith.addf %152, %179 : vector<8x32xf32>
    %181 = arith.addf %180, %57 : vector<8x32xf32>
    %cst_71 = arith.constant dense<0.000000e+00> : vector<8xf32>
    %182 = vector.multi_reduction <add>, %181, %cst_71 [1] : vector<8x32xf32> to vector<8xf32>
    %183 = vector.shape_cast %182 : vector<8xf32> to vector<8x1xf32>
    %cst_72 = arith.constant 3.200000e+01 : f32
    %184 = vector.broadcast %cst_72 : f32 to vector<8x1xf32>
    %185 = arith.divf %183, %184 : vector<8x1xf32>
    %186 = vector.broadcast %185 : vector<8x1xf32> to vector<8x32xf32>
    %187 = arith.subf %181, %186 : vector<8x32xf32>
    %188 = arith.mulf %187, %187 : vector<8x32xf32>
    %cst_73 = arith.constant dense<0.000000e+00> : vector<8xf32>
    %189 = vector.multi_reduction <add>, %188, %cst_73 [1] : vector<8x32xf32> to vector<8xf32>
    %190 = vector.shape_cast %189 : vector<8xf32> to vector<8x1xf32>
    %cst_74 = arith.constant 3.200000e+01 : f32
    %191 = vector.broadcast %cst_74 : f32 to vector<8x1xf32>
    %192 = arith.divf %190, %191 : vector<8x1xf32>
    %193 = vector.broadcast %185 : vector<8x1xf32> to vector<8x32xf32>
    %194 = arith.subf %181, %193 : vector<8x32xf32>
    %cst_75 = arith.constant 9.99999974E-6 : f32
    %195 = vector.broadcast %cst_75 : f32 to vector<8x1xf32>
    %196 = arith.addf %192, %195 : vector<8x1xf32>
    %197 = math.rsqrt %196 : vector<8x1xf32>
    %198 = vector.broadcast %197 : vector<8x1xf32> to vector<8x32xf32>
    %199 = arith.mulf %194, %198 : vector<8x32xf32>
    %200 = arith.mulf %199, %60 : vector<8x32xf32>
    %201 = arith.addf %200, %63 : vector<8x32xf32>
    %202 = arith.truncf %201 : vector<8x32xf32> to vector<8x32xbf16>
    %cst_76 = arith.constant dense<0.000000e+00> : vector<8x32xf32>
    %203 = tpu.matmul %202, %38, %cst_76 {dimension_numbers = #tpu.dot_dimension_numbers<[1], [0], [0], [1], [0, 0, 1, 1], [], []>} : vector<8x32xbf16>, vector<32x32xbf16>, vector<8x32xf32> -> vector<8x32xf32>
    %204 = arith.addf %203, %45 : vector<8x32xf32>
    %205 = vector.shape_cast %204 : vector<8x32xf32> to vector<1x8x32xf32>
    %206 = arith.truncf %205 : vector<1x8x32xf32> to vector<1x8x32xbf16>
    "tpu.trace_start"() <{level = 10 : i32, message = "bid,bjd->bij"}> : () -> ()
    %cst_77 = arith.constant dense<0.000000e+00> : vector<1x8x16xf32>
    %207 = tpu.matmul %206, %34, %cst_77 {dimension_numbers = #tpu.dot_dimension_numbers<[2], [2], [1], [1], [0, 0, 0, 1, 1, 1], [0], [0]>} : vector<1x8x32xbf16>, vector<1x16x32xbf16>, vector<1x8x16xf32> -> vector<1x8x16xf32>
    "tpu.trace_stop"() : () -> ()
    %cst_78 = arith.constant 0.176776692 : f32
    %208 = vector.broadcast %cst_78 : f32 to vector<1x8x16xf32>
    %209 = arith.mulf %207, %208 : vector<1x8x16xf32>
    %cst_79 = arith.constant dense<0xFF800000> : vector<1x16xf32>
    %210 = vector.multi_reduction <maximumf>, %209, %cst_79 [1] : vector<1x8x16xf32> to vector<1x16xf32>
    %211 = vector.shape_cast %210 : vector<1x16xf32> to vector<1x1x16xf32>
    %212 = vector.broadcast %211 : vector<1x1x16xf32> to vector<1x8x16xf32>
    %213 = arith.subf %209, %212 : vector<1x8x16xf32>
    %214 = math.exp %213 : vector<1x8x16xf32>
    %cst_80 = arith.constant dense<0.000000e+00> : vector<1x16xf32>
    %215 = vector.multi_reduction <add>, %214, %cst_80 [1] : vector<1x8x16xf32> to vector<1x16xf32>
    %216 = vector.shape_cast %215 : vector<1x16xf32> to vector<1x1x16xf32>
    %217 = tpu.reciprocal %216 {approx = true} : vector<1x1x16xf32> -> vector<1x1x16xf32>
    %218 = vector.broadcast %217 : vector<1x1x16xf32> to vector<1x8x16xf32>
    %219 = arith.mulf %214, %218 : vector<1x8x16xf32>
    %cst_81 = arith.constant 9.99999993E-9 : f32
    %220 = vector.broadcast %cst_81 : f32 to vector<1x8x16xf32>
    %221 = arith.addf %219, %220 : vector<1x8x16xf32>
    %cst_82 = arith.constant dense<0.000000e+00> : vector<1x8xf32>
    %222 = vector.multi_reduction <add>, %221, %cst_82 [2] : vector<1x8x16xf32> to vector<1x8xf32>
    %223 = vector.shape_cast %222 : vector<1x8xf32> to vector<1x8x1xf32>
    %224 = tpu.reciprocal %223 {approx = true} : vector<1x8x1xf32> -> vector<1x8x1xf32>
    %225 = vector.broadcast %224 : vector<1x8x1xf32> to vector<1x8x16xf32>
    %226 = arith.mulf %221, %225 : vector<1x8x16xf32>
    %227 = arith.truncf %226 : vector<1x8x16xf32> to vector<1x8x16xbf16>
    "tpu.trace_start"() <{level = 10 : i32, message = "bij,bjd->bid"}> : () -> ()
    %cst_83 = arith.constant dense<0.000000e+00> : vector<1x8x32xf32>
    %228 = tpu.matmul %227, %37, %cst_83 {dimension_numbers = #tpu.dot_dimension_numbers<[2], [1], [1], [2], [0, 0, 0, 1, 1, 2], [0], [0]>} : vector<1x8x16xbf16>, vector<1x16x32xbf16>, vector<1x8x32xf32> -> vector<1x8x32xf32>
    "tpu.trace_stop"() : () -> ()
    %229 = vector.shape_cast %228 : vector<1x8x32xf32> to vector<8x32xf32>
    %230 = arith.truncf %229 : vector<8x32xf32> to vector<8x32xbf16>
    %cst_84 = arith.constant dense<0.000000e+00> : vector<8x96xf32>
    %231 = tpu.matmul %230, %39, %cst_84 {dimension_numbers = #tpu.dot_dimension_numbers<[1], [0], [0], [1], [0, 0, 1, 1], [], []>} : vector<8x32xbf16>, vector<32x96xbf16>, vector<8x96xf32> -> vector<8x96xf32>
    %232 = arith.addf %231, %48 : vector<8x96xf32>
    %233 = arith.truncf %181 : vector<8x32xf32> to vector<8x32xbf16>
    %cst_85 = arith.constant dense<0.000000e+00> : vector<8x96xf32>
    %234 = tpu.matmul %233, %40, %cst_85 {dimension_numbers = #tpu.dot_dimension_numbers<[1], [0], [0], [1], [0, 0, 1, 1], [], []>} : vector<8x32xbf16>, vector<32x96xbf16>, vector<8x96xf32> -> vector<8x96xf32>
    %235 = arith.addf %234, %51 : vector<8x96xf32>
    %236 = vector.extract_strided_slice %232 {offsets = [0, 0], sizes = [8, 32], strides = [1, 1]} : vector<8x96xf32> to vector<8x32xf32>
    %237 = vector.extract_strided_slice %235 {offsets = [0, 0], sizes = [8, 32], strides = [1, 1]} : vector<8x96xf32> to vector<8x32xf32>
    %238 = arith.addf %236, %237 : vector<8x32xf32>
    %239 = arith.negf %238 : vector<8x32xf32>
    %240 = math.exp %239 : vector<8x32xf32>
    %cst_86 = arith.constant 1.000000e+00 : f32
    %241 = vector.broadcast %cst_86 : f32 to vector<8x32xf32>
    %242 = arith.addf %241, %240 : vector<8x32xf32>
    %243 = arith.divf %241, %242 : vector<8x32xf32>
    %244 = vector.extract_strided_slice %232 {offsets = [0, 32], sizes = [8, 32], strides = [1, 1]} : vector<8x96xf32> to vector<8x32xf32>
    %245 = vector.extract_strided_slice %235 {offsets = [0, 32], sizes = [8, 32], strides = [1, 1]} : vector<8x96xf32> to vector<8x32xf32>
    %246 = arith.addf %244, %245 : vector<8x32xf32>
    %247 = arith.negf %246 : vector<8x32xf32>
    %248 = math.exp %247 : vector<8x32xf32>
    %cst_87 = arith.constant 1.000000e+00 : f32
    %249 = vector.broadcast %cst_87 : f32 to vector<8x32xf32>
    %250 = arith.addf %249, %248 : vector<8x32xf32>
    %251 = arith.divf %249, %250 : vector<8x32xf32>
    %252 = vector.extract_strided_slice %232 {offsets = [0, 64], sizes = [8, 32], strides = [1, 1]} : vector<8x96xf32> to vector<8x32xf32>
    %253 = vector.extract_strided_slice %235 {offsets = [0, 64], sizes = [8, 32], strides = [1, 1]} : vector<8x96xf32> to vector<8x32xf32>
    %254 = arith.mulf %243, %253 : vector<8x32xf32>
    %255 = arith.addf %252, %254 : vector<8x32xf32>
    %256 = math.tanh %255 : vector<8x32xf32>
    %cst_88 = arith.constant 1.000000e+00 : f32
    %257 = vector.broadcast %cst_88 : f32 to vector<8x32xf32>
    %258 = arith.subf %257, %251 : vector<8x32xf32>
    %259 = arith.mulf %258, %256 : vector<8x32xf32>
    %260 = arith.mulf %251, %181 : vector<8x32xf32>
    %261 = arith.addf %259, %260 : vector<8x32xf32>
    %cst_89 = arith.constant dense<0.000000e+00> : vector<8xf32>
    %262 = vector.multi_reduction <add>, %261, %cst_89 [1] : vector<8x32xf32> to vector<8xf32>
    %263 = vector.shape_cast %262 : vector<8xf32> to vector<8x1xf32>
    %cst_90 = arith.constant 3.200000e+01 : f32
    %264 = vector.broadcast %cst_90 : f32 to vector<8x1xf32>
    %265 = arith.divf %263, %264 : vector<8x1xf32>
    %266 = vector.broadcast %265 : vector<8x1xf32> to vector<8x32xf32>
    %267 = arith.subf %261, %266 : vector<8x32xf32>
    %268 = arith.mulf %267, %267 : vector<8x32xf32>
    %cst_91 = arith.constant dense<0.000000e+00> : vector<8xf32>
    %269 = vector.multi_reduction <add>, %268, %cst_91 [1] : vector<8x32xf32> to vector<8xf32>
    %270 = vector.shape_cast %269 : vector<8xf32> to vector<8x1xf32>
    %cst_92 = arith.constant 3.200000e+01 : f32
    %271 = vector.broadcast %cst_92 : f32 to vector<8x1xf32>
    %272 = arith.divf %270, %271 : vector<8x1xf32>
    %273 = vector.broadcast %265 : vector<8x1xf32> to vector<8x32xf32>
    %274 = arith.subf %261, %273 : vector<8x32xf32>
    %cst_93 = arith.constant 9.99999974E-6 : f32
    %275 = vector.broadcast %cst_93 : f32 to vector<8x1xf32>
    %276 = arith.addf %272, %275 : vector<8x1xf32>
    %277 = math.rsqrt %276 : vector<8x1xf32>
    %278 = vector.broadcast %277 : vector<8x1xf32> to vector<8x32xf32>
    %279 = arith.mulf %274, %278 : vector<8x32xf32>
    %280 = arith.mulf %279, %66 : vector<8x32xf32>
    %281 = arith.addf %280, %69 : vector<8x32xf32>
    %282 = arith.truncf %281 : vector<8x32xf32> to vector<8x32xbf16>
    %cst_94 = arith.constant dense<0.000000e+00> : vector<8x128xf32>
    %283 = tpu.matmul %282, %41, %cst_94 {dimension_numbers = #tpu.dot_dimension_numbers<[1], [0], [0], [1], [0, 0, 1, 1], [], []>} : vector<8x32xbf16>, vector<32x128xbf16>, vector<8x128xf32> -> vector<8x128xf32>
    %284 = arith.addf %283, %54 : vector<8x128xf32>
    %cst_95 = arith.constant 0.000000e+00 : f32
    %285 = vector.broadcast %cst_95 : f32 to vector<8x128xf32>
    %286 = arith.maximumf %284, %285 : vector<8x128xf32>
    %287 = arith.truncf %286 : vector<8x128xf32> to vector<8x128xbf16>
    %cst_96 = arith.constant dense<0.000000e+00> : vector<8x32xf32>
    %288 = tpu.matmul %287, %42, %cst_96 {dimension_numbers = #tpu.dot_dimension_numbers<[1], [0], [0], [1], [0, 0, 1, 1], [], []>} : vector<8x128xbf16>, vector<128x32xbf16>, vector<8x32xf32> -> vector<8x32xf32>
    %289 = arith.addf %261, %288 : vector<8x32xf32>
    %290 = arith.addf %289, %57 : vector<8x32xf32>
    %cst_97 = arith.constant dense<0.000000e+00> : vector<8xf32>
    %291 = vector.multi_reduction <add>, %290, %cst_97 [1] : vector<8x32xf32> to vector<8xf32>
    %292 = vector.shape_cast %291 : vector<8xf32> to vector<8x1xf32>
    %cst_98 = arith.constant 3.200000e+01 : f32
    %293 = vector.broadcast %cst_98 : f32 to vector<8x1xf32>
    %294 = arith.divf %292, %293 : vector<8x1xf32>
    %295 = vector.broadcast %294 : vector<8x1xf32> to vector<8x32xf32>
    %296 = arith.subf %290, %295 : vector<8x32xf32>
    %297 = arith.mulf %296, %296 : vector<8x32xf32>
    %cst_99 = arith.constant dense<0.000000e+00> : vector<8xf32>
    %298 = vector.multi_reduction <add>, %297, %cst_99 [1] : vector<8x32xf32> to vector<8xf32>
    %299 = vector.shape_cast %298 : vector<8xf32> to vector<8x1xf32>
    %cst_100 = arith.constant 3.200000e+01 : f32
    %300 = vector.broadcast %cst_100 : f32 to vector<8x1xf32>
    %301 = arith.divf %299, %300 : vector<8x1xf32>
    %302 = vector.broadcast %294 : vector<8x1xf32> to vector<8x32xf32>
    %303 = arith.subf %290, %302 : vector<8x32xf32>
    %cst_101 = arith.constant 9.99999974E-6 : f32
    %304 = vector.broadcast %cst_101 : f32 to vector<8x1xf32>
    %305 = arith.addf %301, %304 : vector<8x1xf32>
    %306 = math.rsqrt %305 : vector<8x1xf32>
    %307 = vector.broadcast %306 : vector<8x1xf32> to vector<8x32xf32>
    %308 = arith.mulf %303, %307 : vector<8x32xf32>
    %309 = arith.mulf %308, %60 : vector<8x32xf32>
    %310 = arith.addf %309, %63 : vector<8x32xf32>
    %311 = arith.truncf %310 : vector<8x32xf32> to vector<8x32xbf16>
    %cst_102 = arith.constant dense<0.000000e+00> : vector<8x32xf32>
    %312 = tpu.matmul %311, %38, %cst_102 {dimension_numbers = #tpu.dot_dimension_numbers<[1], [0], [0], [1], [0, 0, 1, 1], [], []>} : vector<8x32xbf16>, vector<32x32xbf16>, vector<8x32xf32> -> vector<8x32xf32>
    %313 = arith.addf %312, %45 : vector<8x32xf32>
    %314 = vector.shape_cast %313 : vector<8x32xf32> to vector<1x8x32xf32>
    %315 = arith.truncf %314 : vector<1x8x32xf32> to vector<1x8x32xbf16>
    "tpu.trace_start"() <{level = 10 : i32, message = "bid,bjd->bij"}> : () -> ()
    %cst_103 = arith.constant dense<0.000000e+00> : vector<1x8x16xf32>
    %316 = tpu.matmul %315, %34, %cst_103 {dimension_numbers = #tpu.dot_dimension_numbers<[2], [2], [1], [1], [0, 0, 0, 1, 1, 1], [0], [0]>} : vector<1x8x32xbf16>, vector<1x16x32xbf16>, vector<1x8x16xf32> -> vector<1x8x16xf32>
    "tpu.trace_stop"() : () -> ()
    %cst_104 = arith.constant 0.176776692 : f32
    %317 = vector.broadcast %cst_104 : f32 to vector<1x8x16xf32>
    %318 = arith.mulf %316, %317 : vector<1x8x16xf32>
    %cst_105 = arith.constant dense<0xFF800000> : vector<1x16xf32>
    %319 = vector.multi_reduction <maximumf>, %318, %cst_105 [1] : vector<1x8x16xf32> to vector<1x16xf32>
    %320 = vector.shape_cast %319 : vector<1x16xf32> to vector<1x1x16xf32>
    %321 = vector.broadcast %320 : vector<1x1x16xf32> to vector<1x8x16xf32>
    %322 = arith.subf %318, %321 : vector<1x8x16xf32>
    %323 = math.exp %322 : vector<1x8x16xf32>
    %cst_106 = arith.constant dense<0.000000e+00> : vector<1x16xf32>
    %324 = vector.multi_reduction <add>, %323, %cst_106 [1] : vector<1x8x16xf32> to vector<1x16xf32>
    %325 = vector.shape_cast %324 : vector<1x16xf32> to vector<1x1x16xf32>
    %326 = tpu.reciprocal %325 {approx = true} : vector<1x1x16xf32> -> vector<1x1x16xf32>
    %327 = vector.broadcast %326 : vector<1x1x16xf32> to vector<1x8x16xf32>
    %328 = arith.mulf %323, %327 : vector<1x8x16xf32>
    %cst_107 = arith.constant 9.99999993E-9 : f32
    %329 = vector.broadcast %cst_107 : f32 to vector<1x8x16xf32>
    %330 = arith.addf %328, %329 : vector<1x8x16xf32>
    %cst_108 = arith.constant dense<0.000000e+00> : vector<1x8xf32>
    %331 = vector.multi_reduction <add>, %330, %cst_108 [2] : vector<1x8x16xf32> to vector<1x8xf32>
    %332 = vector.shape_cast %331 : vector<1x8xf32> to vector<1x8x1xf32>
    %333 = tpu.reciprocal %332 {approx = true} : vector<1x8x1xf32> -> vector<1x8x1xf32>
    %334 = vector.broadcast %333 : vector<1x8x1xf32> to vector<1x8x16xf32>
    %335 = arith.mulf %330, %334 : vector<1x8x16xf32>
    %336 = arith.truncf %335 : vector<1x8x16xf32> to vector<1x8x16xbf16>
    "tpu.trace_start"() <{level = 10 : i32, message = "bij,bjd->bid"}> : () -> ()
    %cst_109 = arith.constant dense<0.000000e+00> : vector<1x8x32xf32>
    %337 = tpu.matmul %336, %37, %cst_109 {dimension_numbers = #tpu.dot_dimension_numbers<[2], [1], [1], [2], [0, 0, 0, 1, 1, 2], [0], [0]>} : vector<1x8x16xbf16>, vector<1x16x32xbf16>, vector<1x8x32xf32> -> vector<1x8x32xf32>
    "tpu.trace_stop"() : () -> ()
    %338 = vector.shape_cast %337 : vector<1x8x32xf32> to vector<8x32xf32>
    %339 = arith.truncf %338 : vector<8x32xf32> to vector<8x32xbf16>
    %cst_110 = arith.constant dense<0.000000e+00> : vector<8x96xf32>
    %340 = tpu.matmul %339, %39, %cst_110 {dimension_numbers = #tpu.dot_dimension_numbers<[1], [0], [0], [1], [0, 0, 1, 1], [], []>} : vector<8x32xbf16>, vector<32x96xbf16>, vector<8x96xf32> -> vector<8x96xf32>
    %341 = arith.addf %340, %48 : vector<8x96xf32>
    %342 = arith.truncf %290 : vector<8x32xf32> to vector<8x32xbf16>
    %cst_111 = arith.constant dense<0.000000e+00> : vector<8x96xf32>
    %343 = tpu.matmul %342, %40, %cst_111 {dimension_numbers = #tpu.dot_dimension_numbers<[1], [0], [0], [1], [0, 0, 1, 1], [], []>} : vector<8x32xbf16>, vector<32x96xbf16>, vector<8x96xf32> -> vector<8x96xf32>
    %344 = arith.addf %343, %51 : vector<8x96xf32>
    %345 = vector.extract_strided_slice %341 {offsets = [0, 0], sizes = [8, 32], strides = [1, 1]} : vector<8x96xf32> to vector<8x32xf32>
    %346 = vector.extract_strided_slice %344 {offsets = [0, 0], sizes = [8, 32], strides = [1, 1]} : vector<8x96xf32> to vector<8x32xf32>
    %347 = arith.addf %345, %346 : vector<8x32xf32>
    %348 = arith.negf %347 : vector<8x32xf32>
    %349 = math.exp %348 : vector<8x32xf32>
    %cst_112 = arith.constant 1.000000e+00 : f32
    %350 = vector.broadcast %cst_112 : f32 to vector<8x32xf32>
    %351 = arith.addf %350, %349 : vector<8x32xf32>
    %352 = arith.divf %350, %351 : vector<8x32xf32>
    %353 = vector.extract_strided_slice %341 {offsets = [0, 32], sizes = [8, 32], strides = [1, 1]} : vector<8x96xf32> to vector<8x32xf32>
    %354 = vector.extract_strided_slice %344 {offsets = [0, 32], sizes = [8, 32], strides = [1, 1]} : vector<8x96xf32> to vector<8x32xf32>
    %355 = arith.addf %353, %354 : vector<8x32xf32>
    %356 = arith.negf %355 : vector<8x32xf32>
    %357 = math.exp %356 : vector<8x32xf32>
    %cst_113 = arith.constant 1.000000e+00 : f32
    %358 = vector.broadcast %cst_113 : f32 to vector<8x32xf32>
    %359 = arith.addf %358, %357 : vector<8x32xf32>
    %360 = arith.divf %358, %359 : vector<8x32xf32>
    %361 = vector.extract_strided_slice %341 {offsets = [0, 64], sizes = [8, 32], strides = [1, 1]} : vector<8x96xf32> to vector<8x32xf32>
    %362 = vector.extract_strided_slice %344 {offsets = [0, 64], sizes = [8, 32], strides = [1, 1]} : vector<8x96xf32> to vector<8x32xf32>
    %363 = arith.mulf %352, %362 : vector<8x32xf32>
    %364 = arith.addf %361, %363 : vector<8x32xf32>
    %365 = math.tanh %364 : vector<8x32xf32>
    %cst_114 = arith.constant 1.000000e+00 : f32
    %366 = vector.broadcast %cst_114 : f32 to vector<8x32xf32>
    %367 = arith.subf %366, %360 : vector<8x32xf32>
    %368 = arith.mulf %367, %365 : vector<8x32xf32>
    %369 = arith.mulf %360, %290 : vector<8x32xf32>
    %370 = arith.addf %368, %369 : vector<8x32xf32>
    %cst_115 = arith.constant dense<0.000000e+00> : vector<8xf32>
    %371 = vector.multi_reduction <add>, %370, %cst_115 [1] : vector<8x32xf32> to vector<8xf32>
    %372 = vector.shape_cast %371 : vector<8xf32> to vector<8x1xf32>
    %cst_116 = arith.constant 3.200000e+01 : f32
    %373 = vector.broadcast %cst_116 : f32 to vector<8x1xf32>
    %374 = arith.divf %372, %373 : vector<8x1xf32>
    %375 = vector.broadcast %374 : vector<8x1xf32> to vector<8x32xf32>
    %376 = arith.subf %370, %375 : vector<8x32xf32>
    %377 = arith.mulf %376, %376 : vector<8x32xf32>
    %cst_117 = arith.constant dense<0.000000e+00> : vector<8xf32>
    %378 = vector.multi_reduction <add>, %377, %cst_117 [1] : vector<8x32xf32> to vector<8xf32>
    %379 = vector.shape_cast %378 : vector<8xf32> to vector<8x1xf32>
    %cst_118 = arith.constant 3.200000e+01 : f32
    %380 = vector.broadcast %cst_118 : f32 to vector<8x1xf32>
    %381 = arith.divf %379, %380 : vector<8x1xf32>
    %382 = vector.broadcast %374 : vector<8x1xf32> to vector<8x32xf32>
    %383 = arith.subf %370, %382 : vector<8x32xf32>
    %cst_119 = arith.constant 9.99999974E-6 : f32
    %384 = vector.broadcast %cst_119 : f32 to vector<8x1xf32>
    %385 = arith.addf %381, %384 : vector<8x1xf32>
    %386 = math.rsqrt %385 : vector<8x1xf32>
    %387 = vector.broadcast %386 : vector<8x1xf32> to vector<8x32xf32>
    %388 = arith.mulf %383, %387 : vector<8x32xf32>
    %389 = arith.mulf %388, %66 : vector<8x32xf32>
    %390 = arith.addf %389, %69 : vector<8x32xf32>
    %391 = arith.truncf %390 : vector<8x32xf32> to vector<8x32xbf16>
    %cst_120 = arith.constant dense<0.000000e+00> : vector<8x128xf32>
    %392 = tpu.matmul %391, %41, %cst_120 {dimension_numbers = #tpu.dot_dimension_numbers<[1], [0], [0], [1], [0, 0, 1, 1], [], []>} : vector<8x32xbf16>, vector<32x128xbf16>, vector<8x128xf32> -> vector<8x128xf32>
    %393 = arith.addf %392, %54 : vector<8x128xf32>
    %cst_121 = arith.constant 0.000000e+00 : f32
    %394 = vector.broadcast %cst_121 : f32 to vector<8x128xf32>
    %395 = arith.maximumf %393, %394 : vector<8x128xf32>
    %396 = arith.truncf %395 : vector<8x128xf32> to vector<8x128xbf16>
    %cst_122 = arith.constant dense<0.000000e+00> : vector<8x32xf32>
    %397 = tpu.matmul %396, %42, %cst_122 {dimension_numbers = #tpu.dot_dimension_numbers<[1], [0], [0], [1], [0, 0, 1, 1], [], []>} : vector<8x128xbf16>, vector<128x32xbf16>, vector<8x32xf32> -> vector<8x32xf32>
    %398 = arith.addf %370, %397 : vector<8x32xf32>
    %399 = arith.addf %398, %57 : vector<8x32xf32>
    %400 = vector.shape_cast %399 : vector<8x32xf32> to vector<1x8x32xf32>
    %c0_123 = arith.constant 0 : index
    %c0_124 = arith.constant 0 : index
    %c0_125 = arith.constant 0 : index
    %401 = vector.load %arg21[%c0_123, %c0_124, %c0_125] : memref<1x8x32xf32, #tpu.memory_space<vmem>>, vector<1x8x32xf32>
    tpu.vector_store %arg21[%c0_123, %c0_124, %c0_125], %400 {strides = array<i32>} : memref<1x8x32xf32, #tpu.memory_space<vmem>>, vector<1x8x32xf32>,
    return
  }
  func.func @transform_0(%arg0: i32) -> (i32, i32, i32) {
    %c0_i32 = arith.constant 0 : i32
    %c0_i32_0 = arith.constant 0 : i32
    %c0_i32_1 = arith.constant 0 : i32
    return %arg0, %c0_i32, %c0_i32_0 : i32, i32, i32
  }
  func.func @transform_1(%arg0: i32) -> (i32, i32) {
    %c0_i32 = arith.constant 0 : i32
    %c0_i32_0 = arith.constant 0 : i32
    %c0_i32_1 = arith.constant 0 : i32
    return %c0_i32, %c0_i32_0 : i32, i32
  }
  func.func @transform_2(%arg0: i32) -> (i32, i32) {
    %c0_i32 = arith.constant 0 : i32
    %c0_i32_0 = arith.constant 0 : i32
    %c0_i32_1 = arith.constant 0 : i32
    return %c0_i32, %c0_i32_0 : i32, i32
  }
  func.func @transform_3(%arg0: i32) -> (i32, i32) {
    %c0_i32 = arith.constant 0 : i32
    %c0_i32_0 = arith.constant 0 : i32
    %c0_i32_1 = arith.constant 0 : i32
    return %c0_i32, %c0_i32_0 : i32, i32
  }
  func.func @transform_4(%arg0: i32) -> (i32, i32) {
    %c0_i32 = arith.constant 0 : i32
    %c0_i32_0 = arith.constant 0 : i32
    %c0_i32_1 = arith.constant 0 : i32
    return %c0_i32, %c0_i32_0 : i32, i32
  }
  func.func @transform_5(%arg0: i32) -> (i32, i32) {
    %c0_i32 = arith.constant 0 : i32
    %c0_i32_0 = arith.constant 0 : i32
    %c0_i32_1 = arith.constant 0 : i32
    return %c0_i32, %c0_i32_0 : i32, i32
  }
  func.func @transform_6(%arg0: i32) -> (i32, i32) {
    %c0_i32 = arith.constant 0 : i32
    %c0_i32_0 = arith.constant 0 : i32
    %c0_i32_1 = arith.constant 0 : i32
    return %c0_i32, %c0_i32_0 : i32, i32
  }
  func.func @transform_7(%arg0: i32) -> (i32, i32) {
    %c0_i32 = arith.constant 0 : i32
    %c0_i32_0 = arith.constant 0 : i32
    %c0_i32_1 = arith.constant 0 : i32
    return %c0_i32, %c0_i32_0 : i32, i32
  }
  func.func @transform_8(%arg0: i32) -> (i32, i32) {
    %c0_i32 = arith.constant 0 : i32
    %c0_i32_0 = arith.constant 0 : i32
    %c0_i32_1 = arith.constant 0 : i32
    return %c0_i32, %c0_i32_0 : i32, i32
  }
  func.func @transform_9(%arg0: i32) -> (i32, i32) {
    %c0_i32 = arith.constant 0 : i32
    %c0_i32_0 = arith.constant 0 : i32
    %c0_i32_1 = arith.constant 0 : i32
    return %c0_i32, %c0_i32_0 : i32, i32
  }
  func.func @transform_10(%arg0: i32) -> (i32, i32) {
    %c0_i32 = arith.constant 0 : i32
    %c0_i32_0 = arith.constant 0 : i32
    %c0_i32_1 = arith.constant 0 : i32
    return %c0_i32, %c0_i32_0 : i32, i32
  }
  func.func @transform_11(%arg0: i32) -> (i32, i32) {
    %c0_i32 = arith.constant 0 : i32
    %c0_i32_0 = arith.constant 0 : i32
    %c0_i32_1 = arith.constant 0 : i32
    return %c0_i32, %c0_i32_0 : i32, i32
  }
  func.func @transform_12(%arg0: i32) -> (i32, i32) {
    %c0_i32 = arith.constant 0 : i32
    %c0_i32_0 = arith.constant 0 : i32
    %c0_i32_1 = arith.constant 0 : i32
    return %c0_i32, %c0_i32_0 : i32, i32
  }
  func.func @transform_13(%arg0: i32) -> (i32, i32) {
    %c0_i32 = arith.constant 0 : i32
    %c0_i32_0 = arith.constant 0 : i32
    %c0_i32_1 = arith.constant 0 : i32
    return %c0_i32, %c0_i32_0 : i32, i32
  }
  func.func @transform_14(%arg0: i32) -> (i32, i32) {
    %c0_i32 = arith.constant 0 : i32
    %c0_i32_0 = arith.constant 0 : i32
    %c0_i32_1 = arith.constant 0 : i32
    return %c0_i32, %c0_i32_0 : i32, i32
  }
  func.func @transform_15(%arg0: i32) -> (i32, i32) {
    %c0_i32 = arith.constant 0 : i32
    %c0_i32_0 = arith.constant 0 : i32
    %c0_i32_1 = arith.constant 0 : i32
    return %c0_i32, %c0_i32_0 : i32, i32
  }
  func.func @transform_16(%arg0: i32) -> (i32, i32) {
    %c0_i32 = arith.constant 0 : i32
    %c0_i32_0 = arith.constant 0 : i32
    %c0_i32_1 = arith.constant 0 : i32
    return %c0_i32, %c0_i32_0 : i32, i32
  }
  func.func @transform_17(%arg0: i32) -> (i32, i32) {
    %c0_i32 = arith.constant 0 : i32
    %c0_i32_0 = arith.constant 0 : i32
    %c0_i32_1 = arith.constant 0 : i32
    return %c0_i32, %c0_i32_0 : i32, i32
  }
  func.func @transform_18(%arg0: i32) -> (i32, i32) {
    %c0_i32 = arith.constant 0 : i32
    %c0_i32_0 = arith.constant 0 : i32
    %c0_i32_1 = arith.constant 0 : i32
    return %c0_i32, %c0_i32_0 : i32, i32
  }
  func.func @transform_19(%arg0: i32) -> (i32, i32) {
    %c0_i32 = arith.constant 0 : i32
    %c0_i32_0 = arith.constant 0 : i32
    %c0_i32_1 = arith.constant 0 : i32
    return %c0_i32, %c0_i32_0 : i32, i32
  }
  func.func @transform_20(%arg0: i32) -> (i32, i32, i32) {
    %c0_i32 = arith.constant 0 : i32
    %c0_i32_0 = arith.constant 0 : i32
    %c0_i32_1 = arith.constant 0 : i32
    return %arg0, %c0_i32, %c0_i32_0 : i32, i32, i32
  }
}

</mosaic_0001>

<llo_original>
// kernel: tpu_custom_call.1
$region0: #{tpu_custom_call.1}
  #allocation0 [shape = 'u32[]', space=smem, size = 0x4, offset = 0x4, fixed_abs, tag = 'smem constant byte address 0x4 - core index']
  #allocation1 [shape = 'u32[144,128]{1,0:T(1,128)}', space=vmem, size = 0x12000, scoped, tag = 'internal scratch']
  %s0 = inlined_call_operand.vmem [shape: f32[2,16,32], index: 0, kind: input, shape index: {}]
  %s1 = inlined_call_operand.hbm [shape: f32[8,32], index: 1, kind: input, shape index: {}]
  %s2 = inlined_call_operand.vmem [shape: f32[1,32], index: 2, kind: input, shape index: {}]
  %s3 = inlined_call_operand.hbm [shape: f32[1,32], index: 3, kind: input, shape index: {}]
  %s4 = inlined_call_operand.vmem [shape: bf16[32,64], index: 4, kind: input, shape index: {}]
  %s5 = inlined_call_operand.hbm [shape: f32[1,64], index: 5, kind: input, shape index: {}]
  %s6 = inlined_call_operand.vmem [shape: bf16[32,32], index: 6, kind: input, shape index: {}]
  %s7 = inlined_call_operand.hbm [shape: f32[1,32], index: 7, kind: input, shape index: {}]
  %s8 = inlined_call_operand.hbm [shape: f32[1,32], index: 8, kind: input, shape index: {}]
  %s9 = inlined_call_operand.hbm [shape: f32[1,32], index: 9, kind: input, shape index: {}]
  %s10 = inlined_call_operand.vmem [shape: bf16[32,96], index: 10, kind: input, shape index: {}]
  %s11 = inlined_call_operand.hbm [shape: f32[1,96], index: 11, kind: input, shape index: {}]
  %s12 = inlined_call_operand.vmem [shape: bf16[32,96], index: 12, kind: input, shape index: {}]
  %s13 = inlined_call_operand.hbm [shape: f32[1,96], index: 13, kind: input, shape index: {}]
  %s14 = inlined_call_operand.vmem [shape: f32[1,32], index: 14, kind: input, shape index: {}]
  %s15 = inlined_call_operand.vmem [shape: f32[1,32], index: 15, kind: input, shape index: {}]
  %s16 = inlined_call_operand.vmem [shape: bf16[32,128], index: 16, kind: input, shape index: {}]
  %s17 = inlined_call_operand.vmem [shape: f32[1,128], index: 17, kind: input, shape index: {}]
  %s18 = inlined_call_operand.vmem [shape: bf16[128,32], index: 18, kind: input, shape index: {}]
  %s19 = inlined_call_operand.vmem [shape: f32[1,32], index: 19, kind: input, shape index: {}]
  %s20 = inlined_call_operand.hbm [shape: f32[2,8,32], index: 20, kind: output, shape index: {}]
  %s21 = sld [smem:[#allocation0]]
  $region145: #{tpu_custom_call.1} parent=0
    _
  %s23 = ssub.s32 1, %s21
  %s24 = scalar_select 0, %s23, %s21
  $region1: #{tpu_custom_call.1} parent=0
    #allocation2 [shape = 'u8[4096]{0}', space=vmem, size = 0x1000, scoped, tag = 'input window, operand 1, single buffered']
    #allocation3 [shape = 's32[2]{0}', space=sflag, size = 0x8, scoped, tag = 'scoped memory for tpu_custom_call.1']
    #allocation4 [shape = 's32[2]{0}', space=sflag, size = 0x8, scoped, tag = 'scoped memory for tpu_custom_call.1']
    #allocation5 [shape = 'u8[512]{0}', space=vmem, size = 0x400, scoped, tag = 'input window, operand 3, single buffered']
    #allocation6 [shape = 's32[1]{0}', space=sflag, size = 0x4, scoped, tag = 'scoped memory for tpu_custom_call.1']
    #allocation7 [shape = 'u8[512]{0}', space=vmem, size = 0x400, scoped, tag = 'input window, operand 5, single buffered']
    #allocation8 [shape = 'u8[512]{0}', space=vmem, size = 0x400, scoped, tag = 'input window, operand 7, single buffered']
    #allocation9 [shape = 's32[1]{0}', space=sflag, size = 0x4, scoped, tag = 'scoped memory for tpu_custom_call.1']
    #allocation10 [shape = 'u8[512]{0}', space=vmem, size = 0x400, scoped, tag = 'input window, operand 8, single buffered']
    #allocation11 [shape = 'u8[512]{0}', space=vmem, size = 0x400, scoped, tag = 'input window, operand 9, single buffered']
    #allocation12 [shape = 's32[1]{0}', space=sflag, size = 0x4, scoped, tag = 'scoped memory for tpu_custom_call.1']
    #allocation13 [shape = 'u8[512]{0}', space=vmem, size = 0x400, scoped, tag = 'input window, operand 11, single buffered']
    #allocation14 [shape = 'u8[512]{0}', space=vmem, size = 0x400, scoped, tag = 'input window, operand 13, single buffered']
    #allocation15 [shape = 's32[1]{0}', space=sflag, size = 0x4, scoped, tag = 'scoped memory for tpu_custom_call.1']
    #allocation16 [shape = 'u8[8192]{0}', space=vmem, size = 0x2000, scoped, tag = 'output window, operand 0']
    %25 = vsyncpa [#allocation3], 0
    %26 = vsyncpa [#allocation6], 0
    %27 = vsyncpa [#allocation9], 0
    %28 = vsyncpa [#allocation12], 0
    %29 = vsyncpa [#allocation15], 0
    %30 = vsyncpa [#allocation4], 0
    %s31 = scalar_lea.sflag [#allocation4], 1
    %32 = vsyncpa %s31, 0
    loop: start=0, step=1, limit=4
    $region2: #{tpu_custom_call.1} parent=1 // loop_pre_header
      _
    $region3: #{tpu_custom_call.1} parent=1 // loop_header
      %s34 = sphi 0, %s38
      %p35 = scmp.ge.s32.totalorder %s34, 4
      %s44 = sphi 0, %s46
      %s47 = sphi 0, %s44
      %s48 = sphi 0, %s47
      %s64 = sphi 0, %s48
      %s68 = sphi 0, %s68
      %s70 = sphi 0, %s68
      %s71 = sphi 0, %s70
      %s85 = sphi 0, %s71
      %s89 = sphi 0, %s89
      %s91 = sphi 0, %s89
      %s92 = sphi 0, %s91
      %s106 = sphi 0, %s92
      %s110 = sphi 0, %s110
      %s112 = sphi 0, %s110
      %s113 = sphi 0, %s112
      %s127 = sphi 0, %s113
      %s131 = sphi 0, %s131
      %s133 = sphi 0, %s131
      %s134 = sphi 0, %s133
      %s148 = sphi 0, %s134
      %s152 = sphi 0, %s152
      %s154 = sphi 0, %s152
      %s155 = sphi 0, %s154
      %s169 = sphi 0, %s155
      %s173 = sphi 0, %s173
      %s175 = sphi 0, %s173
      %s176 = sphi 0, %s175
      %s190 = sphi 0, %s176
      %s194 = sphi 0, %s194
      %s196 = sphi 0, %s194
      %s197 = sphi 0, %s196
      %s211 = sphi 0, %s197
      %s215 = sphi 0, %s215
      %s217 = sphi 0, %s215
      %s218 = sphi 0, %s217
      %s232 = sphi 0, %s218
      %s236 = sphi 0, %s236
      %s238 = sphi 0, %s236
      %s239 = sphi 0, %s238
      %s253 = sphi 0, %s239
      %s257 = sphi 0, %s257
      %s259 = sphi 0, %s257
      %s260 = sphi 0, %s259
      %s274 = sphi 0, %s260
      %s278 = sphi 0, %s278
      %s280 = sphi 0, %s278
      %s281 = sphi 0, %s280
      %s295 = sphi 0, %s281
      %s299 = sphi 0, %s299
      %s301 = sphi 0, %s299
      %s302 = sphi 0, %s301
      %s316 = sphi 0, %s302
      %s320 = sphi 0, %s320
      %s322 = sphi 0, %s320
      %s323 = sphi 0, %s322
      %s337 = sphi 0, %s323
      %s341 = sphi 0, %s341
      %s343 = sphi 0, %s341
      %s344 = sphi 0, %s343
      %s358 = sphi 0, %s344
      %s362 = sphi 0, %s362
      %s364 = sphi 0, %s362
      %s365 = sphi 0, %s364
      %s379 = sphi 0, %s365
      %s383 = sphi 0, %s383
      %s385 = sphi 0, %s383
      %s386 = sphi 0, %s385
      %s400 = sphi 0, %s386
      %s404 = sphi 0, %s404
      %s406 = sphi 0, %s404
      %s407 = sphi 0, %s406
      %s421 = sphi 0, %s407
      %s425 = sphi 0, %s425
      %s427 = sphi 0, %s425
      %s428 = sphi 0, %s427
      %s442 = sphi 0, %s428
      %s446 = sphi 0, %s446
      %s448 = sphi 0, %s446
      %s449 = sphi 0, %s448
      %s463 = sphi 0, %s449
      %s469 = sphi 0, %s471
      %s472 = sphi 0, %s469
      %s473 = sphi 0, %s472
      %s489 = sphi 0, %s473
    $region4: #{tpu_custom_call.1} parent=1 // loop_header_branch
      %37 = sbr.rel (%p35) target = $region8
    $region5: #{tpu_custom_call.1} parent=1 // loop_body
      %s39 = ssub.s32 %s34, 1
      %s40 = ssub.s32 %s34, 2
      %s41 = sadd.s32 %s34, 1
      %s42 = ssub.s32 %s34, %s41
      %p43 = scmp.eq.s32.totalorder %s42, 0
      %s45 = sadd.s32 %s44, 1
      %s46 = scalar_select %p43, %s44, %s45
      %p49 = pneg %p43
      %p50 = scmp.eq.s32.totalorder %s34, 1
      %p51 = por %p49, %p50
      %p52 = scmp.ne.s32.totalorder %s44, %s47
      %p53 = scmp.eq.s32.totalorder %s34, 0
      %p54 = por %p52, %p53
      %p55 = scmp.ne.s32.totalorder %s44, %s47
      %p56 = scmp.eq.s32.totalorder %s39, 1
      %p57 = por %p55, %p56
      %p58 = scmp.ne.s32.totalorder %s47, %s48
      %p59 = scmp.eq.s32.totalorder %s39, 0
      %p60 = por %p58, %p59
      %p61 = scmp.ne.s32.totalorder %s47, %s48
      %p62 = scmp.eq.s32.totalorder %s40, 1
      %p63 = por %p61, %p62
      %p65 = scmp.ne.s32.totalorder %s48, %s64
      %p66 = scmp.eq.s32.totalorder %s40, 0
      %p67 = por %p65, %p66
      %s69 = sadd.s32 %s68, 1
      %p72 = scmp.eq.s32.totalorder %s34, 1
      %p73 = scmp.ne.s32.totalorder %s68, %s70
      %p74 = scmp.eq.s32.totalorder %s34, 0
      %p75 = por %p73, %p74
      %p76 = scmp.ne.s32.totalorder %s68, %s70
      %p77 = scmp.eq.s32.totalorder %s39, 1
      %p78 = por %p76, %p77
      %p79 = scmp.ne.s32.totalorder %s70, %s71
      %p80 = scmp.eq.s32.totalorder %s39, 0
      %p81 = por %p79, %p80
      %p82 = scmp.ne.s32.totalorder %s70, %s71
      %p83 = scmp.eq.s32.totalorder %s40, 1
      %p84 = por %p82, %p83
      %p86 = scmp.ne.s32.totalorder %s71, %s85
      %p87 = scmp.eq.s32.totalorder %s40, 0
      %p88 = por %p86, %p87
      %s90 = sadd.s32 %s89, 1
      %p93 = scmp.eq.s32.totalorder %s34, 1
      %p94 = scmp.ne.s32.totalorder %s89, %s91
      %p95 = scmp.eq.s32.totalorder %s34, 0
      %p96 = por %p94, %p95
      %p97 = scmp.ne.s32.totalorder %s89, %s91
      %p98 = scmp.eq.s32.totalorder %s39, 1
      %p99 = por %p97, %p98
      %p100 = scmp.ne.s32.totalorder %s91, %s92
      %p101 = scmp.eq.s32.totalorder %s39, 0
      %p102 = por %p100, %p101
      %p103 = scmp.ne.s32.totalorder %s91, %s92
      %p104 = scmp.eq.s32.totalorder %s40, 1
      %p105 = por %p103, %p104
      %p107 = scmp.ne.s32.totalorder %s92, %s106
      %p108 = scmp.eq.s32.totalorder %s40, 0
      %p109 = por %p107, %p108
      %s111 = sadd.s32 %s110, 1
      %p114 = scmp.eq.s32.totalorder %s34, 1
      %p115 = scmp.ne.s32.totalorder %s110, %s112
      %p116 = scmp.eq.s32.totalorder %s34, 0
      %p117 = por %p115, %p116
      %p118 = scmp.ne.s32.totalorder %s110, %s112
      %p119 = scmp.eq.s32.totalorder %s39, 1
      %p120 = por %p118, %p119
      %p121 = scmp.ne.s32.totalorder %s112, %s113
      %p122 = scmp.eq.s32.totalorder %s39, 0
      %p123 = por %p121, %p122
      %p124 = scmp.ne.s32.totalorder %s112, %s113
      %p125 = scmp.eq.s32.totalorder %s40, 1
      %p126 = por %p124, %p125
      %p128 = scmp.ne.s32.totalorder %s113, %s127
      %p129 = scmp.eq.s32.totalorder %s40, 0
      %p130 = por %p128, %p129
      %s132 = sadd.s32 %s131, 1
      %p135 = scmp.eq.s32.totalorder %s34, 1
      %p136 = scmp.ne.s32.totalorder %s131, %s133
      %p137 = scmp.eq.s32.totalorder %s34, 0
      %p138 = por %p136, %p137
      %p139 = scmp.ne.s32.totalorder %s131, %s133
      %p140 = scmp.eq.s32.totalorder %s39, 1
      %p141 = por %p139, %p140
      %p142 = scmp.ne.s32.totalorder %s133, %s134
      %p143 = scmp.eq.s32.totalorder %s39, 0
      %p144 = por %p142, %p143
      %p145 = scmp.ne.s32.totalorder %s133, %s134
      %p146 = scmp.eq.s32.totalorder %s40, 1
      %p147 = por %p145, %p146
      %p149 = scmp.ne.s32.totalorder %s134, %s148
      %p150 = scmp.eq.s32.totalorder %s40, 0
      %p151 = por %p149, %p150
      %s153 = sadd.s32 %s152, 1
      %p156 = scmp.eq.s32.totalorder %s34, 1
      %p157 = scmp.ne.s32.totalorder %s152, %s154
      %p158 = scmp.eq.s32.totalorder %s34, 0
      %p159 = por %p157, %p158
      %p160 = scmp.ne.s32.totalorder %s152, %s154
      %p161 = scmp.eq.s32.totalorder %s39, 1
      %p162 = por %p160, %p161
      %p163 = scmp.ne.s32.totalorder %s154, %s155
      %p164 = scmp.eq.s32.totalorder %s39, 0
      %p165 = por %p163, %p164
      %p166 = scmp.ne.s32.totalorder %s154, %s155
      %p167 = scmp.eq.s32.totalorder %s40, 1
      %p168 = por %p166, %p167
      %p170 = scmp.ne.s32.totalorder %s155, %s169
      %p171 = scmp.eq.s32.totalorder %s40, 0
      %p172 = por %p170, %p171
      %s174 = sadd.s32 %s173, 1
      %p177 = scmp.eq.s32.totalorder %s34, 1
      %p178 = scmp.ne.s32.totalorder %s173, %s175
      %p179 = scmp.eq.s32.totalorder %s34, 0
      %p180 = por %p178, %p179
      %p181 = scmp.ne.s32.totalorder %s173, %s175
      %p182 = scmp.eq.s32.totalorder %s39, 1
      %p183 = por %p181, %p182
      %p184 = scmp.ne.s32.totalorder %s175, %s176
      %p185 = scmp.eq.s32.totalorder %s39, 0
      %p186 = por %p184, %p185
      %p187 = scmp.ne.s32.totalorder %s175, %s176
      %p188 = scmp.eq.s32.totalorder %s40, 1
      %p189 = por %p187, %p188
      %p191 = scmp.ne.s32.totalorder %s176, %s190
      %p192 = scmp.eq.s32.totalorder %s40, 0
      %p193 = por %p191, %p192
      %s195 = sadd.s32 %s194, 1
      %p198 = scmp.eq.s32.totalorder %s34, 1
      %p199 = scmp.ne.s32.totalorder %s194, %s196
      %p200 = scmp.eq.s32.totalorder %s34, 0
      %p201 = por %p199, %p200
      %p202 = scmp.ne.s32.totalorder %s194, %s196
      %p203 = scmp.eq.s32.totalorder %s39, 1
      %p204 = por %p202, %p203
      %p205 = scmp.ne.s32.totalorder %s196, %s197
      %p206 = scmp.eq.s32.totalorder %s39, 0
      %p207 = por %p205, %p206
      %p208 = scmp.ne.s32.totalorder %s196, %s197
      %p209 = scmp.eq.s32.totalorder %s40, 1
      %p210 = por %p208, %p209
      %p212 = scmp.ne.s32.totalorder %s197, %s211
      %p213 = scmp.eq.s32.totalorder %s40, 0
      %p214 = por %p212, %p213
      %s216 = sadd.s32 %s215, 1
      %p219 = scmp.eq.s32.totalorder %s34, 1
      %p220 = scmp.ne.s32.totalorder %s215, %s217
      %p221 = scmp.eq.s32.totalorder %s34, 0
      %p222 = por %p220, %p221
      %p223 = scmp.ne.s32.totalorder %s215, %s217
      %p224 = scmp.eq.s32.totalorder %s39, 1
      %p225 = por %p223, %p224
      %p226 = scmp.ne.s32.totalorder %s217, %s218
      %p227 = scmp.eq.s32.totalorder %s39, 0
      %p228 = por %p226, %p227
      %p229 = scmp.ne.s32.totalorder %s217, %s218
      %p230 = scmp.eq.s32.totalorder %s40, 1
      %p231 = por %p229, %p230
      %p233 = scmp.ne.s32.totalorder %s218, %s232
      %p234 = scmp.eq.s32.totalorder %s40, 0
      %p235 = por %p233, %p234
      %s237 = sadd.s32 %s236, 1
      %p240 = scmp.eq.s32.totalorder %s34, 1
      %p241 = scmp.ne.s32.totalorder %s236, %s238
      %p242 = scmp.eq.s32.totalorder %s34, 0
      %p243 = por %p241, %p242
      %p244 = scmp.ne.s32.totalorder %s236, %s238
      %p245 = scmp.eq.s32.totalorder %s39, 1
      %p246 = por %p244, %p245
      %p247 = scmp.ne.s32.totalorder %s238, %s239
      %p248 = scmp.eq.s32.totalorder %s39, 0
      %p249 = por %p247, %p248
      %p250 = scmp.ne.s32.totalorder %s238, %s239
      %p251 = scmp.eq.s32.totalorder %s40, 1
      %p252 = por %p250, %p251
      %p254 = scmp.ne.s32.totalorder %s239, %s253
      %p255 = scmp.eq.s32.totalorder %s40, 0
      %p256 = por %p254, %p255
      %s258 = sadd.s32 %s257, 1
      %p261 = scmp.eq.s32.totalorder %s34, 1
      %p262 = scmp.ne.s32.totalorder %s257, %s259
      %p263 = scmp.eq.s32.totalorder %s34, 0
      %p264 = por %p262, %p263
      %p265 = scmp.ne.s32.totalorder %s257, %s259
      %p266 = scmp.eq.s32.totalorder %s39, 1
      %p267 = por %p265, %p266
      %p268 = scmp.ne.s32.totalorder %s259, %s260
      %p269 = scmp.eq.s32.totalorder %s39, 0
      %p270 = por %p268, %p269
      %p271 = scmp.ne.s32.totalorder %s259, %s260
      %p272 = scmp.eq.s32.totalorder %s40, 1
      %p273 = por %p271, %p272
      %p275 = scmp.ne.s32.totalorder %s260, %s274
      %p276 = scmp.eq.s32.totalorder %s40, 0
      %p277 = por %p275, %p276
      %s279 = sadd.s32 %s278, 1
      %p282 = scmp.eq.s32.totalorder %s34, 1
      %p283 = scmp.ne.s32.totalorder %s278, %s280
      %p284 = scmp.eq.s32.totalorder %s34, 0
      %p285 = por %p283, %p284
      %p286 = scmp.ne.s32.totalorder %s278, %s280
      %p287 = scmp.eq.s32.totalorder %s39, 1
      %p288 = por %p286, %p287
      %p289 = scmp.ne.s32.totalorder %s280, %s281
      %p290 = scmp.eq.s32.totalorder %s39, 0
      %p291 = por %p289, %p290
      %p292 = scmp.ne.s32.totalorder %s280, %s281
      %p293 = scmp.eq.s32.totalorder %s40, 1
      %p294 = por %p292, %p293
      %p296 = scmp.ne.s32.totalorder %s281, %s295
      %p297 = scmp.eq.s32.totalorder %s40, 0
      %p298 = por %p296, %p297
      %s300 = sadd.s32 %s299, 1
      %p303 = scmp.eq.s32.totalorder %s34, 1
      %p304 = scmp.ne.s32.totalorder %s299, %s301
      %p305 = scmp.eq.s32.totalorder %s34, 0
      %p306 = por %p304, %p305
      %p307 = scmp.ne.s32.totalorder %s299, %s301
      %p308 = scmp.eq.s32.totalorder %s39, 1
      %p309 = por %p307, %p308
      %p310 = scmp.ne.s32.totalorder %s301, %s302
      %p311 = scmp.eq.s32.totalorder %s39, 0
      %p312 = por %p310, %p311
      %p313 = scmp.ne.s32.totalorder %s301, %s302
      %p314 = scmp.eq.s32.totalorder %s40, 1
      %p315 = por %p313, %p314
      %p317 = scmp.ne.s32.totalorder %s302, %s316
      %p318 = scmp.eq.s32.totalorder %s40, 0
      %p319 = por %p317, %p318
      %s321 = sadd.s32 %s320, 1
      %p324 = scmp.eq.s32.totalorder %s34, 1
      %p325 = scmp.ne.s32.totalorder %s320, %s322
      %p326 = scmp.eq.s32.totalorder %s34, 0
      %p327 = por %p325, %p326
      %p328 = scmp.ne.s32.totalorder %s320, %s322
      %p329 = scmp.eq.s32.totalorder %s39, 1
      %p330 = por %p328, %p329
      %p331 = scmp.ne.s32.totalorder %s322, %s323
      %p332 = scmp.eq.s32.totalorder %s39, 0
      %p333 = por %p331, %p332
      %p334 = scmp.ne.s32.totalorder %s322, %s323
      %p335 = scmp.eq.s32.totalorder %s40, 1
      %p336 = por %p334, %p335
      %p338 = scmp.ne.s32.totalorder %s323, %s337
      %p339 = scmp.eq.s32.totalorder %s40, 0
      %p340 = por %p338, %p339
      %s342 = sadd.s32 %s341, 1
      %p345 = scmp.eq.s32.totalorder %s34, 1
      %p346 = scmp.ne.s32.totalorder %s341, %s343
      %p347 = scmp.eq.s32.totalorder %s34, 0
      %p348 = por %p346, %p347
      %p349 = scmp.ne.s32.totalorder %s341, %s343
      %p350 = scmp.eq.s32.totalorder %s39, 1
      %p351 = por %p349, %p350
      %p352 = scmp.ne.s32.totalorder %s343, %s344
      %p353 = scmp.eq.s32.totalorder %s39, 0
      %p354 = por %p352, %p353
      %p355 = scmp.ne.s32.totalorder %s343, %s344
      %p356 = scmp.eq.s32.totalorder %s40, 1
      %p357 = por %p355, %p356
      %p359 = scmp.ne.s32.totalorder %s344, %s358
      %p360 = scmp.eq.s32.totalorder %s40, 0
      %p361 = por %p359, %p360
      %s363 = sadd.s32 %s362, 1
      %p366 = scmp.eq.s32.totalorder %s34, 1
      %p367 = scmp.ne.s32.totalorder %s362, %s364
      %p368 = scmp.eq.s32.totalorder %s34, 0
      %p369 = por %p367, %p368
      %p370 = scmp.ne.s32.totalorder %s362, %s364
      %p371 = scmp.eq.s32.totalorder %s39, 1
      %p372 = por %p370, %p371
      %p373 = scmp.ne.s32.totalorder %s364, %s365
      %p374 = scmp.eq.s32.totalorder %s39, 0
      %p375 = por %p373, %p374
      %p376 = scmp.ne.s32.totalorder %s364, %s365
      %p377 = scmp.eq.s32.totalorder %s40, 1
      %p378 = por %p376, %p377
      %p380 = scmp.ne.s32.totalorder %s365, %s379
      %p381 = scmp.eq.s32.totalorder %s40, 0
      %p382 = por %p380, %p381
      %s384 = sadd.s32 %s383, 1
      %p387 = scmp.eq.s32.totalorder %s34, 1
      %p388 = scmp.ne.s32.totalorder %s383, %s385
      %p389 = scmp.eq.s32.totalorder %s34, 0
      %p390 = por %p388, %p389
      %p391 = scmp.ne.s32.totalorder %s383, %s385
      %p392 = scmp.eq.s32.totalorder %s39, 1
      %p393 = por %p391, %p392
      %p394 = scmp.ne.s32.totalorder %s385, %s386
      %p395 = scmp.eq.s32.totalorder %s39, 0
      %p396 = por %p394, %p395
      %p397 = scmp.ne.s32.totalorder %s385, %s386
      %p398 = scmp.eq.s32.totalorder %s40, 1
      %p399 = por %p397, %p398
      %p401 = scmp.ne.s32.totalorder %s386, %s400
      %p402 = scmp.eq.s32.totalorder %s40, 0
      %p403 = por %p401, %p402
      %s405 = sadd.s32 %s404, 1
      %p408 = scmp.eq.s32.totalorder %s34, 1
      %p409 = scmp.ne.s32.totalorder %s404, %s406
      %p410 = scmp.eq.s32.totalorder %s34, 0
      %p411 = por %p409, %p410
      %p412 = scmp.ne.s32.totalorder %s404, %s406
      %p413 = scmp.eq.s32.totalorder %s39, 1
      %p414 = por %p412, %p413
      %p415 = scmp.ne.s32.totalorder %s406, %s407
      %p416 = scmp.eq.s32.totalorder %s39, 0
      %p417 = por %p415, %p416
      %p418 = scmp.ne.s32.totalorder %s406, %s407
      %p419 = scmp.eq.s32.totalorder %s40, 1
      %p420 = por %p418, %p419
      %p422 = scmp.ne.s32.totalorder %s407, %s421
      %p423 = scmp.eq.s32.totalorder %s40, 0
      %p424 = por %p422, %p423
      %s426 = sadd.s32 %s425, 1
      %p429 = scmp.eq.s32.totalorder %s34, 1
      %p430 = scmp.ne.s32.totalorder %s425, %s427
      %p431 = scmp.eq.s32.totalorder %s34, 0
      %p432 = por %p430, %p431
      %p433 = scmp.ne.s32.totalorder %s425, %s427
      %p434 = scmp.eq.s32.totalorder %s39, 1
      %p435 = por %p433, %p434
      %p436 = scmp.ne.s32.totalorder %s427, %s428
      %p437 = scmp.eq.s32.totalorder %s39, 0
      %p438 = por %p436, %p437
      %p439 = scmp.ne.s32.totalorder %s427, %s428
      %p440 = scmp.eq.s32.totalorder %s40, 1
      %p441 = por %p439, %p440
      %p443 = scmp.ne.s32.totalorder %s428, %s442
      %p444 = scmp.eq.s32.totalorder %s40, 0
      %p445 = por %p443, %p444
      %s447 = sadd.s32 %s446, 1
      %p450 = scmp.eq.s32.totalorder %s34, 1
      %p451 = scmp.ne.s32.totalorder %s446, %s448
      %p452 = scmp.eq.s32.totalorder %s34, 0
      %p453 = por %p451, %p452
      %p454 = scmp.ne.s32.totalorder %s446, %s448
      %p455 = scmp.eq.s32.totalorder %s39, 1
      %p456 = por %p454, %p455
      %p457 = scmp.ne.s32.totalorder %s448, %s449
      %p458 = scmp.eq.s32.totalorder %s39, 0
      %p459 = por %p457, %p458
      %p460 = scmp.ne.s32.totalorder %s448, %s449
      %p461 = scmp.eq.s32.totalorder %s40, 1
      %p462 = por %p460, %p461
      %p464 = scmp.ne.s32.totalorder %s449, %s463
      %p465 = scmp.eq.s32.totalorder %s40, 0
      %p466 = por %p464, %p465
      %s467 = ssub.s32 %s34, %s41
      %p468 = scmp.eq.s32.totalorder %s467, 0
      %s470 = sadd.s32 %s469, 1
      %s471 = scalar_select %p468, %s469, %s470
      %p474 = pneg %p468
      %p475 = scmp.eq.s32.totalorder %s34, 1
      %p476 = por %p474, %p475
      %p477 = scmp.ne.s32.totalorder %s469, %s472
      %p478 = scmp.eq.s32.totalorder %s34, 0
      %p479 = por %p477, %p478
      %p480 = scmp.ne.s32.totalorder %s469, %s472
      %p481 = scmp.eq.s32.totalorder %s39, 1
      %p482 = por %p480, %p481
      %p483 = scmp.ne.s32.totalorder %s472, %s473
      %p484 = scmp.eq.s32.totalorder %s39, 0
      %p485 = por %p483, %p484
      %p486 = scmp.ne.s32.totalorder %s472, %s473
      %p487 = scmp.eq.s32.totalorder %s40, 1
      %p488 = por %p486, %p487
      %p490 = scmp.ne.s32.totalorder %s473, %s489
      %p491 = scmp.eq.s32.totalorder %s40, 0
      %p492 = por %p490, %p491
      %p493 = scmp.le.s32.totalorder 1, %s34
      %p494 = scmp.lt.s32.totalorder %s34, 3
      %p495 = pnand %p493, %p494
      %p496 = pneg %p495
      // Predicated region
      $region9: #{tpu_custom_call.1} parent=5 // pred_check
        _
      $region10: #{tpu_custom_call.1} parent=5 // pred_check_branch
        %498 = sbr.rel (%p495) target = $region12
      $region11: #{tpu_custom_call.1} parent=5 // pred_region
        %s499 = ssub.s32 %s34, 1
        // Predicated region
        $region13: #{tpu_custom_call.1} parent=11 // pred_check
          %p500 = pneg %p81
        $region14: #{tpu_custom_call.1} parent=11 // pred_check_branch
          %502 = sbr.rel (%p500) target = $region16
        $region15: #{tpu_custom_call.1} parent=11 // pred_region
          %s504 = ssub.s32 128, 128
          %505 = vsyncadd [#allocation3], %s504
          %s507 = sshll.u32 [#allocation2], 4
          %s508 = int_to_ptr.vmem [resolvable:$true] %s507
          %510 = dma.hbm_to_vmem [thread:$0]  %s1, 128, %s508, [#allocation3]
        $region16: #{tpu_custom_call.1} parent=11 // pred_fallthru
          _
        // Predicated region
        $region17: #{tpu_custom_call.1} parent=11 // pred_check
          %p511 = pneg %p102
        $region18: #{tpu_custom_call.1} parent=11 // pred_check_branch
          %513 = sbr.rel (%p511) target = $region20
        $region19: #{tpu_custom_call.1} parent=11 // pred_region
          _
        $region20: #{tpu_custom_call.1} parent=11 // pred_fallthru
          _
        // Predicated region
        $region21: #{tpu_custom_call.1} parent=11 // pred_check
          %p514 = pneg %p123
        $region22: #{tpu_custom_call.1} parent=11 // pred_check_branch
          %516 = sbr.rel (%p514) target = $region24
        $region23: #{tpu_custom_call.1} parent=11 // pred_region
          %s518 = ssub.s32 16, 16
          %519 = vsyncadd [#allocation6], %s518
          %s521 = sshll.u32 [#allocation5], 4
          %s522 = int_to_ptr.vmem [resolvable:$true] %s521
          %524 = dma.hbm_to_vmem [thread:$0]  %s3, 16, %s522, [#allocation6]
        $region24: #{tpu_custom_call.1} parent=11 // pred_fallthru
          _
        // Predicated region
        $region25: #{tpu_custom_call.1} parent=11 // pred_check
          %p525 = pneg %p144
        $region26: #{tpu_custom_call.1} parent=11 // pred_check_branch
          %527 = sbr.rel (%p525) target = $region28
        $region27: #{tpu_custom_call.1} parent=11 // pred_region
          _
        $region28: #{tpu_custom_call.1} parent=11 // pred_fallthru
          _
        // Predicated region
        $region29: #{tpu_custom_call.1} parent=11 // pred_check
          %p528 = pneg %p165
        $region30: #{tpu_custom_call.1} parent=11 // pred_check_branch
          %530 = sbr.rel (%p528) target = $region32
        $region31: #{tpu_custom_call.1} parent=11 // pred_region
          %s532 = ssub.s32 16, 16
          %533 = vsyncadd [#allocation6], %s532
          %s535 = sshll.u32 [#allocation7], 4
          %s536 = int_to_ptr.vmem [resolvable:$true] %s535
          %538 = dma.hbm_to_vmem [thread:$0]  %s5, 16, %s536, [#allocation6]
        $region32: #{tpu_custom_call.1} parent=11 // pred_fallthru
          _
        // Predicated region
        $region33: #{tpu_custom_call.1} parent=11 // pred_check
          %p539 = pneg %p186
        $region34: #{tpu_custom_call.1} parent=11 // pred_check_branch
          %541 = sbr.rel (%p539) target = $region36
        $region35: #{tpu_custom_call.1} parent=11 // pred_region
          _
        $region36: #{tpu_custom_call.1} parent=11 // pred_fallthru
          _
        // Predicated region
        $region37: #{tpu_custom_call.1} parent=11 // pred_check
          %p542 = pneg %p207
        $region38: #{tpu_custom_call.1} parent=11 // pred_check_branch
          %544 = sbr.rel (%p542) target = $region40
        $region39: #{tpu_custom_call.1} parent=11 // pred_region
          %s546 = ssub.s32 16, 16
          %547 = vsyncadd [#allocation9], %s546
          %s549 = sshll.u32 [#allocation8], 4
          %s550 = int_to_ptr.vmem [resolvable:$true] %s549
          %552 = dma.hbm_to_vmem [thread:$0]  %s7, 16, %s550, [#allocation9]
        $region40: #{tpu_custom_call.1} parent=11 // pred_fallthru
          _
        // Predicated region
        $region41: #{tpu_custom_call.1} parent=11 // pred_check
          %p553 = pneg %p228
        $region42: #{tpu_custom_call.1} parent=11 // pred_check_branch
          %555 = sbr.rel (%p553) target = $region44
        $region43: #{tpu_custom_call.1} parent=11 // pred_region
          %s557 = ssub.s32 16, 16
          %558 = vsyncadd [#allocation9], %s557
          %s560 = sshll.u32 [#allocation10], 4
          %s561 = int_to_ptr.vmem [resolvable:$true] %s560
          %563 = dma.hbm_to_vmem [thread:$0]  %s8, 16, %s561, [#allocation9]
        $region44: #{tpu_custom_call.1} parent=11 // pred_fallthru
          _
        // Predicated region
        $region45: #{tpu_custom_call.1} parent=11 // pred_check
          %p564 = pneg %p249
        $region46: #{tpu_custom_call.1} parent=11 // pred_check_branch
          %566 = sbr.rel (%p564) target = $region48
        $region47: #{tpu_custom_call.1} parent=11 // pred_region
          %s568 = ssub.s32 16, 16
          %569 = vsyncadd [#allocation12], %s568
          %s571 = sshll.u32 [#allocation11], 4
          %s572 = int_to_ptr.vmem [resolvable:$true] %s571
          %574 = dma.hbm_to_vmem [thread:$0]  %s9, 16, %s572, [#allocation12]
        $region48: #{tpu_custom_call.1} parent=11 // pred_fallthru
          _
        // Predicated region
        $region49: #{tpu_custom_call.1} parent=11 // pred_check
          %p575 = pneg %p270
        $region50: #{tpu_custom_call.1} parent=11 // pred_check_branch
          %577 = sbr.rel (%p575) target = $region52
        $region51: #{tpu_custom_call.1} parent=11 // pred_region
          _
        $region52: #{tpu_custom_call.1} parent=11 // pred_fallthru
          _
        // Predicated region
        $region53: #{tpu_custom_call.1} parent=11 // pred_check
          %p578 = pneg %p291
        $region54: #{tpu_custom_call.1} parent=11 // pred_check_branch
          %580 = sbr.rel (%p578) target = $region56
        $region55: #{tpu_custom_call.1} parent=11 // pred_region
          %s582 = ssub.s32 16, 16
          %583 = vsyncadd [#allocation12], %s582
          %s585 = sshll.u32 [#allocation13], 4
          %s586 = int_to_ptr.vmem [resolvable:$true] %s585
          %588 = dma.hbm_to_vmem [thread:$0]  %s11, 16, %s586, [#allocation12]
        $region56: #{tpu_custom_call.1} parent=11 // pred_fallthru
          _
        // Predicated region
        $region57: #{tpu_custom_call.1} parent=11 // pred_check
          %p589 = pneg %p312
        $region58: #{tpu_custom_call.1} parent=11 // pred_check_branch
          %591 = sbr.rel (%p589) target = $region60
        $region59: #{tpu_custom_call.1} parent=11 // pred_region
          _
        $region60: #{tpu_custom_call.1} parent=11 // pred_fallthru
          _
        // Predicated region
        $region61: #{tpu_custom_call.1} parent=11 // pred_check
          %p592 = pneg %p333
        $region62: #{tpu_custom_call.1} parent=11 // pred_check_branch
          %594 = sbr.rel (%p592) target = $region64
        $region63: #{tpu_custom_call.1} parent=11 // pred_region
          %s596 = ssub.s32 16, 16
          %597 = vsyncadd [#allocation15], %s596
          %s599 = sshll.u32 [#allocation14], 4
          %s600 = int_to_ptr.vmem [resolvable:$true] %s599
          %602 = dma.hbm_to_vmem [thread:$0]  %s13, 16, %s600, [#allocation15]
        $region64: #{tpu_custom_call.1} parent=11 // pred_fallthru
          _
        // Predicated region
        $region65: #{tpu_custom_call.1} parent=11 // pred_check
          %p603 = pneg %p354
        $region66: #{tpu_custom_call.1} parent=11 // pred_check_branch
          %605 = sbr.rel (%p603) target = $region68
        $region67: #{tpu_custom_call.1} parent=11 // pred_region
          _
        $region68: #{tpu_custom_call.1} parent=11 // pred_fallthru
          _
        // Predicated region
        $region69: #{tpu_custom_call.1} parent=11 // pred_check
          %p606 = pneg %p375
        $region70: #{tpu_custom_call.1} parent=11 // pred_check_branch
          %608 = sbr.rel (%p606) target = $region72
        $region71: #{tpu_custom_call.1} parent=11 // pred_region
          _
        $region72: #{tpu_custom_call.1} parent=11 // pred_fallthru
          _
        // Predicated region
        $region73: #{tpu_custom_call.1} parent=11 // pred_check
          %p609 = pneg %p396
        $region74: #{tpu_custom_call.1} parent=11 // pred_check_branch
          %611 = sbr.rel (%p609) target = $region76
        $region75: #{tpu_custom_call.1} parent=11 // pred_region
          _
        $region76: #{tpu_custom_call.1} parent=11 // pred_fallthru
          _
        // Predicated region
        $region77: #{tpu_custom_call.1} parent=11 // pred_check
          %p612 = pneg %p417
        $region78: #{tpu_custom_call.1} parent=11 // pred_check_branch
          %614 = sbr.rel (%p612) target = $region80
        $region79: #{tpu_custom_call.1} parent=11 // pred_region
          _
        $region80: #{tpu_custom_call.1} parent=11 // pred_fallthru
          _
        // Predicated region
        $region81: #{tpu_custom_call.1} parent=11 // pred_check
          %p615 = pneg %p438
        $region82: #{tpu_custom_call.1} parent=11 // pred_check_branch
          %617 = sbr.rel (%p615) target = $region84
        $region83: #{tpu_custom_call.1} parent=11 // pred_region
          _
        $region84: #{tpu_custom_call.1} parent=11 // pred_fallthru
          _
        // Predicated region
        $region85: #{tpu_custom_call.1} parent=11 // pred_check
          %p618 = pneg %p459
        $region86: #{tpu_custom_call.1} parent=11 // pred_check_branch
          %620 = sbr.rel (%p618) target = $region88
        $region87: #{tpu_custom_call.1} parent=11 // pred_region
          _
        $region88: #{tpu_custom_call.1} parent=11 // pred_fallthru
          _
      $region12: #{tpu_custom_call.1} parent=5 // pred_fallthru
        _
      %p621 = scmp.lt.s32.totalorder %s34, 2
      // Predicated region
      $region89: #{tpu_custom_call.1} parent=5 // pred_check
        %p622 = pneg %p621
      $region90: #{tpu_custom_call.1} parent=5 // pred_check_branch
        %624 = sbr.rel (%p622) target = $region92
      $region91: #{tpu_custom_call.1} parent=5 // pred_region
        // Predicated region
        $region93: #{tpu_custom_call.1} parent=91 // pred_check
          %p625 = pneg %p54
        $region94: #{tpu_custom_call.1} parent=91 // pred_check_branch
          %627 = sbr.rel (%p625) target = $region96
        $region95: #{tpu_custom_call.1} parent=91 // pred_region
          %p628 = scmp.lt.s32.totalorder %s34, 1
          %s629 = scalar_select %p628, %s34, 1
          %s630 = smul.addr %s629, 2
          %s631 = smul.addr %s630, 8
          %s632 = scalar_lea.vmem %s0, %s631
        $region96: #{tpu_custom_call.1} parent=91 // pred_fallthru
          _
      $region92: #{tpu_custom_call.1} parent=5 // pred_fallthru
        _
      %p633 = scmp.le.s32.totalorder 1, %s34
      %p634 = scmp.lt.s32.totalorder %s34, 3
      %p635 = pnand %p633, %p634
      %p636 = pneg %p635
      // Predicated region
      $region97: #{tpu_custom_call.1} parent=5 // pred_check
        _
      $region98: #{tpu_custom_call.1} parent=5 // pred_check_branch
        %638 = sbr.rel (%p635) target = $region100
      $region99: #{tpu_custom_call.1} parent=5 // pred_region
        %s639 = ssub.s32 %s34, 1
        // Predicated region
        $region101: #{tpu_custom_call.1} parent=99 // pred_check
          %p640 = pneg %p81
        $region102: #{tpu_custom_call.1} parent=99 // pred_check_branch
          %642 = sbr.rel (%p640) target = $region104
        $region103: #{tpu_custom_call.1} parent=99 // pred_region
          %643 = dma.done [#allocation3], 128
        $region104: #{tpu_custom_call.1} parent=99 // pred_fallthru
          _
        // Predicated region
        $region105: #{tpu_custom_call.1} parent=99 // pred_check
          %p644 = pneg %p123
        $region106: #{tpu_custom_call.1} parent=99 // pred_check_branch
          %646 = sbr.rel (%p644) target = $region108
        $region107: #{tpu_custom_call.1} parent=99 // pred_region
          %647 = dma.done [#allocation6], 16
        $region108: #{tpu_custom_call.1} parent=99 // pred_fallthru
          _
        // Predicated region
        $region109: #{tpu_custom_call.1} parent=99 // pred_check
          %p648 = pneg %p165
        $region110: #{tpu_custom_call.1} parent=99 // pred_check_branch
          %650 = sbr.rel (%p648) target = $region112
        $region111: #{tpu_custom_call.1} parent=99 // pred_region
          %651 = dma.done [#allocation6], 16
        $region112: #{tpu_custom_call.1} parent=99 // pred_fallthru
          _
        // Predicated region
        $region113: #{tpu_custom_call.1} parent=99 // pred_check
          %p652 = pneg %p207
        $region114: #{tpu_custom_call.1} parent=99 // pred_check_branch
          %654 = sbr.rel (%p652) target = $region116
        $region115: #{tpu_custom_call.1} parent=99 // pred_region
          %655 = dma.done [#allocation9], 16
        $region116: #{tpu_custom_call.1} parent=99 // pred_fallthru
          _
        // Predicated region
        $region117: #{tpu_custom_call.1} parent=99 // pred_check
          %p656 = pneg %p228
        $region118: #{tpu_custom_call.1} parent=99 // pred_check_branch
          %658 = sbr.rel (%p656) target = $region120
        $region119: #{tpu_custom_call.1} parent=99 // pred_region
          %659 = dma.done [#allocation9], 16
        $region120: #{tpu_custom_call.1} parent=99 // pred_fallthru
          _
        // Predicated region
        $region121: #{tpu_custom_call.1} parent=99 // pred_check
          %p660 = pneg %p249
        $region122: #{tpu_custom_call.1} parent=99 // pred_check_branch
          %662 = sbr.rel (%p660) target = $region124
        $region123: #{tpu_custom_call.1} parent=99 // pred_region
          %663 = dma.done [#allocation12], 16
        $region124: #{tpu_custom_call.1} parent=99 // pred_fallthru
          _
        // Predicated region
        $region125: #{tpu_custom_call.1} parent=99 // pred_check
          %p664 = pneg %p291
        $region126: #{tpu_custom_call.1} parent=99 // pred_check_branch
          %666 = sbr.rel (%p664) target = $region128
        $region127: #{tpu_custom_call.1} parent=99 // pred_region
          %667 = dma.done [#allocation12], 16
        $region128: #{tpu_custom_call.1} parent=99 // pred_fallthru
          _
        // Predicated region
        $region129: #{tpu_custom_call.1} parent=99 // pred_check
          %p668 = pneg %p333
        $region130: #{tpu_custom_call.1} parent=99 // pred_check_branch
          %670 = sbr.rel (%p668) target = $region132
        $region131: #{tpu_custom_call.1} parent=99 // pred_region
          %671 = dma.done [#allocation15], 16
        $region132: #{tpu_custom_call.1} parent=99 // pred_fallthru
          _
        %p672 = scmp.lt.s32.totalorder %s39, 1
        %s673 = scalar_select %p672, %s39, 1
        %s674 = smul.addr %s673, 2
        %s675 = smul.addr %s674, 8
        %s676 = scalar_lea.vmem %s0, %s675
        %p677 = pneg %p60
        %p678 = pneg %p57
        %p679 = pneg %p81
        %p680 = pneg %p78
        %p681 = pneg %p102
        %p682 = pneg %p99
        %p683 = pneg %p123
        %p684 = pneg %p120
        %p685 = pneg %p144
        %p686 = pneg %p141
        %p687 = pneg %p165
        %p688 = pneg %p162
        %p689 = pneg %p186
        %p690 = pneg %p183
        %p691 = pneg %p207
        %p692 = pneg %p204
        %p693 = pneg %p228
        %p694 = pneg %p225
        %p695 = pneg %p249
        %p696 = pneg %p246
        %p697 = pneg %p270
        %p698 = pneg %p267
        %p699 = pneg %p291
        %p700 = pneg %p288
        %p701 = pneg %p312
        %p702 = pneg %p309
        %p703 = pneg %p333
        %p704 = pneg %p330
        %p705 = pneg %p354
        %p706 = pneg %p351
        %p707 = pneg %p375
        %p708 = pneg %p372
        %p709 = pneg %p396
        %p710 = pneg %p393
        %p711 = pneg %p417
        %p712 = pneg %p414
        %p713 = pneg %p438
        %p714 = pneg %p435
        %p715 = pneg %p459
        %p716 = pneg %p456
        %p717 = pneg %p485
        %p718 = pneg %p482
        %s719 = sand.u32 %s472, 1
        %s720 = scalar_lea.sflag [#allocation4], %s719
        %s721 = sand.u32 %s472, 1
        %s722 = smul.addr %s721, 8
        %s723 = scalar_lea.vmem [#allocation16], %s722
        %p724 = scmp.lt.s32.totalorder %s39, 1
        %s725 = scalar_select %p724, %s39, 1
        %s726 = smul.addr %s725, 2
        %s727 = smul.addr %s726, 8
        %s728 = scalar_lea.vmem %s0, %s727
        %v730 = vld [vmem:[%s728] sm:$0xff]
        %v731 = vld [vmem:[%s728 + $0x8] sm:$0xff]
        %v732 = vld [vmem:[%s2] sm:$0x1]
        %v733 = vld [vmem:[#allocation5] sm:$0x1]
        %vm734 = vcmask 261120
        %v735 = vsel %vm734, %v730, 0.0
        %736 = vadd.xlane.f32.xlu0 %v735
        %v737 = vpop.xlane.xlu0 %736
        %v738 = vsel %vm734, %v731, 0.0
        %739 = vadd.xlane.f32.xlu0 %v738
        %v740 = vpop.xlane.xlu0 %739
        %v741 = vrcp.pop 32.0
        %v742 = vmul.f32 %v737, %v741
        %v743 = vmul.f32 %v740, %v741
        %v744 = vsub.f32 %v730, %v742
        %v745 = vsub.f32 %v731, %v743
        %v746 = vmul.f32 %v744, %v744
        %v747 = vmul.f32 %v745, %v745
        %v748 = vsel %vm734, %v746, 0.0
        %749 = vadd.xlane.f32.xlu0 %v748
        %v750 = vpop.xlane.xlu0 %749
        %v751 = vsel %vm734, %v747, 0.0
        %752 = vadd.xlane.f32.xlu0 %v751
        %v753 = vpop.xlane.xlu0 %752
        %v754 = vmul.f32 %v750, %v741
        %v755 = vmul.f32 %v753, %v741
        %v756 = vadd.f32 %v754, 1e-05
        %v757 = vadd.f32 %v755, 1e-05
        %v758 = vrsqrt.pop %v756
        %v759 = vrsqrt.pop %v757
        %v760 = vmul.f32 %v744, %v758
        %v761 = vmul.f32 %v745, %v759
        %v763 = vlaneseq
        %v764 = vshrl.u32 %v763, 7
        %v765 = vsub.s32 0, %v764
        %v766 = vrot.slane %v732, %v765
        %v768 = vmul.f32 %v760, %v766
        %v769 = vmul.f32 %v761, %v766
        %v771 = vlaneseq
        %v772 = vshrl.u32 %v771, 7
        %v773 = vsub.s32 0, %v772
        %v774 = vrot.slane %v733, %v773
        %v776 = vadd.f32 %v768, %v774
        %v777 = vadd.f32 %v769, %v774
        %v778 = vpack.c.bf16 %v777, %v776
        %v779 = vld [vmem:[%s4] sm:$0xf]
        %v780 = vld [vmem:[%s4 + $0x4] sm:$0xf]
        %v781 = vld [vmem:[%s4 + $0x8] sm:$0xf]
        %v782 = vld [vmem:[%s4 + $0xc] sm:$0xf]
        %v783 = vld [vmem:[#allocation7] sm:$0x1]
        %v785 = vlaneseq
        %v786 = vshrl.u32 %v785, 7
        %v787 = vsub.s32 0, %v786
        %v788 = vrot.slane %v783, %v787
        %v794 = vunpack.c.l.b16 %v779
        %v795 = vunpack.c.l.b16 %v780
        %v796 = vunpack.c.l.b16 %v781
        %v797 = vunpack.c.l.b16 %v782
        %v798 = vpack.c.b16 %v795, %v794
        %v799 = vpack.c.b16 %v797, %v796
        %v803 = vsel %vm734, %v778, 0
        %805 = vmatprep.subr.bf16.mxu0 0
        %806 = vmatpush1.bf16.msra.mxu0 %v798
        %807 = vmatprep.subr.bf16.mxu0 0
        %808 = vmatpush1.bf16.msra.mxu0 %v799
        %809 = vmatprep.subr.bf16.mxu0 0
        %810 = vmatpush1.bf16.msra.mxu0 0
        %811 = vmatprep.subr.bf16.mxu0 0
        %812 = vmatpush1.bf16.msra.mxu0 0
        %813 = vmatprep.subr.bf16.mxu0 0
        %814 = vmatpush1.bf16.msra.mxu0 0
        %815 = vmatprep.subr.bf16.mxu0 0
        %816 = vmatpush1.bf16.msra.mxu0 0
        %817 = vmatprep.subr.bf16.mxu0 0
        %818 = vmatpush1.bf16.msra.mxu0 0
        %819 = vmatprep.subr.bf16.mxu0 0
        %820 = vmatpush1.bf16.msra.mxu0 0
        %821 = vmatprep.subr.bf16.mxu0 0
        %822 = vmatpush1.bf16.msra.mxu0 0
        %823 = vmatprep.subr.bf16.mxu0 0
        %824 = vmatpush1.bf16.msra.mxu0 0
        %825 = vmatprep.subr.bf16.mxu0 0
        %826 = vmatpush1.bf16.msra.mxu0 0
        %827 = vmatprep.subr.bf16.mxu0 0
        %828 = vmatpush1.bf16.msra.mxu0 0
        %829 = vmatprep.subr.bf16.mxu0 0
        %830 = vmatpush1.bf16.msra.mxu0 0
        %831 = vmatprep.subr.bf16.mxu0 0
        %832 = vmatpush1.bf16.msra.mxu0 0
        %833 = vmatprep.subr.bf16.mxu0 0
        %834 = vmatpush1.bf16.msra.mxu0 0
        %835 = vmatprep.subr.bf16.mxu0 0
        %836 = vmatpush1.bf16.msra.mxu0 0
        %837 = vmatprep.mubr.bf16.mxu0 0
        %838 = vmatmul.mubr.bf16.gmra.mrb[0].mxu0 %v803
        %v839 = vpop.f32.mrb[0].mxu0
        %v840 = vadd.f32 %v788, %v839
        %v841 = vpop.f32.mrb[0].mxu0
        %v842 = vpop.f32.mrb[0].mxu0
        %v843 = vadd.f32 %v788, %v842
        %v844 = vpop.f32.mrb[0].mxu0
        %845 = vdwg.mxu0
        %v846 = vpack.c.bf16 %v843, %v840
        %v847 = vld [vmem:[%s6] sm:$0xf]
        %v848 = vld [vmem:[%s6 + $0x4] sm:$0xf]
        %v849 = vld [vmem:[%s6 + $0x8] sm:$0xf]
        %v850 = vld [vmem:[%s6 + $0xc] sm:$0xf]
        %v851 = vld [vmem:[%s10] sm:$0xf]
        %v852 = vld [vmem:[%s10 + $0x4] sm:$0xf]
        %v853 = vld [vmem:[%s10 + $0x8] sm:$0xf]
        %v854 = vld [vmem:[%s10 + $0xc] sm:$0xf]
        %v855 = vld [vmem:[%s12] sm:$0xf]
        %v856 = vld [vmem:[%s12 + $0x4] sm:$0xf]
        %v857 = vld [vmem:[%s12 + $0x8] sm:$0xf]
        %v858 = vld [vmem:[%s12 + $0xc] sm:$0xf]
        %v859 = vld [vmem:[%s16] sm:$0xf]
        %v860 = vld [vmem:[%s16 + $0x4] sm:$0xf]
        %v861 = vld [vmem:[%s16 + $0x8] sm:$0xf]
        %v862 = vld [vmem:[%s16 + $0xc] sm:$0xf]
        %v863 = vld [vmem:[%s18] sm:$0xf]
        %v864 = vld [vmem:[%s18 + $0x4] sm:$0xf]
        %v865 = vld [vmem:[%s18 + $0x8] sm:$0xf]
        %v866 = vld [vmem:[%s18 + $0xc] sm:$0xf]
        %v867 = vld [vmem:[%s18 + $0x10] sm:$0xf]
        %v868 = vld [vmem:[%s18 + $0x14] sm:$0xf]
        %v869 = vld [vmem:[%s18 + $0x18] sm:$0xf]
        %v870 = vld [vmem:[%s18 + $0x1c] sm:$0xf]
        %v871 = vld [vmem:[%s18 + $0x20] sm:$0xf]
        %v872 = vld [vmem:[%s18 + $0x24] sm:$0xf]
        %v873 = vld [vmem:[%s18 + $0x28] sm:$0xf]
        %v874 = vld [vmem:[%s18 + $0x2c] sm:$0xf]
        %v875 = vld [vmem:[%s18 + $0x30] sm:$0xf]
        %v876 = vld [vmem:[%s18 + $0x34] sm:$0xf]
        %v877 = vld [vmem:[%s18 + $0x38] sm:$0xf]
        %v878 = vld [vmem:[%s18 + $0x3c] sm:$0xf]
        %v879 = vld [vmem:[#allocation8] sm:$0x1]
        %v881 = vlaneseq
        %v882 = vshrl.u32 %v881, 7
        %v883 = vsub.s32 0, %v882
        %v884 = vrot.slane %v879, %v883
        %v886 = vld [vmem:[#allocation13] sm:$0x1]
        %v888 = vlaneseq
        %v889 = vshrl.u32 %v888, 7
        %v890 = vsub.s32 0, %v889
        %v891 = vrot.slane %v886, %v890
        %v893 = vld [vmem:[#allocation14] sm:$0x1]
        %v895 = vlaneseq
        %v896 = vshrl.u32 %v895, 7
        %v897 = vsub.s32 0, %v896
        %v898 = vrot.slane %v893, %v897
        %v900 = vld [vmem:[%s17] sm:$0x1]
        %v902 = vlaneseq
        %v903 = vshrl.u32 %v902, 7
        %v904 = vsub.s32 0, %v903
        %v905 = vrot.slane %v900, %v904
        %v907 = vld [vmem:[%s19] sm:$0x1]
        %v909 = vlaneseq
        %v910 = vshrl.u32 %v909, 7
        %v911 = vsub.s32 0, %v910
        %v912 = vrot.slane %v907, %v911
        %v913 = vld [vmem:[#allocation10] sm:$0x1]
        %v915 = vlaneseq
        %v916 = vshrl.u32 %v915, 7
        %v917 = vsub.s32 0, %v916
        %v918 = vrot.slane %v913, %v917
        %v920 = vld [vmem:[#allocation11] sm:$0x1]
        %v922 = vlaneseq
        %v923 = vshrl.u32 %v922, 7
        %v924 = vsub.s32 0, %v923
        %v925 = vrot.slane %v920, %v924
        %v927 = vld [vmem:[%s14] sm:$0x1]
        %v929 = vlaneseq
        %v930 = vshrl.u32 %v929, 7
        %v931 = vsub.s32 0, %v930
        %v932 = vrot.slane %v927, %v931
        %v933 = vld [vmem:[%s15] sm:$0x1]
        %v935 = vlaneseq
        %v936 = vshrl.u32 %v935, 7
        %v937 = vsub.s32 0, %v936
        %v938 = vrot.slane %v933, %v937
        %v939 = vld [vmem:[#allocation2] sm:$0xff]
        %v940 = vsel %vm734, %v939, 0.0
        %941 = vadd.xlane.f32.xlu0 %v940
        %v942 = vpop.xlane.xlu0 %941
        %v943 = vmul.f32 %v942, %v741
        %v944 = vsub.f32 %v939, %v943
        %v945 = vmul.f32 %v944, %v944
        %v946 = vsel %vm734, %v945, 0.0
        %947 = vadd.xlane.f32.xlu0 %v946
        %v948 = vpop.xlane.xlu0 %947
        %v949 = vmul.f32 %v948, %v741
        %v950 = vadd.f32 %v949, 1e-05
        %v951 = vrsqrt.pop %v950
        %v952 = vmul.f32 %v944, %v951
        %v953 = vmul.f32 %v952, %v918
        %v954 = vadd.f32 %v953, %v925
        %v955 = vpack.c.bf16 %v954, %v954
        %v960 = vunpack.c.l.b16 %v847
        %v961 = vunpack.c.l.b16 %v848
        %v962 = vunpack.c.l.b16 %v849
        %v963 = vunpack.c.l.b16 %v850
        %v964 = vpack.c.b16 %v961, %v960
        %v965 = vpack.c.b16 %v963, %v962
        %v969 = vsel %vm734, %v955, 0
        %971 = vmatprep.subr.bf16.mxu0 0
        %972 = vmatpush1.bf16.msra.mxu0 %v964
        %973 = vmatprep.subr.bf16.mxu0 0
        %974 = vmatpush1.bf16.msra.mxu0 %v965
        %975 = vmatprep.subr.bf16.mxu0 0
        %976 = vmatpush1.bf16.msra.mxu0 0
        %977 = vmatprep.subr.bf16.mxu0 0
        %978 = vmatpush1.bf16.msra.mxu0 0
        %979 = vmatprep.subr.bf16.mxu0 0
        %980 = vmatpush1.bf16.msra.mxu0 0
        %981 = vmatprep.subr.bf16.mxu0 0
        %982 = vmatpush1.bf16.msra.mxu0 0
        %983 = vmatprep.subr.bf16.mxu0 0
        %984 = vmatpush1.bf16.msra.mxu0 0
        %985 = vmatprep.subr.bf16.mxu0 0
        %986 = vmatpush1.bf16.msra.mxu0 0
        %987 = vmatprep.subr.bf16.mxu0 0
        %988 = vmatpush1.bf16.msra.mxu0 0
        %989 = vmatprep.subr.bf16.mxu0 0
        %990 = vmatpush1.bf16.msra.mxu0 0
        %991 = vmatprep.subr.bf16.mxu0 0
        %992 = vmatpush1.bf16.msra.mxu0 0
        %993 = vmatprep.subr.bf16.mxu0 0
        %994 = vmatpush1.bf16.msra.mxu0 0
        %995 = vmatprep.subr.bf16.mxu0 0
        %996 = vmatpush1.bf16.msra.mxu0 0
        %997 = vmatprep.subr.bf16.mxu0 0
        %998 = vmatpush1.bf16.msra.mxu0 0
        %999 = vmatprep.subr.bf16.mxu0 0
        %1000 = vmatpush1.bf16.msra.mxu0 0
        %1001 = vmatprep.subr.bf16.mxu0 0
        %1002 = vmatpush1.bf16.msra.mxu0 0
        %1003 = vmatprep.mubr.bf16.mxu0 0
        %1004 = vmatmul.mubr.bf16.gmra.mrb[0].mxu0 %v969
        %v1005 = vpop.f32.mrb[0].mxu0
        %v1006 = vadd.f32 %v884, %v1005
        %v1007 = vpop.f32.mrb[0].mxu0
        %v1008 = vpop.f32.mrb[0].mxu0
        %v1009 = vpop.f32.mrb[0].mxu0
        %1010 = vdwg.mxu0
        %v1011 = vpack.c.bf16 %v1006, %v1006
        %v1013 = vsel %vm734, %v1011, 0
        %v1016 = vsel %vm734, %v846, 0
        %1018 = vmatprep.subr.bf16.mxu0 0
        %1019 = vmatpush1.bf16.xpose.msra.mxu0 %v1016
        %1020 = vmatprep.subr.bf16.mxu0 0
        %1021 = vmatpush1.bf16.xpose.msra.mxu0 0
        %1022 = vmatprep.subr.bf16.mxu0 0
        %1023 = vmatpush1.bf16.xpose.msra.mxu0 0
        %1024 = vmatprep.subr.bf16.mxu0 0
        %1025 = vmatpush1.bf16.xpose.msra.mxu0 0
        %1026 = vmatprep.subr.bf16.mxu0 0
        %1027 = vmatpush1.bf16.xpose.msra.mxu0 0
        %1028 = vmatprep.subr.bf16.mxu0 0
        %1029 = vmatpush1.bf16.xpose.msra.mxu0 0
        %1030 = vmatprep.subr.bf16.mxu0 0
        %1031 = vmatpush1.bf16.xpose.msra.mxu0 0
        %1032 = vmatprep.subr.bf16.mxu0 0
        %1033 = vmatpush1.bf16.xpose.msra.mxu0 0
        %1034 = vmatprep.subr.bf16.mxu0 0
        %1035 = vmatpush1.bf16.xpose.msra.mxu0 0
        %1036 = vmatprep.subr.bf16.mxu0 0
        %1037 = vmatpush1.bf16.xpose.msra.mxu0 0
        %1038 = vmatprep.subr.bf16.mxu0 0
        %1039 = vmatpush1.bf16.xpose.msra.mxu0 0
        %1040 = vmatprep.subr.bf16.mxu0 0
        %1041 = vmatpush1.bf16.xpose.msra.mxu0 0
        %1042 = vmatprep.subr.bf16.mxu0 0
        %1043 = vmatpush1.bf16.xpose.msra.mxu0 0
        %1044 = vmatprep.subr.bf16.mxu0 0
        %1045 = vmatpush1.bf16.xpose.msra.mxu0 0
        %1046 = vmatprep.subr.bf16.mxu0 0
        %1047 = vmatpush1.bf16.xpose.msra.mxu0 0
        %1048 = vmatprep.subr.bf16.mxu0 0
        %1049 = vmatpush1.bf16.xpose.msra.mxu0 0
        %1050 = vmatprep.mubr.bf16.mxu0 0
        %1051 = vmatmul.mubr.bf16.gmra.mrb[0].mxu0 %v1013
        %v1052 = vpop.f32.mrb[0].mxu0
        %v1053 = vadd.f32 0.0, %v1052
        %v1054 = vpop.f32.mrb[0].mxu0
        %v1055 = vpop.f32.mrb[0].mxu0
        %v1056 = vpop.f32.mrb[0].mxu0
        %1057 = vdwg.mxu0
        %v1058 = vmul.f32 %v1053, 0.17677669
        %vm1059 = vcmask 130048
        %v1060 = vsel %vm1059, %v1058, -inf
        %v1061 = vrot.slane %v1060, 4
        %v1062 = vmax.f32 %v1060, %v1061
        %v1063 = vrot.slane %v1062, 2
        %v1064 = vmax.f32 %v1062, %v1063
        %v1065 = vrot.slane %v1064, 1
        %v1066 = vmax.f32 %v1064, %v1065
        %v1067 = vsub.f32 %v1058, %v1066
        %v1068 = vmul.f32 %v1067, 1.442695
        %v1069 = vpow.pop %v1068
        %v1070 = vsel %vm1059, %v1069, 0.0
        %v1071 = vrot.slane %v1070, 4
        %v1072 = vadd.f32 %v1070, %v1071
        %v1073 = vrot.slane %v1072, 2
        %v1074 = vadd.f32 %v1072, %v1073
        %v1075 = vrot.slane %v1074, 1
        %v1076 = vadd.f32 %v1074, %v1075
        %v1077 = vrcp.pop %v1076
        %v1078 = vmul.f32 %v1069, %v1077
        %v1079 = vadd.f32 %v1078, 1e-08
        %v1080 = vsel %vm1059, %v1079, 0.0
        %1081 = vadd.xlane.f32.xlu0 %v1080
        %v1082 = vpop.xlane.xlu0 %1081
        %v1083 = vrcp.pop %v1082
        %v1084 = vmul.f32 %v1079, %v1083
        %v1085 = vpack.c.bf16 %v1084, %v1084
        %1087 = vrot.lane.b32.xlu0 %v846, 96
        %v1088 = vpop.permute.xlu0 %1087
        %v1091 = vsel %vm1059, %v1085, 0
        %1093 = vmatprep.subr.bf16.mxu0 0
        %1094 = vmatpush1.bf16.msra.mxu0 %v1088
        %1095 = vmatprep.subr.bf16.mxu0 0
        %1096 = vmatpush1.bf16.msra.mxu0 0
        %1097 = vmatprep.subr.bf16.mxu0 0
        %1098 = vmatpush1.bf16.msra.mxu0 0
        %1099 = vmatprep.subr.bf16.mxu0 0
        %1100 = vmatpush1.bf16.msra.mxu0 0
        %1101 = vmatprep.subr.bf16.mxu0 0
        %1102 = vmatpush1.bf16.msra.mxu0 0
        %1103 = vmatprep.subr.bf16.mxu0 0
        %1104 = vmatpush1.bf16.msra.mxu0 0
        %1105 = vmatprep.subr.bf16.mxu0 0
        %1106 = vmatpush1.bf16.msra.mxu0 0
        %1107 = vmatprep.subr.bf16.mxu0 0
        %1108 = vmatpush1.bf16.msra.mxu0 0
        %1109 = vmatprep.subr.bf16.mxu0 0
        %1110 = vmatpush1.bf16.msra.mxu0 0
        %1111 = vmatprep.subr.bf16.mxu0 0
        %1112 = vmatpush1.bf16.msra.mxu0 0
        %1113 = vmatprep.subr.bf16.mxu0 0
        %1114 = vmatpush1.bf16.msra.mxu0 0
        %1115 = vmatprep.subr.bf16.mxu0 0
        %1116 = vmatpush1.bf16.msra.mxu0 0
        %1117 = vmatprep.subr.bf16.mxu0 0
        %1118 = vmatpush1.bf16.msra.mxu0 0
        %1119 = vmatprep.subr.bf16.mxu0 0
        %1120 = vmatpush1.bf16.msra.mxu0 0
        %1121 = vmatprep.subr.bf16.mxu0 0
        %1122 = vmatpush1.bf16.msra.mxu0 0
        %1123 = vmatprep.subr.bf16.mxu0 0
        %1124 = vmatpush1.bf16.msra.mxu0 0
        %1125 = vmatprep.mubr.bf16.mxu0 0
        %1126 = vmatmul.mubr.bf16.gmra.mrb[0].mxu0 %v1091
        %v1127 = vpop.f32.mrb[0].mxu0
        %v1128 = vadd.f32 0.0, %v1127
        %v1129 = vpop.f32.mrb[0].mxu0
        %v1130 = vpop.f32.mrb[0].mxu0
        %v1131 = vpop.f32.mrb[0].mxu0
        %1132 = vdwg.mxu0
        %v1133 = vpack.c.bf16 %v1128, %v1128
        %v1138 = vunpack.c.l.b16 %v851
        %v1139 = vunpack.c.l.b16 %v852
        %v1140 = vunpack.c.l.b16 %v853
        %v1141 = vunpack.c.l.b16 %v854
        %v1142 = vpack.c.b16 %v1139, %v1138
        %v1143 = vpack.c.b16 %v1141, %v1140
        %v1147 = vsel %vm734, %v1133, 0
        %1149 = vmatprep.subr.bf16.mxu0 0
        %1150 = vmatpush1.bf16.msra.mxu0 %v1142
        %1151 = vmatprep.subr.bf16.mxu0 0
        %1152 = vmatpush1.bf16.msra.mxu0 %v1143
        %1153 = vmatprep.subr.bf16.mxu0 0
        %1154 = vmatpush1.bf16.msra.mxu0 0
        %1155 = vmatprep.subr.bf16.mxu0 0
        %1156 = vmatpush1.bf16.msra.mxu0 0
        %1157 = vmatprep.subr.bf16.mxu0 0
        %1158 = vmatpush1.bf16.msra.mxu0 0
        %1159 = vmatprep.subr.bf16.mxu0 0
        %1160 = vmatpush1.bf16.msra.mxu0 0
        %1161 = vmatprep.subr.bf16.mxu0 0
        %1162 = vmatpush1.bf16.msra.mxu0 0
        %1163 = vmatprep.subr.bf16.mxu0 0
        %1164 = vmatpush1.bf16.msra.mxu0 0
        %1165 = vmatprep.subr.bf16.mxu0 0
        %1166 = vmatpush1.bf16.msra.mxu0 0
        %1167 = vmatprep.subr.bf16.mxu0 0
        %1168 = vmatpush1.bf16.msra.mxu0 0
        %1169 = vmatprep.subr.bf16.mxu0 0
        %1170 = vmatpush1.bf16.msra.mxu0 0
        %1171 = vmatprep.subr.bf16.mxu0 0
        %1172 = vmatpush1.bf16.msra.mxu0 0
        %1173 = vmatprep.subr.bf16.mxu0 0
        %1174 = vmatpush1.bf16.msra.mxu0 0
        %1175 = vmatprep.subr.bf16.mxu0 0
        %1176 = vmatpush1.bf16.msra.mxu0 0
        %1177 = vmatprep.subr.bf16.mxu0 0
        %1178 = vmatpush1.bf16.msra.mxu0 0
        %1179 = vmatprep.subr.bf16.mxu0 0
        %1180 = vmatpush1.bf16.msra.mxu0 0
        %1181 = vmatprep.mubr.bf16.mxu0 0
        %1182 = vmatmul.mubr.bf16.gmra.mrb[0].mxu0 %v1147
        %v1183 = vpop.f32.mrb[0].mxu0
        %v1184 = vadd.f32 %v891, %v1183
        %v1185 = vpop.f32.mrb[0].mxu0
        %v1186 = vpop.f32.mrb[0].mxu0
        %v1187 = vpop.f32.mrb[0].mxu0
        %1188 = vdwg.mxu0
        %v1189 = vpack.c.bf16 %v939, %v939
        %v1194 = vunpack.c.l.b16 %v855
        %v1195 = vunpack.c.l.b16 %v856
        %v1196 = vunpack.c.l.b16 %v857
        %v1197 = vunpack.c.l.b16 %v858
        %v1198 = vpack.c.b16 %v1195, %v1194
        %v1199 = vpack.c.b16 %v1197, %v1196
        %v1203 = vsel %vm734, %v1189, 0
        %1205 = vmatprep.subr.bf16.mxu0 0
        %1206 = vmatpush1.bf16.msra.mxu0 %v1198
        %1207 = vmatprep.subr.bf16.mxu0 0
        %1208 = vmatpush1.bf16.msra.mxu0 %v1199
        %1209 = vmatprep.subr.bf16.mxu0 0
        %1210 = vmatpush1.bf16.msra.mxu0 0
        %1211 = vmatprep.subr.bf16.mxu0 0
        %1212 = vmatpush1.bf16.msra.mxu0 0
        %1213 = vmatprep.subr.bf16.mxu0 0
        %1214 = vmatpush1.bf16.msra.mxu0 0
        %1215 = vmatprep.subr.bf16.mxu0 0
        %1216 = vmatpush1.bf16.msra.mxu0 0
        %1217 = vmatprep.subr.bf16.mxu0 0
        %1218 = vmatpush1.bf16.msra.mxu0 0
        %1219 = vmatprep.subr.bf16.mxu0 0
        %1220 = vmatpush1.bf16.msra.mxu0 0
        %1221 = vmatprep.subr.bf16.mxu0 0
        %1222 = vmatpush1.bf16.msra.mxu0 0
        %1223 = vmatprep.subr.bf16.mxu0 0
        %1224 = vmatpush1.bf16.msra.mxu0 0
        %1225 = vmatprep.subr.bf16.mxu0 0
        %1226 = vmatpush1.bf16.msra.mxu0 0
        %1227 = vmatprep.subr.bf16.mxu0 0
        %1228 = vmatpush1.bf16.msra.mxu0 0
        %1229 = vmatprep.subr.bf16.mxu0 0
        %1230 = vmatpush1.bf16.msra.mxu0 0
        %1231 = vmatprep.subr.bf16.mxu0 0
        %1232 = vmatpush1.bf16.msra.mxu0 0
        %1233 = vmatprep.subr.bf16.mxu0 0
        %1234 = vmatpush1.bf16.msra.mxu0 0
        %1235 = vmatprep.subr.bf16.mxu0 0
        %1236 = vmatpush1.bf16.msra.mxu0 0
        %1237 = vmatprep.mubr.bf16.mxu0 0
        %1238 = vmatmul.mubr.bf16.gmra.mrb[0].mxu0 %v1203
        %v1239 = vpop.f32.mrb[0].mxu0
        %v1240 = vadd.f32 %v898, %v1239
        %v1241 = vpop.f32.mrb[0].mxu0
        %v1242 = vpop.f32.mrb[0].mxu0
        %v1243 = vpop.f32.mrb[0].mxu0
        %1244 = vdwg.mxu0
        %v1245 = vadd.f32 %v1184, %v1240
        %v1246 = vxor.u32 %v1245, 2147483648
        %v1247 = vmul.f32 %v1246, 1.442695
        %v1248 = vpow.pop %v1247
        %v1249 = vadd.f32 %v1248, 1.0
        %v1250 = vrcp.pop %v1249
        %v1251 = vmul.f32 1.0, %v1250
        %1253 = vrot.lane.b32.xlu0 %v1240, 64
        %v1254 = vpop.permute.xlu0 %1253
        %v1256 = vmul.f32 %v1251, %v1254
        %1258 = vrot.lane.b32.xlu0 %v1256, 64
        %v1259 = vpop.permute.xlu0 %1258
        %v1261 = vadd.f32 %v1184, %v1259
        %v1262 = vtanh.pop %v1261
        %v1263 = vsub.f32 1.0, %v1251
        %1265 = vrot.lane.b32.xlu0 %v1262, 96
        %v1266 = vpop.permute.xlu0 %1265
        %v1268 = vmul.f32 %v1263, %v1266
        %1270 = vrot.lane.b32.xlu0 %v939, 32
        %v1271 = vpop.permute.xlu0 %1270
        %v1273 = vmul.f32 %v1251, %v1271
        %v1274 = vadd.f32 %v1268, %v1273
        %1276 = vrot.lane.b32.xlu0 %v1274, 96
        %v1277 = vpop.permute.xlu0 %1276
        %v1279 = vsel %vm734, %v1277, 0.0
        %1280 = vadd.xlane.f32.xlu0 %v1279
        %v1281 = vpop.xlane.xlu0 %1280
        %v1282 = vmul.f32 %v1281, %v741
        %v1283 = vsub.f32 %v1274, %v1282
        %v1284 = vmul.f32 %v1283, %v1283
        %1286 = vrot.lane.b32.xlu0 %v1284, 96
        %v1287 = vpop.permute.xlu0 %1286
        %v1289 = vsel %vm734, %v1287, 0.0
        %1290 = vadd.xlane.f32.xlu0 %v1289
        %v1291 = vpop.xlane.xlu0 %1290
        %v1292 = vmul.f32 %v1291, %v741
        %v1293 = vadd.f32 %v1292, 1e-05
        %v1294 = vrsqrt.pop %v1293
        %v1295 = vmul.f32 %v1283, %v1294
        %1296 = vrot.lane.b32.xlu0 %v932, 32
        %v1297 = vpop.permute.xlu0 %1296
        %v1299 = vmul.f32 %v1295, %v1297
        %1300 = vrot.lane.b32.xlu0 %v938, 32
        %v1301 = vpop.permute.xlu0 %1300
        %v1303 = vadd.f32 %v1299, %v1301
        %v1304 = vpack.c.bf16 %v1303, %v1303
        %1306 = vrot.lane.b32.xlu0 %v1304, 96
        %v1307 = vpop.permute.xlu0 %1306
        %v1312 = vunpack.c.l.b16 %v859
        %v1313 = vunpack.c.l.b16 %v860
        %v1314 = vunpack.c.l.b16 %v861
        %v1315 = vunpack.c.l.b16 %v862
        %v1316 = vpack.c.b16 %v1313, %v1312
        %v1317 = vpack.c.b16 %v1315, %v1314
        %v1321 = vsel %vm734, %v1307, 0
        %1323 = vmatprep.subr.bf16.mxu0 0
        %1324 = vmatpush1.bf16.msra.mxu0 %v1316
        %1325 = vmatprep.subr.bf16.mxu0 0
        %1326 = vmatpush1.bf16.msra.mxu0 %v1317
        %1327 = vmatprep.subr.bf16.mxu0 0
        %1328 = vmatpush1.bf16.msra.mxu0 0
        %1329 = vmatprep.subr.bf16.mxu0 0
        %1330 = vmatpush1.bf16.msra.mxu0 0
        %1331 = vmatprep.subr.bf16.mxu0 0
        %1332 = vmatpush1.bf16.msra.mxu0 0
        %1333 = vmatprep.subr.bf16.mxu0 0
        %1334 = vmatpush1.bf16.msra.mxu0 0
        %1335 = vmatprep.subr.bf16.mxu0 0
        %1336 = vmatpush1.bf16.msra.mxu0 0
        %1337 = vmatprep.subr.bf16.mxu0 0
        %1338 = vmatpush1.bf16.msra.mxu0 0
        %1339 = vmatprep.subr.bf16.mxu0 0
        %1340 = vmatpush1.bf16.msra.mxu0 0
        %1341 = vmatprep.subr.bf16.mxu0 0
        %1342 = vmatpush1.bf16.msra.mxu0 0
        %1343 = vmatprep.subr.bf16.mxu0 0
        %1344 = vmatpush1.bf16.msra.mxu0 0
        %1345 = vmatprep.subr.bf16.mxu0 0
        %1346 = vmatpush1.bf16.msra.mxu0 0
        %1347 = vmatprep.subr.bf16.mxu0 0
        %1348 = vmatpush1.bf16.msra.mxu0 0
        %1349 = vmatprep.subr.bf16.mxu0 0
        %1350 = vmatpush1.bf16.msra.mxu0 0
        %1351 = vmatprep.subr.bf16.mxu0 0
        %1352 = vmatpush1.bf16.msra.mxu0 0
        %1353 = vmatprep.subr.bf16.mxu0 0
        %1354 = vmatpush1.bf16.msra.mxu0 0
        %1355 = vmatprep.mubr.bf16.mxu0 0
        %1356 = vmatmul.mubr.bf16.gmra.mrb[0].mxu0 %v1321
        %v1357 = vpop.f32.mrb[0].mxu0
        %v1358 = vadd.f32 %v905, %v1357
        %v1359 = vpop.f32.mrb[0].mxu0
        %v1360 = vpop.f32.mrb[0].mxu0
        %v1361 = vpop.f32.mrb[0].mxu0
        %1362 = vdwg.mxu0
        %v1363 = vmax.f32 %v1358, 0.0
        %v1364 = vpack.c.bf16 %v1363, %v1363
        %v1381 = vunpack.c.l.b16 %v863
        %v1382 = vunpack.c.l.b16 %v864
        %v1383 = vunpack.c.l.b16 %v865
        %v1384 = vunpack.c.l.b16 %v866
        %v1385 = vunpack.c.l.b16 %v867
        %v1386 = vunpack.c.l.b16 %v868
        %v1387 = vunpack.c.l.b16 %v869
        %v1388 = vunpack.c.l.b16 %v870
        %v1389 = vunpack.c.l.b16 %v871
        %v1390 = vunpack.c.l.b16 %v872
        %v1391 = vunpack.c.l.b16 %v873
        %v1392 = vunpack.c.l.b16 %v874
        %v1393 = vunpack.c.l.b16 %v875
        %v1394 = vunpack.c.l.b16 %v876
        %v1395 = vunpack.c.l.b16 %v877
        %v1396 = vunpack.c.l.b16 %v878
        %v1397 = vpack.c.b16 %v1382, %v1381
        %v1398 = vpack.c.b16 %v1384, %v1383
        %v1399 = vpack.c.b16 %v1386, %v1385
        %v1400 = vpack.c.b16 %v1388, %v1387
        %v1401 = vpack.c.b16 %v1390, %v1389
        %v1402 = vpack.c.b16 %v1392, %v1391
        %v1403 = vpack.c.b16 %v1394, %v1393
        %v1404 = vpack.c.b16 %v1396, %v1395
        %1413 = vmatprep.subr.bf16.mxu0 0
        %1414 = vmatpush1.bf16.msra.mxu0 %v1397
        %1415 = vmatprep.subr.bf16.mxu0 0
        %1416 = vmatpush1.bf16.msra.mxu0 %v1398
        %1417 = vmatprep.subr.bf16.mxu0 0
        %1418 = vmatpush1.bf16.msra.mxu0 %v1399
        %1419 = vmatprep.subr.bf16.mxu0 0
        %1420 = vmatpush1.bf16.msra.mxu0 %v1400
        %1421 = vmatprep.subr.bf16.mxu0 0
        %1422 = vmatpush1.bf16.msra.mxu0 %v1401
        %1423 = vmatprep.subr.bf16.mxu0 0
        %1424 = vmatpush1.bf16.msra.mxu0 %v1402
        %1425 = vmatprep.subr.bf16.mxu0 0
        %1426 = vmatpush1.bf16.msra.mxu0 %v1403
        %1427 = vmatprep.subr.bf16.mxu0 0
        %1428 = vmatpush1.bf16.msra.mxu0 %v1404
        %1429 = vmatprep.subr.bf16.mxu0 0
        %1430 = vmatpush1.bf16.msra.mxu0 0
        %1431 = vmatprep.subr.bf16.mxu0 0
        %1432 = vmatpush1.bf16.msra.mxu0 0
        %1433 = vmatprep.subr.bf16.mxu0 0
        %1434 = vmatpush1.bf16.msra.mxu0 0
        %1435 = vmatprep.subr.bf16.mxu0 0
        %1436 = vmatpush1.bf16.msra.mxu0 0
        %1437 = vmatprep.subr.bf16.mxu0 0
        %1438 = vmatpush1.bf16.msra.mxu0 0
        %1439 = vmatprep.subr.bf16.mxu0 0
        %1440 = vmatpush1.bf16.msra.mxu0 0
        %1441 = vmatprep.subr.bf16.mxu0 0
        %1442 = vmatpush1.bf16.msra.mxu0 0
        %1443 = vmatprep.subr.bf16.mxu0 0
        %1444 = vmatpush1.bf16.msra.mxu0 0
        %1445 = vmatprep.mubr.bf16.mxu0 0
        %1446 = vmatmul.mubr.bf16.gmra.mrb[0].mxu0 %v1364
        %v1447 = vpop.f32.mrb[0].mxu0
        %v1448 = vadd.f32 0.0, %v1447
        %v1449 = vpop.f32.mrb[0].mxu0
        %v1450 = vpop.f32.mrb[0].mxu0
        %v1451 = vpop.f32.mrb[0].mxu0
        %1452 = vdwg.mxu0
        %1454 = vrot.lane.b32.xlu0 %v1448, 32
        %v1455 = vpop.permute.xlu0 %1454
        %v1457 = vadd.f32 %v1274, %v1455
        %1458 = vrot.lane.b32.xlu0 %v912, 32
        %v1459 = vpop.permute.xlu0 %1458
        %v1461 = vadd.f32 %v1457, %v1459
        %1463 = vrot.lane.b32.xlu0 %v1461, 96
        %v1464 = vpop.permute.xlu0 %1463
        %v1466 = vsel %vm734, %v1464, 0.0
        %1467 = vadd.xlane.f32.xlu0 %v1466
        %v1468 = vpop.xlane.xlu0 %1467
        %v1469 = vmul.f32 %v1468, %v741
        %v1470 = vsub.f32 %v1461, %v1469
        %v1471 = vmul.f32 %v1470, %v1470
        %1473 = vrot.lane.b32.xlu0 %v1471, 96
        %v1474 = vpop.permute.xlu0 %1473
        %v1476 = vsel %vm734, %v1474, 0.0
        %1477 = vadd.xlane.f32.xlu0 %v1476
        %v1478 = vpop.xlane.xlu0 %1477
        %v1479 = vmul.f32 %v1478, %v741
        %v1480 = vadd.f32 %v1479, 1e-05
        %v1481 = vrsqrt.pop %v1480
        %v1482 = vmul.f32 %v1470, %v1481
        %1483 = vrot.lane.b32.xlu0 %v918, 32
        %v1484 = vpop.permute.xlu0 %1483
        %v1486 = vmul.f32 %v1482, %v1484
        %1487 = vrot.lane.b32.xlu0 %v925, 32
        %v1488 = vpop.permute.xlu0 %1487
        %v1490 = vadd.f32 %v1486, %v1488
        %v1491 = vpack.c.bf16 %v1490, %v1490
        %1493 = vrot.lane.b32.xlu0 %v1491, 96
        %v1494 = vpop.permute.xlu0 %1493
        %v1496 = vsel %vm734, %v1494, 0
        %1498 = vmatprep.subr.bf16.mxu0 0
        %1499 = vmatpush1.bf16.msra.mxu0 %v964
        %1500 = vmatprep.subr.bf16.mxu0 0
        %1501 = vmatpush1.bf16.msra.mxu0 %v965
        %1502 = vmatprep.subr.bf16.mxu0 0
        %1503 = vmatpush1.bf16.msra.mxu0 0
        %1504 = vmatprep.subr.bf16.mxu0 0
        %1505 = vmatpush1.bf16.msra.mxu0 0
        %1506 = vmatprep.subr.bf16.mxu0 0
        %1507 = vmatpush1.bf16.msra.mxu0 0
        %1508 = vmatprep.subr.bf16.mxu0 0
        %1509 = vmatpush1.bf16.msra.mxu0 0
        %1510 = vmatprep.subr.bf16.mxu0 0
        %1511 = vmatpush1.bf16.msra.mxu0 0
        %1512 = vmatprep.subr.bf16.mxu0 0
        %1513 = vmatpush1.bf16.msra.mxu0 0
        %1514 = vmatprep.subr.bf16.mxu0 0
        %1515 = vmatpush1.bf16.msra.mxu0 0
        %1516 = vmatprep.subr.bf16.mxu0 0
        %1517 = vmatpush1.bf16.msra.mxu0 0
        %1518 = vmatprep.subr.bf16.mxu0 0
        %1519 = vmatpush1.bf16.msra.mxu0 0
        %1520 = vmatprep.subr.bf16.mxu0 0
        %1521 = vmatpush1.bf16.msra.mxu0 0
        %1522 = vmatprep.subr.bf16.mxu0 0
        %1523 = vmatpush1.bf16.msra.mxu0 0
        %1524 = vmatprep.subr.bf16.mxu0 0
        %1525 = vmatpush1.bf16.msra.mxu0 0
        %1526 = vmatprep.subr.bf16.mxu0 0
        %1527 = vmatpush1.bf16.msra.mxu0 0
        %1528 = vmatprep.subr.bf16.mxu0 0
        %1529 = vmatpush1.bf16.msra.mxu0 0
        %1530 = vmatprep.mubr.bf16.mxu0 0
        %1531 = vmatmul.mubr.bf16.gmra.mrb[0].mxu0 %v1496
        %v1532 = vpop.f32.mrb[0].mxu0
        %v1533 = vadd.f32 %v884, %v1532
        %v1534 = vpop.f32.mrb[0].mxu0
        %v1535 = vpop.f32.mrb[0].mxu0
        %v1536 = vpop.f32.mrb[0].mxu0
        %1537 = vdwg.mxu0
        %v1538 = vpack.c.bf16 %v1533, %v1533
        %v1540 = vsel %vm734, %v1538, 0
        %1542 = vmatprep.subr.bf16.mxu0 0
        %1543 = vmatpush1.bf16.xpose.msra.mxu0 %v1016
        %1544 = vmatprep.subr.bf16.mxu0 0
        %1545 = vmatpush1.bf16.xpose.msra.mxu0 0
        %1546 = vmatprep.subr.bf16.mxu0 0
        %1547 = vmatpush1.bf16.xpose.msra.mxu0 0
        %1548 = vmatprep.subr.bf16.mxu0 0
        %1549 = vmatpush1.bf16.xpose.msra.mxu0 0
        %1550 = vmatprep.subr.bf16.mxu0 0
        %1551 = vmatpush1.bf16.xpose.msra.mxu0 0
        %1552 = vmatprep.subr.bf16.mxu0 0
        %1553 = vmatpush1.bf16.xpose.msra.mxu0 0
        %1554 = vmatprep.subr.bf16.mxu0 0
        %1555 = vmatpush1.bf16.xpose.msra.mxu0 0
        %1556 = vmatprep.subr.bf16.mxu0 0
        %1557 = vmatpush1.bf16.xpose.msra.mxu0 0
        %1558 = vmatprep.subr.bf16.mxu0 0
        %1559 = vmatpush1.bf16.xpose.msra.mxu0 0
        %1560 = vmatprep.subr.bf16.mxu0 0
        %1561 = vmatpush1.bf16.xpose.msra.mxu0 0
        %1562 = vmatprep.subr.bf16.mxu0 0
        %1563 = vmatpush1.bf16.xpose.msra.mxu0 0
        %1564 = vmatprep.subr.bf16.mxu0 0
        %1565 = vmatpush1.bf16.xpose.msra.mxu0 0
        %1566 = vmatprep.subr.bf16.mxu0 0
        %1567 = vmatpush1.bf16.xpose.msra.mxu0 0
        %1568 = vmatprep.subr.bf16.mxu0 0
        %1569 = vmatpush1.bf16.xpose.msra.mxu0 0
        %1570 = vmatprep.subr.bf16.mxu0 0
        %1571 = vmatpush1.bf16.xpose.msra.mxu0 0
        %1572 = vmatprep.subr.bf16.mxu0 0
        %1573 = vmatpush1.bf16.xpose.msra.mxu0 0
        %1574 = vmatprep.mubr.bf16.mxu0 0
        %1575 = vmatmul.mubr.bf16.gmra.mrb[0].mxu0 %v1540
        %v1576 = vpop.f32.mrb[0].mxu0
        %v1577 = vadd.f32 0.0, %v1576
        %v1578 = vpop.f32.mrb[0].mxu0
        %v1579 = vpop.f32.mrb[0].mxu0
        %v1580 = vpop.f32.mrb[0].mxu0
        %1581 = vdwg.mxu0
        %v1582 = vmul.f32 %v1577, 0.17677669
        %v1583 = vsel %vm1059, %v1582, -inf
        %v1584 = vrot.slane %v1583, 4
        %v1585 = vmax.f32 %v1583, %v1584
        %v1586 = vrot.slane %v1585, 2
        %v1587 = vmax.f32 %v1585, %v1586
        %v1588 = vrot.slane %v1587, 1
        %v1589 = vmax.f32 %v1587, %v1588
        %v1590 = vsub.f32 %v1582, %v1589
        %v1591 = vmul.f32 %v1590, 1.442695
        %v1592 = vpow.pop %v1591
        %v1593 = vsel %vm1059, %v1592, 0.0
        %v1594 = vrot.slane %v1593, 4
        %v1595 = vadd.f32 %v1593, %v1594
        %v1596 = vrot.slane %v1595, 2
        %v1597 = vadd.f32 %v1595, %v1596
        %v1598 = vrot.slane %v1597, 1
        %v1599 = vadd.f32 %v1597, %v1598
        %v1600 = vrcp.pop %v1599
        %v1601 = vmul.f32 %v1592, %v1600
        %v1602 = vadd.f32 %v1601, 1e-08
        %v1603 = vsel %vm1059, %v1602, 0.0
        %1604 = vadd.xlane.f32.xlu0 %v1603
        %v1605 = vpop.xlane.xlu0 %1604
        %v1606 = vrcp.pop %v1605
        %v1607 = vmul.f32 %v1602, %v1606
        %v1608 = vpack.c.bf16 %v1607, %v1607
        %v1610 = vsel %vm1059, %v1608, 0
        %1612 = vmatprep.subr.bf16.mxu0 0
        %1613 = vmatpush1.bf16.msra.mxu0 %v1088
        %1614 = vmatprep.subr.bf16.mxu0 0
        %1615 = vmatpush1.bf16.msra.mxu0 0
        %1616 = vmatprep.subr.bf16.mxu0 0
        %1617 = vmatpush1.bf16.msra.mxu0 0
        %1618 = vmatprep.subr.bf16.mxu0 0
        %1619 = vmatpush1.bf16.msra.mxu0 0
        %1620 = vmatprep.subr.bf16.mxu0 0
        %1621 = vmatpush1.bf16.msra.mxu0 0
        %1622 = vmatprep.subr.bf16.mxu0 0
        %1623 = vmatpush1.bf16.msra.mxu0 0
        %1624 = vmatprep.subr.bf16.mxu0 0
        %1625 = vmatpush1.bf16.msra.mxu0 0
        %1626 = vmatprep.subr.bf16.mxu0 0
        %1627 = vmatpush1.bf16.msra.mxu0 0
        %1628 = vmatprep.subr.bf16.mxu0 0
        %1629 = vmatpush1.bf16.msra.mxu0 0
        %1630 = vmatprep.subr.bf16.mxu0 0
        %1631 = vmatpush1.bf16.msra.mxu0 0
        %1632 = vmatprep.subr.bf16.mxu0 0
        %1633 = vmatpush1.bf16.msra.mxu0 0
        %1634 = vmatprep.subr.bf16.mxu0 0
        %1635 = vmatpush1.bf16.msra.mxu0 0
        %1636 = vmatprep.subr.bf16.mxu0 0
        %1637 = vmatpush1.bf16.msra.mxu0 0
        %1638 = vmatprep.subr.bf16.mxu0 0
        %1639 = vmatpush1.bf16.msra.mxu0 0
        %1640 = vmatprep.subr.bf16.mxu0 0
        %1641 = vmatpush1.bf16.msra.mxu0 0
        %1642 = vmatprep.subr.bf16.mxu0 0
        %1643 = vmatpush1.bf16.msra.mxu0 0
        %1644 = vmatprep.mubr.bf16.mxu0 0
        %1645 = vmatmul.mubr.bf16.gmra.mrb[0].mxu0 %v1610
        %v1646 = vpop.f32.mrb[0].mxu0
        %v1647 = vadd.f32 0.0, %v1646
        %v1648 = vpop.f32.mrb[0].mxu0
        %v1649 = vpop.f32.mrb[0].mxu0
        %v1650 = vpop.f32.mrb[0].mxu0
        %1651 = vdwg.mxu0
        %v1652 = vpack.c.bf16 %v1647, %v1647
        %v1654 = vsel %vm734, %v1652, 0
        %1656 = vmatprep.subr.bf16.mxu0 0
        %1657 = vmatpush1.bf16.msra.mxu0 %v1142
        %1658 = vmatprep.subr.bf16.mxu0 0
        %1659 = vmatpush1.bf16.msra.mxu0 %v1143
        %1660 = vmatprep.subr.bf16.mxu0 0
        %1661 = vmatpush1.bf16.msra.mxu0 0
        %1662 = vmatprep.subr.bf16.mxu0 0
        %1663 = vmatpush1.bf16.msra.mxu0 0
        %1664 = vmatprep.subr.bf16.mxu0 0
        %1665 = vmatpush1.bf16.msra.mxu0 0
        %1666 = vmatprep.subr.bf16.mxu0 0
        %1667 = vmatpush1.bf16.msra.mxu0 0
        %1668 = vmatprep.subr.bf16.mxu0 0
        %1669 = vmatpush1.bf16.msra.mxu0 0
        %1670 = vmatprep.subr.bf16.mxu0 0
        %1671 = vmatpush1.bf16.msra.mxu0 0
        %1672 = vmatprep.subr.bf16.mxu0 0
        %1673 = vmatpush1.bf16.msra.mxu0 0
        %1674 = vmatprep.subr.bf16.mxu0 0
        %1675 = vmatpush1.bf16.msra.mxu0 0
        %1676 = vmatprep.subr.bf16.mxu0 0
        %1677 = vmatpush1.bf16.msra.mxu0 0
        %1678 = vmatprep.subr.bf16.mxu0 0
        %1679 = vmatpush1.bf16.msra.mxu0 0
        %1680 = vmatprep.subr.bf16.mxu0 0
        %1681 = vmatpush1.bf16.msra.mxu0 0
        %1682 = vmatprep.subr.bf16.mxu0 0
        %1683 = vmatpush1.bf16.msra.mxu0 0
        %1684 = vmatprep.subr.bf16.mxu0 0
        %1685 = vmatpush1.bf16.msra.mxu0 0
        %1686 = vmatprep.subr.bf16.mxu0 0
        %1687 = vmatpush1.bf16.msra.mxu0 0
        %1688 = vmatprep.mubr.bf16.mxu0 0
        %1689 = vmatmul.mubr.bf16.gmra.mrb[0].mxu0 %v1654
        %v1690 = vpop.f32.mrb[0].mxu0
        %v1691 = vadd.f32 %v891, %v1690
        %v1692 = vpop.f32.mrb[0].mxu0
        %v1693 = vpop.f32.mrb[0].mxu0
        %v1694 = vpop.f32.mrb[0].mxu0
        %1695 = vdwg.mxu0
        %v1696 = vpack.c.bf16 %v1461, %v1461
        %1698 = vrot.lane.b32.xlu0 %v1696, 96
        %v1699 = vpop.permute.xlu0 %1698
        %v1701 = vsel %vm734, %v1699, 0
        %1703 = vmatprep.subr.bf16.mxu0 0
        %1704 = vmatpush1.bf16.msra.mxu0 %v1198
        %1705 = vmatprep.subr.bf16.mxu0 0
        %1706 = vmatpush1.bf16.msra.mxu0 %v1199
        %1707 = vmatprep.subr.bf16.mxu0 0
        %1708 = vmatpush1.bf16.msra.mxu0 0
        %1709 = vmatprep.subr.bf16.mxu0 0
        %1710 = vmatpush1.bf16.msra.mxu0 0
        %1711 = vmatprep.subr.bf16.mxu0 0
        %1712 = vmatpush1.bf16.msra.mxu0 0
        %1713 = vmatprep.subr.bf16.mxu0 0
        %1714 = vmatpush1.bf16.msra.mxu0 0
        %1715 = vmatprep.subr.bf16.mxu0 0
        %1716 = vmatpush1.bf16.msra.mxu0 0
        %1717 = vmatprep.subr.bf16.mxu0 0
        %1718 = vmatpush1.bf16.msra.mxu0 0
        %1719 = vmatprep.subr.bf16.mxu0 0
        %1720 = vmatpush1.bf16.msra.mxu0 0
        %1721 = vmatprep.subr.bf16.mxu0 0
        %1722 = vmatpush1.bf16.msra.mxu0 0
        %1723 = vmatprep.subr.bf16.mxu0 0
        %1724 = vmatpush1.bf16.msra.mxu0 0
        %1725 = vmatprep.subr.bf16.mxu0 0
        %1726 = vmatpush1.bf16.msra.mxu0 0
        %1727 = vmatprep.subr.bf16.mxu0 0
        %1728 = vmatpush1.bf16.msra.mxu0 0
        %1729 = vmatprep.subr.bf16.mxu0 0
        %1730 = vmatpush1.bf16.msra.mxu0 0
        %1731 = vmatprep.subr.bf16.mxu0 0
        %1732 = vmatpush1.bf16.msra.mxu0 0
        %1733 = vmatprep.subr.bf16.mxu0 0
        %1734 = vmatpush1.bf16.msra.mxu0 0
        %1735 = vmatprep.mubr.bf16.mxu0 0
        %1736 = vmatmul.mubr.bf16.gmra.mrb[0].mxu0 %v1701
        %v1737 = vpop.f32.mrb[0].mxu0
        %v1738 = vadd.f32 %v898, %v1737
        %v1739 = vpop.f32.mrb[0].mxu0
        %v1740 = vpop.f32.mrb[0].mxu0
        %v1741 = vpop.f32.mrb[0].mxu0
        %1742 = vdwg.mxu0
        %v1743 = vadd.f32 %v1691, %v1738
        %v1744 = vxor.u32 %v1743, 2147483648
        %v1745 = vmul.f32 %v1744, 1.442695
        %v1746 = vpow.pop %v1745
        %v1747 = vadd.f32 %v1746, 1.0
        %v1748 = vrcp.pop %v1747
        %v1749 = vmul.f32 1.0, %v1748
        %1751 = vrot.lane.b32.xlu0 %v1738, 64
        %v1752 = vpop.permute.xlu0 %1751
        %v1754 = vmul.f32 %v1749, %v1752
        %1756 = vrot.lane.b32.xlu0 %v1754, 64
        %v1757 = vpop.permute.xlu0 %1756
        %v1759 = vadd.f32 %v1691, %v1757
        %v1760 = vtanh.pop %v1759
        %v1761 = vsub.f32 1.0, %v1749
        %1763 = vrot.lane.b32.xlu0 %v1760, 96
        %v1764 = vpop.permute.xlu0 %1763
        %v1766 = vmul.f32 %v1761, %v1764
        %v1767 = vmul.f32 %v1749, %v1461
        %v1768 = vadd.f32 %v1766, %v1767
        %1770 = vrot.lane.b32.xlu0 %v1768, 96
        %v1771 = vpop.permute.xlu0 %1770
        %v1773 = vsel %vm734, %v1771, 0.0
        %1774 = vadd.xlane.f32.xlu0 %v1773
        %v1775 = vpop.xlane.xlu0 %1774
        %v1776 = vmul.f32 %v1775, %v741
        %v1777 = vsub.f32 %v1768, %v1776
        %v1778 = vmul.f32 %v1777, %v1777
        %1780 = vrot.lane.b32.xlu0 %v1778, 96
        %v1781 = vpop.permute.xlu0 %1780
        %v1783 = vsel %vm734, %v1781, 0.0
        %1784 = vadd.xlane.f32.xlu0 %v1783
        %v1785 = vpop.xlane.xlu0 %1784
        %v1786 = vmul.f32 %v1785, %v741
        %v1787 = vadd.f32 %v1786, 1e-05
        %v1788 = vrsqrt.pop %v1787
        %v1789 = vmul.f32 %v1777, %v1788
        %v1790 = vmul.f32 %v1789, %v1297
        %v1791 = vadd.f32 %v1790, %v1301
        %v1792 = vpack.c.bf16 %v1791, %v1791
        %1794 = vrot.lane.b32.xlu0 %v1792, 96
        %v1795 = vpop.permute.xlu0 %1794
        %v1797 = vsel %vm734, %v1795, 0
        %1799 = vmatprep.subr.bf16.mxu0 0
        %1800 = vmatpush1.bf16.msra.mxu0 %v1316
        %1801 = vmatprep.subr.bf16.mxu0 0
        %1802 = vmatpush1.bf16.msra.mxu0 %v1317
        %1803 = vmatprep.subr.bf16.mxu0 0
        %1804 = vmatpush1.bf16.msra.mxu0 0
        %1805 = vmatprep.subr.bf16.mxu0 0
        %1806 = vmatpush1.bf16.msra.mxu0 0
        %1807 = vmatprep.subr.bf16.mxu0 0
        %1808 = vmatpush1.bf16.msra.mxu0 0
        %1809 = vmatprep.subr.bf16.mxu0 0
        %1810 = vmatpush1.bf16.msra.mxu0 0
        %1811 = vmatprep.subr.bf16.mxu0 0
        %1812 = vmatpush1.bf16.msra.mxu0 0
        %1813 = vmatprep.subr.bf16.mxu0 0
        %1814 = vmatpush1.bf16.msra.mxu0 0
        %1815 = vmatprep.subr.bf16.mxu0 0
        %1816 = vmatpush1.bf16.msra.mxu0 0
        %1817 = vmatprep.subr.bf16.mxu0 0
        %1818 = vmatpush1.bf16.msra.mxu0 0
        %1819 = vmatprep.subr.bf16.mxu0 0
        %1820 = vmatpush1.bf16.msra.mxu0 0
        %1821 = vmatprep.subr.bf16.mxu0 0
        %1822 = vmatpush1.bf16.msra.mxu0 0
        %1823 = vmatprep.subr.bf16.mxu0 0
        %1824 = vmatpush1.bf16.msra.mxu0 0
        %1825 = vmatprep.subr.bf16.mxu0 0
        %1826 = vmatpush1.bf16.msra.mxu0 0
        %1827 = vmatprep.subr.bf16.mxu0 0
        %1828 = vmatpush1.bf16.msra.mxu0 0
        %1829 = vmatprep.subr.bf16.mxu0 0
        %1830 = vmatpush1.bf16.msra.mxu0 0
        %1831 = vmatprep.mubr.bf16.mxu0 0
        %1832 = vmatmul.mubr.bf16.gmra.mrb[0].mxu0 %v1797
        %v1833 = vpop.f32.mrb[0].mxu0
        %v1834 = vadd.f32 %v905, %v1833
        %v1835 = vpop.f32.mrb[0].mxu0
        %v1836 = vpop.f32.mrb[0].mxu0
        %v1837 = vpop.f32.mrb[0].mxu0
        %1838 = vdwg.mxu0
        %v1839 = vmax.f32 %v1834, 0.0
        %v1840 = vpack.c.bf16 %v1839, %v1839
        %1841 = vmatprep.subr.bf16.mxu0 0
        %1842 = vmatpush1.bf16.msra.mxu0 %v1397
        %1843 = vmatprep.subr.bf16.mxu0 0
        %1844 = vmatpush1.bf16.msra.mxu0 %v1398
        %1845 = vmatprep.subr.bf16.mxu0 0
        %1846 = vmatpush1.bf16.msra.mxu0 %v1399
        %1847 = vmatprep.subr.bf16.mxu0 0
        %1848 = vmatpush1.bf16.msra.mxu0 %v1400
        %1849 = vmatprep.subr.bf16.mxu0 0
        %1850 = vmatpush1.bf16.msra.mxu0 %v1401
        %1851 = vmatprep.subr.bf16.mxu0 0
        %1852 = vmatpush1.bf16.msra.mxu0 %v1402
        %1853 = vmatprep.subr.bf16.mxu0 0
        %1854 = vmatpush1.bf16.msra.mxu0 %v1403
        %1855 = vmatprep.subr.bf16.mxu0 0
        %1856 = vmatpush1.bf16.msra.mxu0 %v1404
        %1857 = vmatprep.subr.bf16.mxu0 0
        %1858 = vmatpush1.bf16.msra.mxu0 0
        %1859 = vmatprep.subr.bf16.mxu0 0
        %1860 = vmatpush1.bf16.msra.mxu0 0
        %1861 = vmatprep.subr.bf16.mxu0 0
        %1862 = vmatpush1.bf16.msra.mxu0 0
        %1863 = vmatprep.subr.bf16.mxu0 0
        %1864 = vmatpush1.bf16.msra.mxu0 0
        %1865 = vmatprep.subr.bf16.mxu0 0
        %1866 = vmatpush1.bf16.msra.mxu0 0
        %1867 = vmatprep.subr.bf16.mxu0 0
        %1868 = vmatpush1.bf16.msra.mxu0 0
        %1869 = vmatprep.subr.bf16.mxu0 0
        %1870 = vmatpush1.bf16.msra.mxu0 0
        %1871 = vmatprep.subr.bf16.mxu0 0
        %1872 = vmatpush1.bf16.msra.mxu0 0
        %1873 = vmatprep.mubr.bf16.mxu0 0
        %1874 = vmatmul.mubr.bf16.gmra.mrb[0].mxu0 %v1840
        %v1875 = vpop.f32.mrb[0].mxu0
        %v1876 = vadd.f32 0.0, %v1875
        %v1877 = vpop.f32.mrb[0].mxu0
        %v1878 = vpop.f32.mrb[0].mxu0
        %v1879 = vpop.f32.mrb[0].mxu0
        %1880 = vdwg.mxu0
        %1882 = vrot.lane.b32.xlu0 %v1876, 32
        %v1883 = vpop.permute.xlu0 %1882
        %v1885 = vadd.f32 %v1768, %v1883
        %v1886 = vadd.f32 %v1885, %v1459
        %1888 = vrot.lane.b32.xlu0 %v1886, 96
        %v1889 = vpop.permute.xlu0 %1888
        %v1891 = vsel %vm734, %v1889, 0.0
        %1892 = vadd.xlane.f32.xlu0 %v1891
        %v1893 = vpop.xlane.xlu0 %1892
        %v1894 = vmul.f32 %v1893, %v741
        %v1895 = vsub.f32 %v1886, %v1894
        %v1896 = vmul.f32 %v1895, %v1895
        %1898 = vrot.lane.b32.xlu0 %v1896, 96
        %v1899 = vpop.permute.xlu0 %1898
        %v1901 = vsel %vm734, %v1899, 0.0
        %1902 = vadd.xlane.f32.xlu0 %v1901
        %v1903 = vpop.xlane.xlu0 %1902
        %v1904 = vmul.f32 %v1903, %v741
        %v1905 = vadd.f32 %v1904, 1e-05
        %v1906 = vrsqrt.pop %v1905
        %v1907 = vmul.f32 %v1895, %v1906
        %v1908 = vmul.f32 %v1907, %v1484
        %v1909 = vadd.f32 %v1908, %v1488
        %v1910 = vpack.c.bf16 %v1909, %v1909
        %1912 = vrot.lane.b32.xlu0 %v1910, 96
        %v1913 = vpop.permute.xlu0 %1912
        %v1915 = vsel %vm734, %v1913, 0
        %1917 = vmatprep.subr.bf16.mxu0 0
        %1918 = vmatpush1.bf16.msra.mxu0 %v964
        %1919 = vmatprep.subr.bf16.mxu0 0
        %1920 = vmatpush1.bf16.msra.mxu0 %v965
        %1921 = vmatprep.subr.bf16.mxu0 0
        %1922 = vmatpush1.bf16.msra.mxu0 0
        %1923 = vmatprep.subr.bf16.mxu0 0
        %1924 = vmatpush1.bf16.msra.mxu0 0
        %1925 = vmatprep.subr.bf16.mxu0 0
        %1926 = vmatpush1.bf16.msra.mxu0 0
        %1927 = vmatprep.subr.bf16.mxu0 0
        %1928 = vmatpush1.bf16.msra.mxu0 0
        %1929 = vmatprep.subr.bf16.mxu0 0
        %1930 = vmatpush1.bf16.msra.mxu0 0
        %1931 = vmatprep.subr.bf16.mxu0 0
        %1932 = vmatpush1.bf16.msra.mxu0 0
        %1933 = vmatprep.subr.bf16.mxu0 0
        %1934 = vmatpush1.bf16.msra.mxu0 0
        %1935 = vmatprep.subr.bf16.mxu0 0
        %1936 = vmatpush1.bf16.msra.mxu0 0
        %1937 = vmatprep.subr.bf16.mxu0 0
        %1938 = vmatpush1.bf16.msra.mxu0 0
        %1939 = vmatprep.subr.bf16.mxu0 0
        %1940 = vmatpush1.bf16.msra.mxu0 0
        %1941 = vmatprep.subr.bf16.mxu0 0
        %1942 = vmatpush1.bf16.msra.mxu0 0
        %1943 = vmatprep.subr.bf16.mxu0 0
        %1944 = vmatpush1.bf16.msra.mxu0 0
        %1945 = vmatprep.subr.bf16.mxu0 0
        %1946 = vmatpush1.bf16.msra.mxu0 0
        %1947 = vmatprep.subr.bf16.mxu0 0
        %1948 = vmatpush1.bf16.msra.mxu0 0
        %1949 = vmatprep.mubr.bf16.mxu0 0
        %1950 = vmatmul.mubr.bf16.gmra.mrb[0].mxu0 %v1915
        %v1951 = vpop.f32.mrb[0].mxu0
        %v1952 = vadd.f32 %v884, %v1951
        %v1953 = vpop.f32.mrb[0].mxu0
        %v1954 = vpop.f32.mrb[0].mxu0
        %v1955 = vpop.f32.mrb[0].mxu0
        %1956 = vdwg.mxu0
        %v1957 = vpack.c.bf16 %v1952, %v1952
        %v1959 = vsel %vm734, %v1957, 0
        %1961 = vmatprep.subr.bf16.mxu0 0
        %1962 = vmatpush1.bf16.xpose.msra.mxu0 %v1016
        %1963 = vmatprep.subr.bf16.mxu0 0
        %1964 = vmatpush1.bf16.xpose.msra.mxu0 0
        %1965 = vmatprep.subr.bf16.mxu0 0
        %1966 = vmatpush1.bf16.xpose.msra.mxu0 0
        %1967 = vmatprep.subr.bf16.mxu0 0
        %1968 = vmatpush1.bf16.xpose.msra.mxu0 0
        %1969 = vmatprep.subr.bf16.mxu0 0
        %1970 = vmatpush1.bf16.xpose.msra.mxu0 0
        %1971 = vmatprep.subr.bf16.mxu0 0
        %1972 = vmatpush1.bf16.xpose.msra.mxu0 0
        %1973 = vmatprep.subr.bf16.mxu0 0
        %1974 = vmatpush1.bf16.xpose.msra.mxu0 0
        %1975 = vmatprep.subr.bf16.mxu0 0
        %1976 = vmatpush1.bf16.xpose.msra.mxu0 0
        %1977 = vmatprep.subr.bf16.mxu0 0
        %1978 = vmatpush1.bf16.xpose.msra.mxu0 0
        %1979 = vmatprep.subr.bf16.mxu0 0
        %1980 = vmatpush1.bf16.xpose.msra.mxu0 0
        %1981 = vmatprep.subr.bf16.mxu0 0
        %1982 = vmatpush1.bf16.xpose.msra.mxu0 0
        %1983 = vmatprep.subr.bf16.mxu0 0
        %1984 = vmatpush1.bf16.xpose.msra.mxu0 0
        %1985 = vmatprep.subr.bf16.mxu0 0
        %1986 = vmatpush1.bf16.xpose.msra.mxu0 0
        %1987 = vmatprep.subr.bf16.mxu0 0
        %1988 = vmatpush1.bf16.xpose.msra.mxu0 0
        %1989 = vmatprep.subr.bf16.mxu0 0
        %1990 = vmatpush1.bf16.xpose.msra.mxu0 0
        %1991 = vmatprep.subr.bf16.mxu0 0
        %1992 = vmatpush1.bf16.xpose.msra.mxu0 0
        %1993 = vmatprep.mubr.bf16.mxu0 0
        %1994 = vmatmul.mubr.bf16.gmra.mrb[0].mxu0 %v1959
        %v1995 = vpop.f32.mrb[0].mxu0
        %v1996 = vadd.f32 0.0, %v1995
        %v1997 = vpop.f32.mrb[0].mxu0
        %v1998 = vpop.f32.mrb[0].mxu0
        %v1999 = vpop.f32.mrb[0].mxu0
        %2000 = vdwg.mxu0
        %v2001 = vmul.f32 %v1996, 0.17677669
        %v2002 = vsel %vm1059, %v2001, -inf
        %v2003 = vrot.slane %v2002, 4
        %v2004 = vmax.f32 %v2002, %v2003
        %v2005 = vrot.slane %v2004, 2
        %v2006 = vmax.f32 %v2004, %v2005
        %v2007 = vrot.slane %v2006, 1
        %v2008 = vmax.f32 %v2006, %v2007
        %v2009 = vsub.f32 %v2001, %v2008
        %v2010 = vmul.f32 %v2009, 1.442695
        %v2011 = vpow.pop %v2010
        %v2012 = vsel %vm1059, %v2011, 0.0
        %v2013 = vrot.slane %v2012, 4
        %v2014 = vadd.f32 %v2012, %v2013
        %v2015 = vrot.slane %v2014, 2
        %v2016 = vadd.f32 %v2014, %v2015
        %v2017 = vrot.slane %v2016, 1
        %v2018 = vadd.f32 %v2016, %v2017
        %v2019 = vrcp.pop %v2018
        %v2020 = vmul.f32 %v2011, %v2019
        %v2021 = vadd.f32 %v2020, 1e-08
        %v2022 = vsel %vm1059, %v2021, 0.0
        %2023 = vadd.xlane.f32.xlu0 %v2022
        %v2024 = vpop.xlane.xlu0 %2023
        %v2025 = vrcp.pop %v2024
        %v2026 = vmul.f32 %v2021, %v2025
        %v2027 = vpack.c.bf16 %v2026, %v2026
        %v2029 = vsel %vm1059, %v2027, 0
        %2031 = vmatprep.subr.bf16.mxu0 0
        %2032 = vmatpush1.bf16.msra.mxu0 %v1088
        %2033 = vmatprep.subr.bf16.mxu0 0
        %2034 = vmatpush1.bf16.msra.mxu0 0
        %2035 = vmatprep.subr.bf16.mxu0 0
        %2036 = vmatpush1.bf16.msra.mxu0 0
        %2037 = vmatprep.subr.bf16.mxu0 0
        %2038 = vmatpush1.bf16.msra.mxu0 0
        %2039 = vmatprep.subr.bf16.mxu0 0
        %2040 = vmatpush1.bf16.msra.mxu0 0
        %2041 = vmatprep.subr.bf16.mxu0 0
        %2042 = vmatpush1.bf16.msra.mxu0 0
        %2043 = vmatprep.subr.bf16.mxu0 0
        %2044 = vmatpush1.bf16.msra.mxu0 0
        %2045 = vmatprep.subr.bf16.mxu0 0
        %2046 = vmatpush1.bf16.msra.mxu0 0
        %2047 = vmatprep.subr.bf16.mxu0 0
        %2048 = vmatpush1.bf16.msra.mxu0 0
        %2049 = vmatprep.subr.bf16.mxu0 0
        %2050 = vmatpush1.bf16.msra.mxu0 0
        %2051 = vmatprep.subr.bf16.mxu0 0
        %2052 = vmatpush1.bf16.msra.mxu0 0
        %2053 = vmatprep.subr.bf16.mxu0 0
        %2054 = vmatpush1.bf16.msra.mxu0 0
        %2055 = vmatprep.subr.bf16.mxu0 0
        %2056 = vmatpush1.bf16.msra.mxu0 0
        %2057 = vmatprep.subr.bf16.mxu0 0
        %2058 = vmatpush1.bf16.msra.mxu0 0
        %2059 = vmatprep.subr.bf16.mxu0 0
        %2060 = vmatpush1.bf16.msra.mxu0 0
        %2061 = vmatprep.subr.bf16.mxu0 0
        %2062 = vmatpush1.bf16.msra.mxu0 0
        %2063 = vmatprep.mubr.bf16.mxu0 0
        %2064 = vmatmul.mubr.bf16.gmra.mrb[0].mxu0 %v2029
        %v2065 = vpop.f32.mrb[0].mxu0
        %v2066 = vadd.f32 0.0, %v2065
        %v2067 = vpop.f32.mrb[0].mxu0
        %v2068 = vpop.f32.mrb[0].mxu0
        %v2069 = vpop.f32.mrb[0].mxu0
        %2070 = vdwg.mxu0
        %v2071 = vpack.c.bf16 %v2066, %v2066
        %v2073 = vsel %vm734, %v2071, 0
        %2075 = vmatprep.subr.bf16.mxu0 0
        %2076 = vmatpush1.bf16.msra.mxu0 %v1142
        %2077 = vmatprep.subr.bf16.mxu0 0
        %2078 = vmatpush1.bf16.msra.mxu0 %v1143
        %2079 = vmatprep.subr.bf16.mxu0 0
        %2080 = vmatpush1.bf16.msra.mxu0 0
        %2081 = vmatprep.subr.bf16.mxu0 0
        %2082 = vmatpush1.bf16.msra.mxu0 0
        %2083 = vmatprep.subr.bf16.mxu0 0
        %2084 = vmatpush1.bf16.msra.mxu0 0
        %2085 = vmatprep.subr.bf16.mxu0 0
        %2086 = vmatpush1.bf16.msra.mxu0 0
        %2087 = vmatprep.subr.bf16.mxu0 0
        %2088 = vmatpush1.bf16.msra.mxu0 0
        %2089 = vmatprep.subr.bf16.mxu0 0
        %2090 = vmatpush1.bf16.msra.mxu0 0
        %2091 = vmatprep.subr.bf16.mxu0 0
        %2092 = vmatpush1.bf16.msra.mxu0 0
        %2093 = vmatprep.subr.bf16.mxu0 0
        %2094 = vmatpush1.bf16.msra.mxu0 0
        %2095 = vmatprep.subr.bf16.mxu0 0
        %2096 = vmatpush1.bf16.msra.mxu0 0
        %2097 = vmatprep.subr.bf16.mxu0 0
        %2098 = vmatpush1.bf16.msra.mxu0 0
        %2099 = vmatprep.subr.bf16.mxu0 0
        %2100 = vmatpush1.bf16.msra.mxu0 0
        %2101 = vmatprep.subr.bf16.mxu0 0
        %2102 = vmatpush1.bf16.msra.mxu0 0
        %2103 = vmatprep.subr.bf16.mxu0 0
        %2104 = vmatpush1.bf16.msra.mxu0 0
        %2105 = vmatprep.subr.bf16.mxu0 0
        %2106 = vmatpush1.bf16.msra.mxu0 0
        %2107 = vmatprep.mubr.bf16.mxu0 0
        %2108 = vmatmul.mubr.bf16.gmra.mrb[0].mxu0 %v2073
        %v2109 = vpop.f32.mrb[0].mxu0
        %v2110 = vadd.f32 %v891, %v2109
        %v2111 = vpop.f32.mrb[0].mxu0
        %v2112 = vpop.f32.mrb[0].mxu0
        %v2113 = vpop.f32.mrb[0].mxu0
        %2114 = vdwg.mxu0
        %v2115 = vpack.c.bf16 %v1886, %v1886
        %2117 = vrot.lane.b32.xlu0 %v2115, 96
        %v2118 = vpop.permute.xlu0 %2117
        %v2120 = vsel %vm734, %v2118, 0
        %2122 = vmatprep.subr.bf16.mxu0 0
        %2123 = vmatpush1.bf16.msra.mxu0 %v1198
        %2124 = vmatprep.subr.bf16.mxu0 0
        %2125 = vmatpush1.bf16.msra.mxu0 %v1199
        %2126 = vmatprep.subr.bf16.mxu0 0
        %2127 = vmatpush1.bf16.msra.mxu0 0
        %2128 = vmatprep.subr.bf16.mxu0 0
        %2129 = vmatpush1.bf16.msra.mxu0 0
        %2130 = vmatprep.subr.bf16.mxu0 0
        %2131 = vmatpush1.bf16.msra.mxu0 0
        %2132 = vmatprep.subr.bf16.mxu0 0
        %2133 = vmatpush1.bf16.msra.mxu0 0
        %2134 = vmatprep.subr.bf16.mxu0 0
        %2135 = vmatpush1.bf16.msra.mxu0 0
        %2136 = vmatprep.subr.bf16.mxu0 0
        %2137 = vmatpush1.bf16.msra.mxu0 0
        %2138 = vmatprep.subr.bf16.mxu0 0
        %2139 = vmatpush1.bf16.msra.mxu0 0
        %2140 = vmatprep.subr.bf16.mxu0 0
        %2141 = vmatpush1.bf16.msra.mxu0 0
        %2142 = vmatprep.subr.bf16.mxu0 0
        %2143 = vmatpush1.bf16.msra.mxu0 0
        %2144 = vmatprep.subr.bf16.mxu0 0
        %2145 = vmatpush1.bf16.msra.mxu0 0
        %2146 = vmatprep.subr.bf16.mxu0 0
        %2147 = vmatpush1.bf16.msra.mxu0 0
        %2148 = vmatprep.subr.bf16.mxu0 0
        %2149 = vmatpush1.bf16.msra.mxu0 0
        %2150 = vmatprep.subr.bf16.mxu0 0
        %2151 = vmatpush1.bf16.msra.mxu0 0
        %2152 = vmatprep.subr.bf16.mxu0 0
        %2153 = vmatpush1.bf16.msra.mxu0 0
        %2154 = vmatprep.mubr.bf16.mxu0 0
        %2155 = vmatmul.mubr.bf16.gmra.mrb[0].mxu0 %v2120
        %v2156 = vpop.f32.mrb[0].mxu0
        %v2157 = vadd.f32 %v898, %v2156
        %v2158 = vpop.f32.mrb[0].mxu0
        %v2159 = vpop.f32.mrb[0].mxu0
        %v2160 = vpop.f32.mrb[0].mxu0
        %2161 = vdwg.mxu0
        %v2162 = vadd.f32 %v2110, %v2157
        %v2163 = vxor.u32 %v2162, 2147483648
        %v2164 = vmul.f32 %v2163, 1.442695
        %v2165 = vpow.pop %v2164
        %v2166 = vadd.f32 %v2165, 1.0
        %v2167 = vrcp.pop %v2166
        %v2168 = vmul.f32 1.0, %v2167
        %2170 = vrot.lane.b32.xlu0 %v2157, 64
        %v2171 = vpop.permute.xlu0 %2170
        %v2173 = vmul.f32 %v2168, %v2171
        %2175 = vrot.lane.b32.xlu0 %v2173, 64
        %v2176 = vpop.permute.xlu0 %2175
        %v2178 = vadd.f32 %v2110, %v2176
        %v2179 = vtanh.pop %v2178
        %v2180 = vsub.f32 1.0, %v2168
        %2182 = vrot.lane.b32.xlu0 %v2179, 96
        %v2183 = vpop.permute.xlu0 %2182
        %v2185 = vmul.f32 %v2180, %v2183
        %v2186 = vmul.f32 %v2168, %v1886
        %v2187 = vadd.f32 %v2185, %v2186
        %2189 = vrot.lane.b32.xlu0 %v2187, 96
        %v2190 = vpop.permute.xlu0 %2189
        %v2192 = vsel %vm734, %v2190, 0.0
        %2193 = vadd.xlane.f32.xlu0 %v2192
        %v2194 = vpop.xlane.xlu0 %2193
        %v2195 = vmul.f32 %v2194, %v741
        %v2196 = vsub.f32 %v2187, %v2195
        %v2197 = vmul.f32 %v2196, %v2196
        %2199 = vrot.lane.b32.xlu0 %v2197, 96
        %v2200 = vpop.permute.xlu0 %2199
        %v2202 = vsel %vm734, %v2200, 0.0
        %2203 = vadd.xlane.f32.xlu0 %v2202
        %v2204 = vpop.xlane.xlu0 %2203
        %v2205 = vmul.f32 %v2204, %v741
        %v2206 = vadd.f32 %v2205, 1e-05
        %v2207 = vrsqrt.pop %v2206
        %v2208 = vmul.f32 %v2196, %v2207
        %v2209 = vmul.f32 %v2208, %v1297
        %v2210 = vadd.f32 %v2209, %v1301
        %v2211 = vpack.c.bf16 %v2210, %v2210
        %2213 = vrot.lane.b32.xlu0 %v2211, 96
        %v2214 = vpop.permute.xlu0 %2213
        %v2216 = vsel %vm734, %v2214, 0
        %2218 = vmatprep.subr.bf16.mxu0 0
        %2219 = vmatpush1.bf16.msra.mxu0 %v1316
        %2220 = vmatprep.subr.bf16.mxu0 0
        %2221 = vmatpush1.bf16.msra.mxu0 %v1317
        %2222 = vmatprep.subr.bf16.mxu0 0
        %2223 = vmatpush1.bf16.msra.mxu0 0
        %2224 = vmatprep.subr.bf16.mxu0 0
        %2225 = vmatpush1.bf16.msra.mxu0 0
        %2226 = vmatprep.subr.bf16.mxu0 0
        %2227 = vmatpush1.bf16.msra.mxu0 0
        %2228 = vmatprep.subr.bf16.mxu0 0
        %2229 = vmatpush1.bf16.msra.mxu0 0
        %2230 = vmatprep.subr.bf16.mxu0 0
        %2231 = vmatpush1.bf16.msra.mxu0 0
        %2232 = vmatprep.subr.bf16.mxu0 0
        %2233 = vmatpush1.bf16.msra.mxu0 0
        %2234 = vmatprep.subr.bf16.mxu0 0
        %2235 = vmatpush1.bf16.msra.mxu0 0
        %2236 = vmatprep.subr.bf16.mxu0 0
        %2237 = vmatpush1.bf16.msra.mxu0 0
        %2238 = vmatprep.subr.bf16.mxu0 0
        %2239 = vmatpush1.bf16.msra.mxu0 0
        %2240 = vmatprep.subr.bf16.mxu0 0
        %2241 = vmatpush1.bf16.msra.mxu0 0
        %2242 = vmatprep.subr.bf16.mxu0 0
        %2243 = vmatpush1.bf16.msra.mxu0 0
        %2244 = vmatprep.subr.bf16.mxu0 0
        %2245 = vmatpush1.bf16.msra.mxu0 0
        %2246 = vmatprep.subr.bf16.mxu0 0
        %2247 = vmatpush1.bf16.msra.mxu0 0
        %2248 = vmatprep.subr.bf16.mxu0 0
        %2249 = vmatpush1.bf16.msra.mxu0 0
        %2250 = vmatprep.mubr.bf16.mxu0 0
        %2251 = vmatmul.mubr.bf16.gmra.mrb[0].mxu0 %v2216
        %v2252 = vpop.f32.mrb[0].mxu0
        %v2253 = vadd.f32 %v905, %v2252
        %v2254 = vpop.f32.mrb[0].mxu0
        %v2255 = vpop.f32.mrb[0].mxu0
        %v2256 = vpop.f32.mrb[0].mxu0
        %2257 = vdwg.mxu0
        %v2258 = vmax.f32 %v2253, 0.0
        %v2259 = vpack.c.bf16 %v2258, %v2258
        %2260 = vmatprep.subr.bf16.mxu0 0
        %2261 = vmatpush1.bf16.msra.mxu0 %v1397
        %2262 = vmatprep.subr.bf16.mxu0 0
        %2263 = vmatpush1.bf16.msra.mxu0 %v1398
        %2264 = vmatprep.subr.bf16.mxu0 0
        %2265 = vmatpush1.bf16.msra.mxu0 %v1399
        %2266 = vmatprep.subr.bf16.mxu0 0
        %2267 = vmatpush1.bf16.msra.mxu0 %v1400
        %2268 = vmatprep.subr.bf16.mxu0 0
        %2269 = vmatpush1.bf16.msra.mxu0 %v1401
        %2270 = vmatprep.subr.bf16.mxu0 0
        %2271 = vmatpush1.bf16.msra.mxu0 %v1402
        %2272 = vmatprep.subr.bf16.mxu0 0
        %2273 = vmatpush1.bf16.msra.mxu0 %v1403
        %2274 = vmatprep.subr.bf16.mxu0 0
        %2275 = vmatpush1.bf16.msra.mxu0 %v1404
        %2276 = vmatprep.subr.bf16.mxu0 0
        %2277 = vmatpush1.bf16.msra.mxu0 0
        %2278 = vmatprep.subr.bf16.mxu0 0
        %2279 = vmatpush1.bf16.msra.mxu0 0
        %2280 = vmatprep.subr.bf16.mxu0 0
        %2281 = vmatpush1.bf16.msra.mxu0 0
        %2282 = vmatprep.subr.bf16.mxu0 0
        %2283 = vmatpush1.bf16.msra.mxu0 0
        %2284 = vmatprep.subr.bf16.mxu0 0
        %2285 = vmatpush1.bf16.msra.mxu0 0
        %2286 = vmatprep.subr.bf16.mxu0 0
        %2287 = vmatpush1.bf16.msra.mxu0 0
        %2288 = vmatprep.subr.bf16.mxu0 0
        %2289 = vmatpush1.bf16.msra.mxu0 0
        %2290 = vmatprep.subr.bf16.mxu0 0
        %2291 = vmatpush1.bf16.msra.mxu0 0
        %2292 = vmatprep.mubr.bf16.mxu0 0
        %2293 = vmatmul.mubr.bf16.gmra.mrb[0].mxu0 %v2259
        %v2294 = vpop.f32.mrb[0].mxu0
        %v2295 = vadd.f32 0.0, %v2294
        %v2296 = vpop.f32.mrb[0].mxu0
        %v2297 = vpop.f32.mrb[0].mxu0
        %v2298 = vpop.f32.mrb[0].mxu0
        %2299 = vdwg.mxu0
        %2301 = vrot.lane.b32.xlu0 %v2295, 32
        %v2302 = vpop.permute.xlu0 %2301
        %v2304 = vadd.f32 %v2187, %v2302
        %v2305 = vadd.f32 %v2304, %v1459
        %2307 = vrot.lane.b32.xlu0 %v2305, 96
        %v2308 = vpop.permute.xlu0 %2307
        %2310 = vst.msk [vmem:[%s723] sm:$0xff] %vm734, %v2308
        %s2311 = sand.u32 %s472, 1
        %s2312 = scalar_lea.sflag [#allocation4], %s2311
        %s2313 = sand.u32 %s472, 1
        %s2314 = smul.addr %s2313, 8
        %s2315 = scalar_lea.vmem [#allocation16], %s2314
        // Predicated region
        $region133: #{tpu_custom_call.1} parent=99 // pred_check
          %p2316 = pneg %p482
        $region134: #{tpu_custom_call.1} parent=99 // pred_check_branch
          %2318 = sbr.rel (%p2316) target = $region136
        $region135: #{tpu_custom_call.1} parent=99 // pred_region
          %s2320 = ssub.s32 128, 128
          %2321 = vsyncadd %s2312, %s2320
          %s2322 = smul.addr %s39, 128
          %s2323 = scalar_lea.hbm %s20, %s2322
          %s2325 = sshll.u32 %s2315, 4
          %s2326 = int_to_ptr.vmem [resolvable:$true] %s2325
          %2328 = dma.vmem_to_hbm [thread:$0]  %s2326, 128, %s2323, %s2312
        $region136: #{tpu_custom_call.1} parent=99 // pred_fallthru
          _
      $region100: #{tpu_custom_call.1} parent=5 // pred_fallthru
        _
      %p2329 = scmp.le.s32.totalorder 2, %s34
      // Predicated region
      $region137: #{tpu_custom_call.1} parent=5 // pred_check
        %p2330 = pneg %p2329
      $region138: #{tpu_custom_call.1} parent=5 // pred_check_branch
        %2332 = sbr.rel (%p2330) target = $region140
      $region139: #{tpu_custom_call.1} parent=5 // pred_region
        %s2333 = ssub.s32 %s34, 2
        // Predicated region
        $region141: #{tpu_custom_call.1} parent=139 // pred_check
          %p2334 = pneg %p488
        $region142: #{tpu_custom_call.1} parent=139 // pred_check_branch
          %2336 = sbr.rel (%p2334) target = $region144
        $region143: #{tpu_custom_call.1} parent=139 // pred_region
          %s2337 = sand.u32 %s473, 1
          %s2338 = scalar_lea.sflag [#allocation4], %s2337
          %s2339 = sand.u32 %s473, 1
          %s2340 = smul.addr %s2339, 8
          %s2341 = scalar_lea.vmem [#allocation16], %s2340
          %2342 = dma.done %s2338, 128
        $region144: #{tpu_custom_call.1} parent=139 // pred_fallthru
          _
      $region140: #{tpu_custom_call.1} parent=5 // pred_fallthru
        _
    $region6: #{tpu_custom_call.1} parent=1 // loop_footer
      %s38 = sadd.s32 1, %s34
    $region7: #{tpu_custom_call.1} parent=1 // loop_footer_branch
      %33 = sbr.rel target = $region3
    $region8: #{tpu_custom_call.1} parent=1 // loop_exit
      _
    %2343 = vsyncpa [#allocation3], 1
    %s2344 = scalar_lea.sflag [#allocation3], 1
    %2345 = vsyncpa %s2344, 1
    %2346 = vsyncpa [#allocation6], 1
    %2347 = vsyncpa [#allocation9], 1
    %2348 = vsyncpa [#allocation12], 1
    %2349 = vsyncpa [#allocation15], 1
    %2350 = vsyncpa [#allocation4], 1
    %s2351 = scalar_lea.sflag [#allocation4], 1
    %2352 = vsyncpa %s2351, 1

</llo_original>
